<compile_context>
chip_gen: v7x
topology: tpu7x:2x2x1
jax: 0.10.0
libtpu: 0.0.40
codegen_flags: <defaults>
</compile_context>

<pallas_src>
import math

import jax
import jax.numpy as jnp
from jax import lax
from jax.experimental import pallas as pl
from jax.experimental.pallas import tpu as pltpu

# ---------------- configuration (small synthetic shapes) ----------------
S = 2          # nb_samples
C = 2          # nb_channels
BOUT = 64      # nb_output_bins (nb_bins arg of module)
BCROP = 32     # self.nb_bins (== max_bin, crop of high freqs)
F = 8          # nb_frames
H = 32         # hidden_size
DFF = 4        # d_ff of the transformer FFN (literally 4 in the module)
DFFP = 8       # FFN width zero-padded to 8 lanes (identical math)
N_LAYERS = 3
EPS_BN = 1e-5
EPS_LN = 1e-5

DIN = C * BCROP    # 64  flattened fc1 input width
DOUT = C * BOUT    # 128 flattened fc3 output width (lane-dense)


# ---------------- single fused forward kernel (one sample per grid step) ----
def _fused_kernel(temp_ref, xc_ref, mix_ref,
                  im_ref, isc_ref,
                  fc1_ref, bn1s_ref, bn1b_ref,
                  wqkv_ref, bqkv_ref, wo_ref, bo_ref,
                  ln1g_ref, ln1b_ref,
                  w1_ref, b1_ref, w2_ref, b2_ref,
                  ln2g_ref, ln2b_ref,
                  fc2a_ref, fc2b_ref, bn2s_ref, bn2b_ref,
                  fc3_ref, bn3s_ref, bn3b_ref,
                  osc_ref, omn_ref,
                  wav_ref, mask_ref):
    temp = temp_ref[0, 0]                                   # learned softmax temperature

    # input affine + fc1 + folded bn1 (no relu here, matches the module)
    xn = (xc_ref[0] + im_ref[...]) * isc_ref[...]           # (F, DIN)
    h = jnp.dot(xn, fc1_ref[...], preferred_element_type=jnp.float32)
    h = h * bn1s_ref[...] + bn1b_ref[...]                   # (F, H)

    y = h                                                   # skip copy for the concat
    x = h
    scale = temp * (1.0 / math.sqrt(H))

    for l in range(N_LAYERS):                               # unrolled layer loop, weights resident
        q = jnp.dot(x, wqkv_ref[l, 0], preferred_element_type=jnp.float32) + bqkv_ref[l, 0]
        k = jnp.dot(x, wqkv_ref[l, 1], preferred_element_type=jnp.float32) + bqkv_ref[l, 1]
        v = jnp.dot(x, wqkv_ref[l, 2], preferred_element_type=jnp.float32) + bqkv_ref[l, 2]

        # q @ k^T without materializing a transpose
        scores = lax.dot_general(q, k, (((1,), (1,)), ((), ())),
                                 preferred_element_type=jnp.float32) * scale
        m = jnp.max(scores, axis=-1, keepdims=True)
        p = jnp.exp(scores - m)
        p = p * pl.reciprocal(jnp.sum(p, axis=-1, keepdims=True), approx=True)
        attn = jnp.dot(p, v, preferred_element_type=jnp.float32)
        attn = jnp.dot(attn, wo_ref[l], preferred_element_type=jnp.float32) + bo_ref[l]

        hh = x + attn                                       # residual (dropout = identity, eval)
        mu = jnp.mean(hh, axis=-1, keepdims=True)
        var = jnp.mean((hh - mu) ** 2, axis=-1, keepdims=True)
        h1 = (hh - mu) * lax.rsqrt(var + EPS_LN) * ln1g_ref[l] + ln1b_ref[l]

        ff = jnp.dot(h1, w1_ref[l], preferred_element_type=jnp.float32) + b1_ref[l]
        ff = jnp.maximum(ff, 0.0)
        ff = jnp.dot(ff, w2_ref[l], preferred_element_type=jnp.float32) + b2_ref[l]

        h2 = h1 + ff
        mu2 = jnp.mean(h2, axis=-1, keepdims=True)
        var2 = jnp.mean((h2 - mu2) ** 2, axis=-1, keepdims=True)
        out = (h2 - mu2) * lax.rsqrt(var2 + EPS_LN) * ln2g_ref[l] + ln2b_ref[l]

        x = out + x                                         # outer `x = module(x) + x`

    # fc2 on cat([x, y], -1) expressed as two matmuls against the split weight
    h2 = (jnp.dot(x, fc2a_ref[...], preferred_element_type=jnp.float32) +
          jnp.dot(y, fc2b_ref[...], preferred_element_type=jnp.float32))
    h2 = jnp.maximum(h2 * bn2s_ref[...] + bn2b_ref[...], 0.0)     # bn2 + relu

    h3 = jnp.dot(h2, fc3_ref[...], preferred_element_type=jnp.float32)
    h3 = h3 * bn3s_ref[...] + bn3b_ref[...]                 # (F, DOUT) lane-dense

    o = h3 * osc_ref[...] + omn_ref[...]                    # output scale / mean
    msk = jnp.maximum(o, 0.0)
    mask_ref[0] = msk
    wav_ref[0] = msk * mix_ref[0]


# ---------------- full forward ----------------
def umx_forward(x, params):
    # x: (nb_samples, nb_channels, nb_bins, nb_frames) = (S, C, BOUT, F)
    xp = jnp.transpose(x, (0, 3, 1, 2))                     # (S, F, C, BOUT)
    mix = xp.reshape(S, F, DOUT)                            # lane-dense 128 cols
    xc = xp[..., :BCROP].reshape(S, F, DIN)                 # crop high-frequency bins

    def rep(shape):                                         # resident (non-sliding) operand
        return pl.BlockSpec(shape, lambda i, n=len(shape): (0,) * n)

    wav_flat, mask_flat = pl.pallas_call(
        _fused_kernel,
        out_shape=(jax.ShapeDtypeStruct((S, F, DOUT), jnp.float32),
                   jax.ShapeDtypeStruct((S, F, DOUT), jnp.float32)),
        grid_spec=pltpu.PrefetchScalarGridSpec(
            num_scalar_prefetch=0,
            grid=(S,),
            in_specs=[
                pl.BlockSpec(memory_space=pltpu.MemorySpace.SMEM),     # softmax_temp (1,1)
                pl.BlockSpec((1, F, DIN), lambda i: (i, 0, 0)),        # cropped input
                pl.BlockSpec((1, F, DOUT), lambda i: (i, 0, 0)),       # mix
                rep((1, DIN)), rep((1, DIN)),                          # input mean / scale
                rep((DIN, H)), rep((1, H)), rep((1, H)),               # fc1 / bn1
                rep((N_LAYERS, 3, H, H)), rep((N_LAYERS, 3, 1, H)),    # qkv weights / biases
                rep((N_LAYERS, H, H)), rep((N_LAYERS, 1, H)),          # attn out proj
                rep((N_LAYERS, 1, H)), rep((N_LAYERS, 1, H)),          # ln1 gamma / beta
                rep((N_LAYERS, H, DFFP)), rep((N_LAYERS, 1, DFFP)),    # ffn w1 / b1 (padded)
                rep((N_LAYERS, DFFP, H)), rep((N_LAYERS, 1, H)),       # ffn w2 / b2
                rep((N_LAYERS, 1, H)), rep((N_LAYERS, 1, H)),          # ln2 gamma / beta
                rep((H, H)), rep((H, H)), rep((1, H)), rep((1, H)),    # fc2 (split) / bn2
                rep((H, DOUT)), rep((1, DOUT)), rep((1, DOUT)),        # fc3 / bn3
                rep((1, DOUT)), rep((1, DOUT)),                        # output scale / mean
            ],
            out_specs=[pl.BlockSpec((1, F, DOUT), lambda i: (i, 0, 0)),
                       pl.BlockSpec((1, F, DOUT), lambda i: (i, 0, 0))],
        ),
        compiler_params=pltpu.CompilerParams(dimension_semantics=("parallel",)),
    )(params["softmax_temp"].reshape(1, 1), xc, mix,
      params["im_cols"], params["isc_cols"],
      params["fc1_w"], params["bn1_scale"], params["bn1_shift"],
      params["wqkv"], params["bqkv"], params["wo"], params["bo"],
      params["ln1g"], params["ln1b"],
      params["w1"], params["b1"], params["w2"], params["b2"],
      params["ln2g"], params["ln2b"],
      params["fc2_wa"], params["fc2_wb"], params["bn2_scale"], params["bn2_shift"],
      params["fc3_w"], params["bn3_scale"], params["bn3_shift"],
      params["osc_cols"], params["omn_cols"])

    wav = wav_flat.reshape(S, F, C, BOUT).transpose(0, 2, 3, 1)    # (S, C, BOUT, F)
    mask = mask_flat.reshape(S, F, C, BOUT).transpose(0, 2, 3, 1)
    return wav, mask


# ---------------- deterministic parameter initialization ----------------
def init_params(key):
    keys = iter(jax.random.split(key, 64))

    def nrm(shape, fan_in):
        return jax.random.normal(next(keys), shape, jnp.float32) / math.sqrt(fan_in)

    def bn_fold(dim):
        gamma = 1.0 + 0.1 * jax.random.normal(next(keys), (dim,), jnp.float32)
        beta = 0.1 * jax.random.normal(next(keys), (dim,), jnp.float32)
        rmean = 0.1 * jax.random.normal(next(keys), (dim,), jnp.float32)
        rvar = 1.0 + 0.1 * jnp.abs(jax.random.normal(next(keys), (dim,), jnp.float32))
        scale = gamma / jnp.sqrt(rvar + EPS_BN)
        shift = beta - rmean * scale
        return scale.reshape(1, dim), shift.reshape(1, dim)

    p = {}
    p["fc1_w"] = nrm((DIN, H), DIN)                      # stored pre-transposed (in, out)
    p["bn1_scale"], p["bn1_shift"] = bn_fold(H)
    fc2_w = nrm((2 * H, H), 2 * H)
    p["fc2_wa"] = fc2_w[:H]                              # acts on transformer output x
    p["fc2_wb"] = fc2_w[H:]                              # acts on skip y
    p["bn2_scale"], p["bn2_shift"] = bn_fold(H)
    p["fc3_w"] = nrm((H, DOUT), H)
    p["bn3_scale"], p["bn3_shift"] = bn_fold(DOUT)

    input_mean = jnp.zeros((BCROP,), jnp.float32)        # module defaults
    input_scale = jnp.ones((BCROP,), jnp.float32)
    output_scale = jnp.ones((BOUT,), jnp.float32)
    output_mean = jnp.ones((BOUT,), jnp.float32)
    p["im_cols"] = jnp.tile(input_mean, C).reshape(1, DIN)    # per flattened column
    p["isc_cols"] = jnp.tile(input_scale, C).reshape(1, DIN)
    p["osc_cols"] = jnp.tile(output_scale, C).reshape(1, DOUT)
    p["omn_cols"] = jnp.tile(output_mean, C).reshape(1, DOUT)
    p["softmax_temp"] = jnp.ones((1,), jnp.float32)

    wqkv, bqkv, wo, bo = [], [], [], []
    ln1g, ln1b, ln2g, ln2b = [], [], [], []
    w1s, b1s, w2s, b2s = [], [], [], []
    for _ in range(N_LAYERS):
        wqkv.append(jnp.stack([nrm((H, H), H) for _ in range(3)]))               # (3, H, H)
        bqkv.append(jnp.stack([0.01 * jax.random.normal(next(keys), (1, H), jnp.float32)
                               for _ in range(3)]))                              # (3, 1, H)
        wo.append(nrm((H, H), H))
        bo.append(0.01 * jax.random.normal(next(keys), (1, H), jnp.float32))
        # d_ff = 4 padded to 8 lanes with zeros: relu(0)=0 and zero w2 rows => identical math
        w1 = jnp.zeros((H, DFFP), jnp.float32).at[:, :DFF].set(nrm((H, DFF), H))
        b1 = jnp.zeros((1, DFFP), jnp.float32).at[:, :DFF].set(
            0.01 * jax.random.normal(next(keys), (1, DFF), jnp.float32))
        w2 = jnp.zeros((DFFP, H), jnp.float32).at[:DFF, :].set(nrm((DFF, H), DFF))
        b2 = 0.01 * jax.random.normal(next(keys), (1, H), jnp.float32)
        w1s.append(w1); b1s.append(b1); w2s.append(w2); b2s.append(b2)
        ln1g.append(jnp.ones((1, H), jnp.float32)); ln1b.append(jnp.zeros((1, H), jnp.float32))
        ln2g.append(jnp.ones((1, H), jnp.float32)); ln2b.append(jnp.zeros((1, H), jnp.float32))

    p["wqkv"] = jnp.stack(wqkv); p["bqkv"] = jnp.stack(bqkv)
    p["wo"] = jnp.stack(wo); p["bo"] = jnp.stack(bo)
    p["ln1g"] = jnp.stack(ln1g); p["ln1b"] = jnp.stack(ln1b)
    p["ln2g"] = jnp.stack(ln2g); p["ln2b"] = jnp.stack(ln2b)
    p["w1"] = jnp.stack(w1s); p["b1"] = jnp.stack(b1s)
    p["w2"] = jnp.stack(w2s); p["b2"] = jnp.stack(b2s)
    return p


if __name__ == "__main__":
    root = jax.random.PRNGKey(0)
    pkey, xkey = jax.random.split(root)
    params = init_params(pkey)

    # synthetic non-negative spectrogram: (nb_samples, nb_channels, nb_bins, nb_frames)
    x = jnp.abs(jax.random.normal(xkey, (S, C, BOUT, F), jnp.float32))

    fwd = jax.jit(lambda xx: umx_forward(xx, params))
    wav, mask = fwd(x)
    jax.block_until_ready((wav, mask))

    assert wav.shape == (S, C, BOUT, F), wav.shape
    assert mask.shape == (S, C, BOUT, F), mask.shape
    assert bool(jnp.all(jnp.isfinite(wav))) and bool(jnp.all(jnp.isfinite(mask)))
    assert bool(jnp.all(mask >= 0.0))
    print("KERNEL_OK")
</pallas_src>

<mosaic_0001>
module attributes {stable_mosaic.version = 11 : i64} {
  func.func @_fused_kernel(%arg0: i32, %arg1: memref<1x1xf32, #tpu.memory_space<smem>>, %arg2: memref<1x8x64xf32, #tpu.memory_space<vmem>>, %arg3: memref<1x8x128xf32, #tpu.memory_space<vmem>>, %arg4: memref<1x64xf32, #tpu.memory_space<vmem>>, %arg5: memref<1x64xf32, #tpu.memory_space<vmem>>, %arg6: memref<64x32xf32, #tpu.memory_space<vmem>>, %arg7: memref<1x32xf32, #tpu.memory_space<vmem>>, %arg8: memref<1x32xf32, #tpu.memory_space<vmem>>, %arg9: memref<3x3x32x32xf32, #tpu.memory_space<vmem>>, %arg10: memref<3x3x1x32xf32, #tpu.memory_space<vmem>>, %arg11: memref<3x32x32xf32, #tpu.memory_space<vmem>>, %arg12: memref<3x1x32xf32, #tpu.memory_space<vmem>>, %arg13: memref<3x1x32xf32, #tpu.memory_space<vmem>>, %arg14: memref<3x1x32xf32, #tpu.memory_space<vmem>>, %arg15: memref<3x32x8xf32, #tpu.memory_space<vmem>>, %arg16: memref<3x1x8xf32, #tpu.memory_space<vmem>>, %arg17: memref<3x8x32xf32, #tpu.memory_space<vmem>>, %arg18: memref<3x1x32xf32, #tpu.memory_space<vmem>>, %arg19: memref<3x1x32xf32, #tpu.memory_space<vmem>>, %arg20: memref<3x1x32xf32, #tpu.memory_space<vmem>>, %arg21: memref<32x32xf32, #tpu.memory_space<vmem>>, %arg22: memref<32x32xf32, #tpu.memory_space<vmem>>, %arg23: memref<1x32xf32, #tpu.memory_space<vmem>>, %arg24: memref<1x32xf32, #tpu.memory_space<vmem>>, %arg25: memref<32x128xf32, #tpu.memory_space<vmem>>, %arg26: memref<1x128xf32, #tpu.memory_space<vmem>>, %arg27: memref<1x128xf32, #tpu.memory_space<vmem>>, %arg28: memref<1x128xf32, #tpu.memory_space<vmem>>, %arg29: memref<1x128xf32, #tpu.memory_space<vmem>>, %arg30: memref<1x8x128xf32, #tpu.memory_space<vmem>>, %arg31: memref<1x8x128xf32, #tpu.memory_space<vmem>>) attributes {dimension_semantics = [#tpu.dimension_semantics<parallel>], iteration_bounds = array<i64: 2>, scalar_prefetch = 0 : i64, scratch_operands = 0 : i64, tpu.core_type = #tpu.core_type<tc>, window_params = [{transform_indices = @transform_0, window_bounds = array<i64: 1, 1>}, {transform_indices = @transform_1, window_bounds = array<i64: 1, 8, 64>}, {transform_indices = @transform_2, window_bounds = array<i64: 1, 8, 128>}, {pipeline_mode = #tpu.pipeline_mode<synchronous>, transform_indices = @transform_3, window_bounds = array<i64: 1, 64>}, {pipeline_mode = #tpu.pipeline_mode<synchronous>, transform_indices = @transform_4, window_bounds = array<i64: 1, 64>}, {pipeline_mode = #tpu.pipeline_mode<synchronous>, transform_indices = @transform_5, window_bounds = array<i64: 64, 32>}, {pipeline_mode = #tpu.pipeline_mode<synchronous>, transform_indices = @transform_6, window_bounds = array<i64: 1, 32>}, {pipeline_mode = #tpu.pipeline_mode<synchronous>, transform_indices = @transform_7, window_bounds = array<i64: 1, 32>}, {pipeline_mode = #tpu.pipeline_mode<synchronous>, transform_indices = @transform_8, window_bounds = array<i64: 3, 3, 32, 32>}, {pipeline_mode = #tpu.pipeline_mode<synchronous>, transform_indices = @transform_9, window_bounds = array<i64: 3, 3, 1, 32>}, {pipeline_mode = #tpu.pipeline_mode<synchronous>, transform_indices = @transform_10, window_bounds = array<i64: 3, 32, 32>}, {pipeline_mode = #tpu.pipeline_mode<synchronous>, transform_indices = @transform_11, window_bounds = array<i64: 3, 1, 32>}, {pipeline_mode = #tpu.pipeline_mode<synchronous>, transform_indices = @transform_12, window_bounds = array<i64: 3, 1, 32>}, {pipeline_mode = #tpu.pipeline_mode<synchronous>, transform_indices = @transform_13, window_bounds = array<i64: 3, 1, 32>}, {pipeline_mode = #tpu.pipeline_mode<synchronous>, transform_indices = @transform_14, window_bounds = array<i64: 3, 32, 8>}, {pipeline_mode = #tpu.pipeline_mode<synchronous>, transform_indices = @transform_15, window_bounds = array<i64: 3, 1, 8>}, {pipeline_mode = #tpu.pipeline_mode<synchronous>, transform_indices = @transform_16, window_bounds = array<i64: 3, 8, 32>}, {pipeline_mode = #tpu.pipeline_mode<synchronous>, transform_indices = @transform_17, window_bounds = array<i64: 3, 1, 32>}, {pipeline_mode = #tpu.pipeline_mode<synchronous>, transform_indices = @transform_18, window_bounds = array<i64: 3, 1, 32>}, {pipeline_mode = #tpu.pipeline_mode<synchronous>, transform_indices = @transform_19, window_bounds = array<i64: 3, 1, 32>}, {pipeline_mode = #tpu.pipeline_mode<synchronous>, transform_indices = @transform_20, window_bounds = array<i64: 32, 32>}, {pipeline_mode = #tpu.pipeline_mode<synchronous>, transform_indices = @transform_21, window_bounds = array<i64: 32, 32>}, {pipeline_mode = #tpu.pipeline_mode<synchronous>, transform_indices = @transform_22, window_bounds = array<i64: 1, 32>}, {pipeline_mode = #tpu.pipeline_mode<synchronous>, transform_indices = @transform_23, window_bounds = array<i64: 1, 32>}, {pipeline_mode = #tpu.pipeline_mode<synchronous>, transform_indices = @transform_24, window_bounds = array<i64: 32, 128>}, {pipeline_mode = #tpu.pipeline_mode<synchronous>, transform_indices = @transform_25, window_bounds = array<i64: 1, 128>}, {pipeline_mode = #tpu.pipeline_mode<synchronous>, transform_indices = @transform_26, window_bounds = array<i64: 1, 128>}, {pipeline_mode = #tpu.pipeline_mode<synchronous>, transform_indices = @transform_27, window_bounds = array<i64: 1, 128>}, {pipeline_mode = #tpu.pipeline_mode<synchronous>, transform_indices = @transform_28, window_bounds = array<i64: 1, 128>}, {transform_indices = @transform_29, window_bounds = array<i64: 1, 8, 128>}, {transform_indices = @transform_30, window_bounds = array<i64: 1, 8, 128>}]} {
    %c0 = arith.constant 0 : index
    %c0_0 = arith.constant 0 : index
    %0 = memref.load %arg1[%c0, %c0_0] : memref<1x1xf32, #tpu.memory_space<smem>>
    %c0_1 = arith.constant 0 : index
    %c0_2 = arith.constant 0 : index
    %c0_3 = arith.constant 0 : index
    %1 = vector.load %arg2[%c0_1, %c0_2, %c0_3] : memref<1x8x64xf32, #tpu.memory_space<vmem>>, vector<1x8x64xf32>
    %2 = vector.shape_cast %1 : vector<1x8x64xf32> to vector<8x64xf32>
    %c0_4 = arith.constant 0 : index
    %c0_5 = arith.constant 0 : index
    %3 = vector.load %arg4[%c0_4, %c0_5] : memref<1x64xf32, #tpu.memory_space<vmem>>, vector<1x64xf32>
    %4 = vector.broadcast %3 : vector<1x64xf32> to vector<8x64xf32>
    %5 = arith.addf %2, %4 : vector<8x64xf32>
    %c0_6 = arith.constant 0 : index
    %c0_7 = arith.constant 0 : index
    %6 = vector.load %arg5[%c0_6, %c0_7] : memref<1x64xf32, #tpu.memory_space<vmem>>, vector<1x64xf32>
    %7 = vector.broadcast %6 : vector<1x64xf32> to vector<8x64xf32>
    %8 = arith.mulf %5, %7 : vector<8x64xf32>
    %c0_8 = arith.constant 0 : index
    %c0_9 = arith.constant 0 : index
    %9 = vector.load %arg6[%c0_8, %c0_9] : memref<64x32xf32, #tpu.memory_space<vmem>>, vector<64x32xf32>
    %cst = arith.constant dense<0.000000e+00> : vector<8x32xf32>
    %10 = tpu.matmul %8, %9, %cst {dimension_numbers = #tpu.dot_dimension_numbers<[1], [0], [0], [1], [0, 0, 1, 1], [], []>} : vector<8x64xf32>, vector<64x32xf32>, vector<8x32xf32> -> vector<8x32xf32>
    %c0_10 = arith.constant 0 : index
    %c0_11 = arith.constant 0 : index
    %11 = vector.load %arg7[%c0_10, %c0_11] : memref<1x32xf32, #tpu.memory_space<vmem>>, vector<1x32xf32>
    %12 = vector.broadcast %11 : vector<1x32xf32> to vector<8x32xf32>
    %13 = arith.mulf %10, %12 : vector<8x32xf32>
    %c0_12 = arith.constant 0 : index
    %c0_13 = arith.constant 0 : index
    %14 = vector.load %arg8[%c0_12, %c0_13] : memref<1x32xf32, #tpu.memory_space<vmem>>, vector<1x32xf32>
    %15 = vector.broadcast %14 : vector<1x32xf32> to vector<8x32xf32>
    %16 = arith.addf %13, %15 : vector<8x32xf32>
    %cst_14 = arith.constant 0.176776692 : f32
    %17 = arith.mulf %0, %cst_14 : f32
    %c0_15 = arith.constant 0 : index
    %c0_16 = arith.constant 0 : index
    %c0_17 = arith.constant 0 : index
    %c0_18 = arith.constant 0 : index
    %18 = vector.load %arg9[%c0_15, %c0_16, %c0_17, %c0_18] : memref<3x3x32x32xf32, #tpu.memory_space<vmem>>, vector<1x1x32x32xf32>
    %19 = vector.shape_cast %18 : vector<1x1x32x32xf32> to vector<32x32xf32>
    %cst_19 = arith.constant dense<0.000000e+00> : vector<8x32xf32>
    %20 = tpu.matmul %16, %19, %cst_19 {dimension_numbers = #tpu.dot_dimension_numbers<[1], [0], [0], [1], [0, 0, 1, 1], [], []>} : vector<8x32xf32>, vector<32x32xf32>, vector<8x32xf32> -> vector<8x32xf32>
    %c0_20 = arith.constant 0 : index
    %c0_21 = arith.constant 0 : index
    %c0_22 = arith.constant 0 : index
    %c0_23 = arith.constant 0 : index
    %21 = vector.load %arg10[%c0_20, %c0_21, %c0_22, %c0_23] : memref<3x3x1x32xf32, #tpu.memory_space<vmem>>, vector<1x1x1x32xf32>
    %22 = vector.shape_cast %21 : vector<1x1x1x32xf32> to vector<1x32xf32>
    %23 = vector.broadcast %22 : vector<1x32xf32> to vector<8x32xf32>
    %24 = arith.addf %20, %23 : vector<8x32xf32>
    %c0_24 = arith.constant 0 : index
    %c1 = arith.constant 1 : index
    %c0_25 = arith.constant 0 : index
    %c0_26 = arith.constant 0 : index
    %25 = vector.load %arg9[%c0_24, %c1, %c0_25, %c0_26] : memref<3x3x32x32xf32, #tpu.memory_space<vmem>>, vector<1x1x32x32xf32>
    %26 = vector.shape_cast %25 : vector<1x1x32x32xf32> to vector<32x32xf32>
    %cst_27 = arith.constant dense<0.000000e+00> : vector<8x32xf32>
    %27 = tpu.matmul %16, %26, %cst_27 {dimension_numbers = #tpu.dot_dimension_numbers<[1], [0], [0], [1], [0, 0, 1, 1], [], []>} : vector<8x32xf32>, vector<32x32xf32>, vector<8x32xf32> -> vector<8x32xf32>
    %c0_28 = arith.constant 0 : index
    %c1_29 = arith.constant 1 : index
    %c0_30 = arith.constant 0 : index
    %c0_31 = arith.constant 0 : index
    %28 = vector.load %arg10[%c0_28, %c1_29, %c0_30, %c0_31] : memref<3x3x1x32xf32, #tpu.memory_space<vmem>>, vector<1x1x1x32xf32>
    %29 = vector.shape_cast %28 : vector<1x1x1x32xf32> to vector<1x32xf32>
    %30 = vector.broadcast %29 : vector<1x32xf32> to vector<8x32xf32>
    %31 = arith.addf %27, %30 : vector<8x32xf32>
    %c0_32 = arith.constant 0 : index
    %c2 = arith.constant 2 : index
    %c0_33 = arith.constant 0 : index
    %c0_34 = arith.constant 0 : index
    %32 = vector.load %arg9[%c0_32, %c2, %c0_33, %c0_34] : memref<3x3x32x32xf32, #tpu.memory_space<vmem>>, vector<1x1x32x32xf32>
    %33 = vector.shape_cast %32 : vector<1x1x32x32xf32> to vector<32x32xf32>
    %cst_35 = arith.constant dense<0.000000e+00> : vector<8x32xf32>
    %34 = tpu.matmul %16, %33, %cst_35 {dimension_numbers = #tpu.dot_dimension_numbers<[1], [0], [0], [1], [0, 0, 1, 1], [], []>} : vector<8x32xf32>, vector<32x32xf32>, vector<8x32xf32> -> vector<8x32xf32>
    %c0_36 = arith.constant 0 : index
    %c2_37 = arith.constant 2 : index
    %c0_38 = arith.constant 0 : index
    %c0_39 = arith.constant 0 : index
    %35 = vector.load %arg10[%c0_36, %c2_37, %c0_38, %c0_39] : memref<3x3x1x32xf32, #tpu.memory_space<vmem>>, vector<1x1x1x32xf32>
    %36 = vector.shape_cast %35 : vector<1x1x1x32xf32> to vector<1x32xf32>
    %37 = vector.broadcast %36 : vector<1x32xf32> to vector<8x32xf32>
    %38 = arith.addf %34, %37 : vector<8x32xf32>
    %cst_40 = arith.constant dense<0.000000e+00> : vector<8x8xf32>
    %39 = tpu.matmul %24, %31, %cst_40 {dimension_numbers = #tpu.dot_dimension_numbers<[1], [1], [0], [0], [0, 0, 1, 0], [], []>} : vector<8x32xf32>, vector<8x32xf32>, vector<8x8xf32> -> vector<8x8xf32>
    %40 = vector.broadcast %17 : f32 to vector<8x8xf32>
    %41 = arith.mulf %39, %40 : vector<8x8xf32>
    %cst_41 = arith.constant dense<0xFF800000> : vector<8xf32>
    %42 = vector.multi_reduction <maximumf>, %41, %cst_41 [1] : vector<8x8xf32> to vector<8xf32>
    %43 = vector.shape_cast %42 : vector<8xf32> to vector<8x1xf32>
    %44 = vector.broadcast %43 : vector<8x1xf32> to vector<8x8xf32>
    %45 = arith.subf %41, %44 : vector<8x8xf32>
    %46 = math.exp %45 : vector<8x8xf32>
    %cst_42 = arith.constant dense<0.000000e+00> : vector<8xf32>
    %47 = vector.multi_reduction <add>, %46, %cst_42 [1] : vector<8x8xf32> to vector<8xf32>
    %48 = vector.shape_cast %47 : vector<8xf32> to vector<8x1xf32>
    %49 = tpu.reciprocal %48 {approx = true} : vector<8x1xf32> -> vector<8x1xf32>
    %50 = vector.broadcast %49 : vector<8x1xf32> to vector<8x8xf32>
    %51 = arith.mulf %46, %50 : vector<8x8xf32>
    %cst_43 = arith.constant dense<0.000000e+00> : vector<8x32xf32>
    %52 = tpu.matmul %51, %38, %cst_43 {dimension_numbers = #tpu.dot_dimension_numbers<[1], [0], [0], [1], [0, 0, 1, 1], [], []>} : vector<8x8xf32>, vector<8x32xf32>, vector<8x32xf32> -> vector<8x32xf32>
    %c0_44 = arith.constant 0 : index
    %c0_45 = arith.constant 0 : index
    %c0_46 = arith.constant 0 : index
    %53 = vector.load %arg11[%c0_44, %c0_45, %c0_46] : memref<3x32x32xf32, #tpu.memory_space<vmem>>, vector<1x32x32xf32>
    %54 = vector.shape_cast %53 : vector<1x32x32xf32> to vector<32x32xf32>
    %cst_47 = arith.constant dense<0.000000e+00> : vector<8x32xf32>
    %55 = tpu.matmul %52, %54, %cst_47 {dimension_numbers = #tpu.dot_dimension_numbers<[1], [0], [0], [1], [0, 0, 1, 1], [], []>} : vector<8x32xf32>, vector<32x32xf32>, vector<8x32xf32> -> vector<8x32xf32>
    %c0_48 = arith.constant 0 : index
    %c0_49 = arith.constant 0 : index
    %c0_50 = arith.constant 0 : index
    %56 = vector.load %arg12[%c0_48, %c0_49, %c0_50] : memref<3x1x32xf32, #tpu.memory_space<vmem>>, vector<1x1x32xf32>
    %57 = vector.shape_cast %56 : vector<1x1x32xf32> to vector<1x32xf32>
    %58 = vector.broadcast %57 : vector<1x32xf32> to vector<8x32xf32>
    %59 = arith.addf %55, %58 : vector<8x32xf32>
    %60 = arith.addf %16, %59 : vector<8x32xf32>
    %cst_51 = arith.constant dense<0.000000e+00> : vector<8xf32>
    %61 = vector.multi_reduction <add>, %60, %cst_51 [1] : vector<8x32xf32> to vector<8xf32>
    %62 = vector.shape_cast %61 : vector<8xf32> to vector<8x1xf32>
    %cst_52 = arith.constant 3.200000e+01 : f32
    %63 = vector.broadcast %cst_52 : f32 to vector<8x1xf32>
    %64 = arith.divf %62, %63 : vector<8x1xf32>
    %65 = vector.broadcast %64 : vector<8x1xf32> to vector<8x32xf32>
    %66 = arith.subf %60, %65 : vector<8x32xf32>
    %67 = arith.mulf %66, %66 : vector<8x32xf32>
    %cst_53 = arith.constant dense<0.000000e+00> : vector<8xf32>
    %68 = vector.multi_reduction <add>, %67, %cst_53 [1] : vector<8x32xf32> to vector<8xf32>
    %69 = vector.shape_cast %68 : vector<8xf32> to vector<8x1xf32>
    %cst_54 = arith.constant 3.200000e+01 : f32
    %70 = vector.broadcast %cst_54 : f32 to vector<8x1xf32>
    %71 = arith.divf %69, %70 : vector<8x1xf32>
    %72 = vector.broadcast %64 : vector<8x1xf32> to vector<8x32xf32>
    %73 = arith.subf %60, %72 : vector<8x32xf32>
    %cst_55 = arith.constant 9.99999974E-6 : f32
    %74 = vector.broadcast %cst_55 : f32 to vector<8x1xf32>
    %75 = arith.addf %71, %74 : vector<8x1xf32>
    %76 = math.rsqrt %75 : vector<8x1xf32>
    %77 = vector.broadcast %76 : vector<8x1xf32> to vector<8x32xf32>
    %78 = arith.mulf %73, %77 : vector<8x32xf32>
    %c0_56 = arith.constant 0 : index
    %c0_57 = arith.constant 0 : index
    %c0_58 = arith.constant 0 : index
    %79 = vector.load %arg13[%c0_56, %c0_57, %c0_58] : memref<3x1x32xf32, #tpu.memory_space<vmem>>, vector<1x1x32xf32>
    %80 = vector.shape_cast %79 : vector<1x1x32xf32> to vector<1x32xf32>
    %81 = vector.broadcast %80 : vector<1x32xf32> to vector<8x32xf32>
    %82 = arith.mulf %78, %81 : vector<8x32xf32>
    %c0_59 = arith.constant 0 : index
    %c0_60 = arith.constant 0 : index
    %c0_61 = arith.constant 0 : index
    %83 = vector.load %arg14[%c0_59, %c0_60, %c0_61] : memref<3x1x32xf32, #tpu.memory_space<vmem>>, vector<1x1x32xf32>
    %84 = vector.shape_cast %83 : vector<1x1x32xf32> to vector<1x32xf32>
    %85 = vector.broadcast %84 : vector<1x32xf32> to vector<8x32xf32>
    %86 = arith.addf %82, %85 : vector<8x32xf32>
    %c0_62 = arith.constant 0 : index
    %c0_63 = arith.constant 0 : index
    %c0_64 = arith.constant 0 : index
    %87 = vector.load %arg15[%c0_62, %c0_63, %c0_64] : memref<3x32x8xf32, #tpu.memory_space<vmem>>, vector<1x32x8xf32>
    %88 = vector.shape_cast %87 : vector<1x32x8xf32> to vector<32x8xf32>
    %cst_65 = arith.constant dense<0.000000e+00> : vector<8x8xf32>
    %89 = tpu.matmul %86, %88, %cst_65 {dimension_numbers = #tpu.dot_dimension_numbers<[1], [0], [0], [1], [0, 0, 1, 1], [], []>} : vector<8x32xf32>, vector<32x8xf32>, vector<8x8xf32> -> vector<8x8xf32>
    %c0_66 = arith.constant 0 : index
    %c0_67 = arith.constant 0 : index
    %c0_68 = arith.constant 0 : index
    %90 = vector.load %arg16[%c0_66, %c0_67, %c0_68] : memref<3x1x8xf32, #tpu.memory_space<vmem>>, vector<1x1x8xf32>
    %91 = vector.shape_cast %90 : vector<1x1x8xf32> to vector<1x8xf32>
    %92 = vector.broadcast %91 : vector<1x8xf32> to vector<8x8xf32>
    %93 = arith.addf %89, %92 : vector<8x8xf32>
    %cst_69 = arith.constant 0.000000e+00 : f32
    %94 = vector.broadcast %cst_69 : f32 to vector<8x8xf32>
    %95 = arith.maximumf %93, %94 : vector<8x8xf32>
    %c0_70 = arith.constant 0 : index
    %c0_71 = arith.constant 0 : index
    %c0_72 = arith.constant 0 : index
    %96 = vector.load %arg17[%c0_70, %c0_71, %c0_72] : memref<3x8x32xf32, #tpu.memory_space<vmem>>, vector<1x8x32xf32>
    %97 = vector.shape_cast %96 : vector<1x8x32xf32> to vector<8x32xf32>
    %cst_73 = arith.constant dense<0.000000e+00> : vector<8x32xf32>
    %98 = tpu.matmul %95, %97, %cst_73 {dimension_numbers = #tpu.dot_dimension_numbers<[1], [0], [0], [1], [0, 0, 1, 1], [], []>} : vector<8x8xf32>, vector<8x32xf32>, vector<8x32xf32> -> vector<8x32xf32>
    %c0_74 = arith.constant 0 : index
    %c0_75 = arith.constant 0 : index
    %c0_76 = arith.constant 0 : index
    %99 = vector.load %arg18[%c0_74, %c0_75, %c0_76] : memref<3x1x32xf32, #tpu.memory_space<vmem>>, vector<1x1x32xf32>
    %100 = vector.shape_cast %99 : vector<1x1x32xf32> to vector<1x32xf32>
    %101 = vector.broadcast %100 : vector<1x32xf32> to vector<8x32xf32>
    %102 = arith.addf %98, %101 : vector<8x32xf32>
    %103 = arith.addf %86, %102 : vector<8x32xf32>
    %cst_77 = arith.constant dense<0.000000e+00> : vector<8xf32>
    %104 = vector.multi_reduction <add>, %103, %cst_77 [1] : vector<8x32xf32> to vector<8xf32>
    %105 = vector.shape_cast %104 : vector<8xf32> to vector<8x1xf32>
    %cst_78 = arith.constant 3.200000e+01 : f32
    %106 = vector.broadcast %cst_78 : f32 to vector<8x1xf32>
    %107 = arith.divf %105, %106 : vector<8x1xf32>
    %108 = vector.broadcast %107 : vector<8x1xf32> to vector<8x32xf32>
    %109 = arith.subf %103, %108 : vector<8x32xf32>
    %110 = arith.mulf %109, %109 : vector<8x32xf32>
    %cst_79 = arith.constant dense<0.000000e+00> : vector<8xf32>
    %111 = vector.multi_reduction <add>, %110, %cst_79 [1] : vector<8x32xf32> to vector<8xf32>
    %112 = vector.shape_cast %111 : vector<8xf32> to vector<8x1xf32>
    %cst_80 = arith.constant 3.200000e+01 : f32
    %113 = vector.broadcast %cst_80 : f32 to vector<8x1xf32>
    %114 = arith.divf %112, %113 : vector<8x1xf32>
    %115 = vector.broadcast %107 : vector<8x1xf32> to vector<8x32xf32>
    %116 = arith.subf %103, %115 : vector<8x32xf32>
    %cst_81 = arith.constant 9.99999974E-6 : f32
    %117 = vector.broadcast %cst_81 : f32 to vector<8x1xf32>
    %118 = arith.addf %114, %117 : vector<8x1xf32>
    %119 = math.rsqrt %118 : vector<8x1xf32>
    %120 = vector.broadcast %119 : vector<8x1xf32> to vector<8x32xf32>
    %121 = arith.mulf %116, %120 : vector<8x32xf32>
    %c0_82 = arith.constant 0 : index
    %c0_83 = arith.constant 0 : index
    %c0_84 = arith.constant 0 : index
    %122 = vector.load %arg19[%c0_82, %c0_83, %c0_84] : memref<3x1x32xf32, #tpu.memory_space<vmem>>, vector<1x1x32xf32>
    %123 = vector.shape_cast %122 : vector<1x1x32xf32> to vector<1x32xf32>
    %124 = vector.broadcast %123 : vector<1x32xf32> to vector<8x32xf32>
    %125 = arith.mulf %121, %124 : vector<8x32xf32>
    %c0_85 = arith.constant 0 : index
    %c0_86 = arith.constant 0 : index
    %c0_87 = arith.constant 0 : index
    %126 = vector.load %arg20[%c0_85, %c0_86, %c0_87] : memref<3x1x32xf32, #tpu.memory_space<vmem>>, vector<1x1x32xf32>
    %127 = vector.shape_cast %126 : vector<1x1x32xf32> to vector<1x32xf32>
    %128 = vector.broadcast %127 : vector<1x32xf32> to vector<8x32xf32>
    %129 = arith.addf %125, %128 : vector<8x32xf32>
    %130 = arith.addf %129, %16 : vector<8x32xf32>
    %c1_88 = arith.constant 1 : index
    %c0_89 = arith.constant 0 : index
    %c0_90 = arith.constant 0 : index
    %c0_91 = arith.constant 0 : index
    %131 = vector.load %arg9[%c1_88, %c0_89, %c0_90, %c0_91] : memref<3x3x32x32xf32, #tpu.memory_space<vmem>>, vector<1x1x32x32xf32>
    %132 = vector.shape_cast %131 : vector<1x1x32x32xf32> to vector<32x32xf32>
    %cst_92 = arith.constant dense<0.000000e+00> : vector<8x32xf32>
    %133 = tpu.matmul %130, %132, %cst_92 {dimension_numbers = #tpu.dot_dimension_numbers<[1], [0], [0], [1], [0, 0, 1, 1], [], []>} : vector<8x32xf32>, vector<32x32xf32>, vector<8x32xf32> -> vector<8x32xf32>
    %c1_93 = arith.constant 1 : index
    %c0_94 = arith.constant 0 : index
    %c0_95 = arith.constant 0 : index
    %c0_96 = arith.constant 0 : index
    %134 = vector.load %arg10[%c1_93, %c0_94, %c0_95, %c0_96] : memref<3x3x1x32xf32, #tpu.memory_space<vmem>>, vector<1x1x1x32xf32>
    %135 = vector.shape_cast %134 : vector<1x1x1x32xf32> to vector<1x32xf32>
    %136 = vector.broadcast %135 : vector<1x32xf32> to vector<8x32xf32>
    %137 = arith.addf %133, %136 : vector<8x32xf32>
    %c1_97 = arith.constant 1 : index
    %c1_98 = arith.constant 1 : index
    %c0_99 = arith.constant 0 : index
    %c0_100 = arith.constant 0 : index
    %138 = vector.load %arg9[%c1_97, %c1_98, %c0_99, %c0_100] : memref<3x3x32x32xf32, #tpu.memory_space<vmem>>, vector<1x1x32x32xf32>
    %139 = vector.shape_cast %138 : vector<1x1x32x32xf32> to vector<32x32xf32>
    %cst_101 = arith.constant dense<0.000000e+00> : vector<8x32xf32>
    %140 = tpu.matmul %130, %139, %cst_101 {dimension_numbers = #tpu.dot_dimension_numbers<[1], [0], [0], [1], [0, 0, 1, 1], [], []>} : vector<8x32xf32>, vector<32x32xf32>, vector<8x32xf32> -> vector<8x32xf32>
    %c1_102 = arith.constant 1 : index
    %c1_103 = arith.constant 1 : index
    %c0_104 = arith.constant 0 : index
    %c0_105 = arith.constant 0 : index
    %141 = vector.load %arg10[%c1_102, %c1_103, %c0_104, %c0_105] : memref<3x3x1x32xf32, #tpu.memory_space<vmem>>, vector<1x1x1x32xf32>
    %142 = vector.shape_cast %141 : vector<1x1x1x32xf32> to vector<1x32xf32>
    %143 = vector.broadcast %142 : vector<1x32xf32> to vector<8x32xf32>
    %144 = arith.addf %140, %143 : vector<8x32xf32>
    %c1_106 = arith.constant 1 : index
    %c2_107 = arith.constant 2 : index
    %c0_108 = arith.constant 0 : index
    %c0_109 = arith.constant 0 : index
    %145 = vector.load %arg9[%c1_106, %c2_107, %c0_108, %c0_109] : memref<3x3x32x32xf32, #tpu.memory_space<vmem>>, vector<1x1x32x32xf32>
    %146 = vector.shape_cast %145 : vector<1x1x32x32xf32> to vector<32x32xf32>
    %cst_110 = arith.constant dense<0.000000e+00> : vector<8x32xf32>
    %147 = tpu.matmul %130, %146, %cst_110 {dimension_numbers = #tpu.dot_dimension_numbers<[1], [0], [0], [1], [0, 0, 1, 1], [], []>} : vector<8x32xf32>, vector<32x32xf32>, vector<8x32xf32> -> vector<8x32xf32>
    %c1_111 = arith.constant 1 : index
    %c2_112 = arith.constant 2 : index
    %c0_113 = arith.constant 0 : index
    %c0_114 = arith.constant 0 : index
    %148 = vector.load %arg10[%c1_111, %c2_112, %c0_113, %c0_114] : memref<3x3x1x32xf32, #tpu.memory_space<vmem>>, vector<1x1x1x32xf32>
    %149 = vector.shape_cast %148 : vector<1x1x1x32xf32> to vector<1x32xf32>
    %150 = vector.broadcast %149 : vector<1x32xf32> to vector<8x32xf32>
    %151 = arith.addf %147, %150 : vector<8x32xf32>
    %cst_115 = arith.constant dense<0.000000e+00> : vector<8x8xf32>
    %152 = tpu.matmul %137, %144, %cst_115 {dimension_numbers = #tpu.dot_dimension_numbers<[1], [1], [0], [0], [0, 0, 1, 0], [], []>} : vector<8x32xf32>, vector<8x32xf32>, vector<8x8xf32> -> vector<8x8xf32>
    %153 = vector.broadcast %17 : f32 to vector<8x8xf32>
    %154 = arith.mulf %152, %153 : vector<8x8xf32>
    %cst_116 = arith.constant dense<0xFF800000> : vector<8xf32>
    %155 = vector.multi_reduction <maximumf>, %154, %cst_116 [1] : vector<8x8xf32> to vector<8xf32>
    %156 = vector.shape_cast %155 : vector<8xf32> to vector<8x1xf32>
    %157 = vector.broadcast %156 : vector<8x1xf32> to vector<8x8xf32>
    %158 = arith.subf %154, %157 : vector<8x8xf32>
    %159 = math.exp %158 : vector<8x8xf32>
    %cst_117 = arith.constant dense<0.000000e+00> : vector<8xf32>
    %160 = vector.multi_reduction <add>, %159, %cst_117 [1] : vector<8x8xf32> to vector<8xf32>
    %161 = vector.shape_cast %160 : vector<8xf32> to vector<8x1xf32>
    %162 = tpu.reciprocal %161 {approx = true} : vector<8x1xf32> -> vector<8x1xf32>
    %163 = vector.broadcast %162 : vector<8x1xf32> to vector<8x8xf32>
    %164 = arith.mulf %159, %163 : vector<8x8xf32>
    %cst_118 = arith.constant dense<0.000000e+00> : vector<8x32xf32>
    %165 = tpu.matmul %164, %151, %cst_118 {dimension_numbers = #tpu.dot_dimension_numbers<[1], [0], [0], [1], [0, 0, 1, 1], [], []>} : vector<8x8xf32>, vector<8x32xf32>, vector<8x32xf32> -> vector<8x32xf32>
    %c1_119 = arith.constant 1 : index
    %c0_120 = arith.constant 0 : index
    %c0_121 = arith.constant 0 : index
    %166 = vector.load %arg11[%c1_119, %c0_120, %c0_121] : memref<3x32x32xf32, #tpu.memory_space<vmem>>, vector<1x32x32xf32>
    %167 = vector.shape_cast %166 : vector<1x32x32xf32> to vector<32x32xf32>
    %cst_122 = arith.constant dense<0.000000e+00> : vector<8x32xf32>
    %168 = tpu.matmul %165, %167, %cst_122 {dimension_numbers = #tpu.dot_dimension_numbers<[1], [0], [0], [1], [0, 0, 1, 1], [], []>} : vector<8x32xf32>, vector<32x32xf32>, vector<8x32xf32> -> vector<8x32xf32>
    %c1_123 = arith.constant 1 : index
    %c0_124 = arith.constant 0 : index
    %c0_125 = arith.constant 0 : index
    %169 = vector.load %arg12[%c1_123, %c0_124, %c0_125] : memref<3x1x32xf32, #tpu.memory_space<vmem>>, vector<1x1x32xf32>
    %170 = vector.shape_cast %169 : vector<1x1x32xf32> to vector<1x32xf32>
    %171 = vector.broadcast %170 : vector<1x32xf32> to vector<8x32xf32>
    %172 = arith.addf %168, %171 : vector<8x32xf32>
    %173 = arith.addf %130, %172 : vector<8x32xf32>
    %cst_126 = arith.constant dense<0.000000e+00> : vector<8xf32>
    %174 = vector.multi_reduction <add>, %173, %cst_126 [1] : vector<8x32xf32> to vector<8xf32>
    %175 = vector.shape_cast %174 : vector<8xf32> to vector<8x1xf32>
    %cst_127 = arith.constant 3.200000e+01 : f32
    %176 = vector.broadcast %cst_127 : f32 to vector<8x1xf32>
    %177 = arith.divf %175, %176 : vector<8x1xf32>
    %178 = vector.broadcast %177 : vector<8x1xf32> to vector<8x32xf32>
    %179 = arith.subf %173, %178 : vector<8x32xf32>
    %180 = arith.mulf %179, %179 : vector<8x32xf32>
    %cst_128 = arith.constant dense<0.000000e+00> : vector<8xf32>
    %181 = vector.multi_reduction <add>, %180, %cst_128 [1] : vector<8x32xf32> to vector<8xf32>
    %182 = vector.shape_cast %181 : vector<8xf32> to vector<8x1xf32>
    %cst_129 = arith.constant 3.200000e+01 : f32
    %183 = vector.broadcast %cst_129 : f32 to vector<8x1xf32>
    %184 = arith.divf %182, %183 : vector<8x1xf32>
    %185 = vector.broadcast %177 : vector<8x1xf32> to vector<8x32xf32>
    %186 = arith.subf %173, %185 : vector<8x32xf32>
    %cst_130 = arith.constant 9.99999974E-6 : f32
    %187 = vector.broadcast %cst_130 : f32 to vector<8x1xf32>
    %188 = arith.addf %184, %187 : vector<8x1xf32>
    %189 = math.rsqrt %188 : vector<8x1xf32>
    %190 = vector.broadcast %189 : vector<8x1xf32> to vector<8x32xf32>
    %191 = arith.mulf %186, %190 : vector<8x32xf32>
    %c1_131 = arith.constant 1 : index
    %c0_132 = arith.constant 0 : index
    %c0_133 = arith.constant 0 : index
    %192 = vector.load %arg13[%c1_131, %c0_132, %c0_133] : memref<3x1x32xf32, #tpu.memory_space<vmem>>, vector<1x1x32xf32>
    %193 = vector.shape_cast %192 : vector<1x1x32xf32> to vector<1x32xf32>
    %194 = vector.broadcast %193 : vector<1x32xf32> to vector<8x32xf32>
    %195 = arith.mulf %191, %194 : vector<8x32xf32>
    %c1_134 = arith.constant 1 : index
    %c0_135 = arith.constant 0 : index
    %c0_136 = arith.constant 0 : index
    %196 = vector.load %arg14[%c1_134, %c0_135, %c0_136] : memref<3x1x32xf32, #tpu.memory_space<vmem>>, vector<1x1x32xf32>
    %197 = vector.shape_cast %196 : vector<1x1x32xf32> to vector<1x32xf32>
    %198 = vector.broadcast %197 : vector<1x32xf32> to vector<8x32xf32>
    %199 = arith.addf %195, %198 : vector<8x32xf32>
    %c1_137 = arith.constant 1 : index
    %c0_138 = arith.constant 0 : index
    %c0_139 = arith.constant 0 : index
    %200 = vector.load %arg15[%c1_137, %c0_138, %c0_139] : memref<3x32x8xf32, #tpu.memory_space<vmem>>, vector<1x32x8xf32>
    %201 = vector.shape_cast %200 : vector<1x32x8xf32> to vector<32x8xf32>
    %cst_140 = arith.constant dense<0.000000e+00> : vector<8x8xf32>
    %202 = tpu.matmul %199, %201, %cst_140 {dimension_numbers = #tpu.dot_dimension_numbers<[1], [0], [0], [1], [0, 0, 1, 1], [], []>} : vector<8x32xf32>, vector<32x8xf32>, vector<8x8xf32> -> vector<8x8xf32>
    %c1_141 = arith.constant 1 : index
    %c0_142 = arith.constant 0 : index
    %c0_143 = arith.constant 0 : index
    %203 = vector.load %arg16[%c1_141, %c0_142, %c0_143] : memref<3x1x8xf32, #tpu.memory_space<vmem>>, vector<1x1x8xf32>
    %204 = vector.shape_cast %203 : vector<1x1x8xf32> to vector<1x8xf32>
    %205 = vector.broadcast %204 : vector<1x8xf32> to vector<8x8xf32>
    %206 = arith.addf %202, %205 : vector<8x8xf32>
    %cst_144 = arith.constant 0.000000e+00 : f32
    %207 = vector.broadcast %cst_144 : f32 to vector<8x8xf32>
    %208 = arith.maximumf %206, %207 : vector<8x8xf32>
    %c1_145 = arith.constant 1 : index
    %c0_146 = arith.constant 0 : index
    %c0_147 = arith.constant 0 : index
    %209 = vector.load %arg17[%c1_145, %c0_146, %c0_147] : memref<3x8x32xf32, #tpu.memory_space<vmem>>, vector<1x8x32xf32>
    %210 = vector.shape_cast %209 : vector<1x8x32xf32> to vector<8x32xf32>
    %cst_148 = arith.constant dense<0.000000e+00> : vector<8x32xf32>
    %211 = tpu.matmul %208, %210, %cst_148 {dimension_numbers = #tpu.dot_dimension_numbers<[1], [0], [0], [1], [0, 0, 1, 1], [], []>} : vector<8x8xf32>, vector<8x32xf32>, vector<8x32xf32> -> vector<8x32xf32>
    %c1_149 = arith.constant 1 : index
    %c0_150 = arith.constant 0 : index
    %c0_151 = arith.constant 0 : index
    %212 = vector.load %arg18[%c1_149, %c0_150, %c0_151] : memref<3x1x32xf32, #tpu.memory_space<vmem>>, vector<1x1x32xf32>
    %213 = vector.shape_cast %212 : vector<1x1x32xf32> to vector<1x32xf32>
    %214 = vector.broadcast %213 : vector<1x32xf32> to vector<8x32xf32>
    %215 = arith.addf %211, %214 : vector<8x32xf32>
    %216 = arith.addf %199, %215 : vector<8x32xf32>
    %cst_152 = arith.constant dense<0.000000e+00> : vector<8xf32>
    %217 = vector.multi_reduction <add>, %216, %cst_152 [1] : vector<8x32xf32> to vector<8xf32>
    %218 = vector.shape_cast %217 : vector<8xf32> to vector<8x1xf32>
    %cst_153 = arith.constant 3.200000e+01 : f32
    %219 = vector.broadcast %cst_153 : f32 to vector<8x1xf32>
    %220 = arith.divf %218, %219 : vector<8x1xf32>
    %221 = vector.broadcast %220 : vector<8x1xf32> to vector<8x32xf32>
    %222 = arith.subf %216, %221 : vector<8x32xf32>
    %223 = arith.mulf %222, %222 : vector<8x32xf32>
    %cst_154 = arith.constant dense<0.000000e+00> : vector<8xf32>
    %224 = vector.multi_reduction <add>, %223, %cst_154 [1] : vector<8x32xf32> to vector<8xf32>
    %225 = vector.shape_cast %224 : vector<8xf32> to vector<8x1xf32>
    %cst_155 = arith.constant 3.200000e+01 : f32
    %226 = vector.broadcast %cst_155 : f32 to vector<8x1xf32>
    %227 = arith.divf %225, %226 : vector<8x1xf32>
    %228 = vector.broadcast %220 : vector<8x1xf32> to vector<8x32xf32>
    %229 = arith.subf %216, %228 : vector<8x32xf32>
    %cst_156 = arith.constant 9.99999974E-6 : f32
    %230 = vector.broadcast %cst_156 : f32 to vector<8x1xf32>
    %231 = arith.addf %227, %230 : vector<8x1xf32>
    %232 = math.rsqrt %231 : vector<8x1xf32>
    %233 = vector.broadcast %232 : vector<8x1xf32> to vector<8x32xf32>
    %234 = arith.mulf %229, %233 : vector<8x32xf32>
    %c1_157 = arith.constant 1 : index
    %c0_158 = arith.constant 0 : index
    %c0_159 = arith.constant 0 : index
    %235 = vector.load %arg19[%c1_157, %c0_158, %c0_159] : memref<3x1x32xf32, #tpu.memory_space<vmem>>, vector<1x1x32xf32>
    %236 = vector.shape_cast %235 : vector<1x1x32xf32> to vector<1x32xf32>
    %237 = vector.broadcast %236 : vector<1x32xf32> to vector<8x32xf32>
    %238 = arith.mulf %234, %237 : vector<8x32xf32>
    %c1_160 = arith.constant 1 : index
    %c0_161 = arith.constant 0 : index
    %c0_162 = arith.constant 0 : index
    %239 = vector.load %arg20[%c1_160, %c0_161, %c0_162] : memref<3x1x32xf32, #tpu.memory_space<vmem>>, vector<1x1x32xf32>
    %240 = vector.shape_cast %239 : vector<1x1x32xf32> to vector<1x32xf32>
    %241 = vector.broadcast %240 : vector<1x32xf32> to vector<8x32xf32>
    %242 = arith.addf %238, %241 : vector<8x32xf32>
    %243 = arith.addf %242, %130 : vector<8x32xf32>
    %c2_163 = arith.constant 2 : index
    %c0_164 = arith.constant 0 : index
    %c0_165 = arith.constant 0 : index
    %c0_166 = arith.constant 0 : index
    %244 = vector.load %arg9[%c2_163, %c0_164, %c0_165, %c0_166] : memref<3x3x32x32xf32, #tpu.memory_space<vmem>>, vector<1x1x32x32xf32>
    %245 = vector.shape_cast %244 : vector<1x1x32x32xf32> to vector<32x32xf32>
    %cst_167 = arith.constant dense<0.000000e+00> : vector<8x32xf32>
    %246 = tpu.matmul %243, %245, %cst_167 {dimension_numbers = #tpu.dot_dimension_numbers<[1], [0], [0], [1], [0, 0, 1, 1], [], []>} : vector<8x32xf32>, vector<32x32xf32>, vector<8x32xf32> -> vector<8x32xf32>
    %c2_168 = arith.constant 2 : index
    %c0_169 = arith.constant 0 : index
    %c0_170 = arith.constant 0 : index
    %c0_171 = arith.constant 0 : index
    %247 = vector.load %arg10[%c2_168, %c0_169, %c0_170, %c0_171] : memref<3x3x1x32xf32, #tpu.memory_space<vmem>>, vector<1x1x1x32xf32>
    %248 = vector.shape_cast %247 : vector<1x1x1x32xf32> to vector<1x32xf32>
    %249 = vector.broadcast %248 : vector<1x32xf32> to vector<8x32xf32>
    %250 = arith.addf %246, %249 : vector<8x32xf32>
    %c2_172 = arith.constant 2 : index
    %c1_173 = arith.constant 1 : index
    %c0_174 = arith.constant 0 : index
    %c0_175 = arith.constant 0 : index
    %251 = vector.load %arg9[%c2_172, %c1_173, %c0_174, %c0_175] : memref<3x3x32x32xf32, #tpu.memory_space<vmem>>, vector<1x1x32x32xf32>
    %252 = vector.shape_cast %251 : vector<1x1x32x32xf32> to vector<32x32xf32>
    %cst_176 = arith.constant dense<0.000000e+00> : vector<8x32xf32>
    %253 = tpu.matmul %243, %252, %cst_176 {dimension_numbers = #tpu.dot_dimension_numbers<[1], [0], [0], [1], [0, 0, 1, 1], [], []>} : vector<8x32xf32>, vector<32x32xf32>, vector<8x32xf32> -> vector<8x32xf32>
    %c2_177 = arith.constant 2 : index
    %c1_178 = arith.constant 1 : index
    %c0_179 = arith.constant 0 : index
    %c0_180 = arith.constant 0 : index
    %254 = vector.load %arg10[%c2_177, %c1_178, %c0_179, %c0_180] : memref<3x3x1x32xf32, #tpu.memory_space<vmem>>, vector<1x1x1x32xf32>
    %255 = vector.shape_cast %254 : vector<1x1x1x32xf32> to vector<1x32xf32>
    %256 = vector.broadcast %255 : vector<1x32xf32> to vector<8x32xf32>
    %257 = arith.addf %253, %256 : vector<8x32xf32>
    %c2_181 = arith.constant 2 : index
    %c2_182 = arith.constant 2 : index
    %c0_183 = arith.constant 0 : index
    %c0_184 = arith.constant 0 : index
    %258 = vector.load %arg9[%c2_181, %c2_182, %c0_183, %c0_184] : memref<3x3x32x32xf32, #tpu.memory_space<vmem>>, vector<1x1x32x32xf32>
    %259 = vector.shape_cast %258 : vector<1x1x32x32xf32> to vector<32x32xf32>
    %cst_185 = arith.constant dense<0.000000e+00> : vector<8x32xf32>
    %260 = tpu.matmul %243, %259, %cst_185 {dimension_numbers = #tpu.dot_dimension_numbers<[1], [0], [0], [1], [0, 0, 1, 1], [], []>} : vector<8x32xf32>, vector<32x32xf32>, vector<8x32xf32> -> vector<8x32xf32>
    %c2_186 = arith.constant 2 : index
    %c2_187 = arith.constant 2 : index
    %c0_188 = arith.constant 0 : index
    %c0_189 = arith.constant 0 : index
    %261 = vector.load %arg10[%c2_186, %c2_187, %c0_188, %c0_189] : memref<3x3x1x32xf32, #tpu.memory_space<vmem>>, vector<1x1x1x32xf32>
    %262 = vector.shape_cast %261 : vector<1x1x1x32xf32> to vector<1x32xf32>
    %263 = vector.broadcast %262 : vector<1x32xf32> to vector<8x32xf32>
    %264 = arith.addf %260, %263 : vector<8x32xf32>
    %cst_190 = arith.constant dense<0.000000e+00> : vector<8x8xf32>
    %265 = tpu.matmul %250, %257, %cst_190 {dimension_numbers = #tpu.dot_dimension_numbers<[1], [1], [0], [0], [0, 0, 1, 0], [], []>} : vector<8x32xf32>, vector<8x32xf32>, vector<8x8xf32> -> vector<8x8xf32>
    %266 = vector.broadcast %17 : f32 to vector<8x8xf32>
    %267 = arith.mulf %265, %266 : vector<8x8xf32>
    %cst_191 = arith.constant dense<0xFF800000> : vector<8xf32>
    %268 = vector.multi_reduction <maximumf>, %267, %cst_191 [1] : vector<8x8xf32> to vector<8xf32>
    %269 = vector.shape_cast %268 : vector<8xf32> to vector<8x1xf32>
    %270 = vector.broadcast %269 : vector<8x1xf32> to vector<8x8xf32>
    %271 = arith.subf %267, %270 : vector<8x8xf32>
    %272 = math.exp %271 : vector<8x8xf32>
    %cst_192 = arith.constant dense<0.000000e+00> : vector<8xf32>
    %273 = vector.multi_reduction <add>, %272, %cst_192 [1] : vector<8x8xf32> to vector<8xf32>
    %274 = vector.shape_cast %273 : vector<8xf32> to vector<8x1xf32>
    %275 = tpu.reciprocal %274 {approx = true} : vector<8x1xf32> -> vector<8x1xf32>
    %276 = vector.broadcast %275 : vector<8x1xf32> to vector<8x8xf32>
    %277 = arith.mulf %272, %276 : vector<8x8xf32>
    %cst_193 = arith.constant dense<0.000000e+00> : vector<8x32xf32>
    %278 = tpu.matmul %277, %264, %cst_193 {dimension_numbers = #tpu.dot_dimension_numbers<[1], [0], [0], [1], [0, 0, 1, 1], [], []>} : vector<8x8xf32>, vector<8x32xf32>, vector<8x32xf32> -> vector<8x32xf32>
    %c2_194 = arith.constant 2 : index
    %c0_195 = arith.constant 0 : index
    %c0_196 = arith.constant 0 : index
    %279 = vector.load %arg11[%c2_194, %c0_195, %c0_196] : memref<3x32x32xf32, #tpu.memory_space<vmem>>, vector<1x32x32xf32>
    %280 = vector.shape_cast %279 : vector<1x32x32xf32> to vector<32x32xf32>
    %cst_197 = arith.constant dense<0.000000e+00> : vector<8x32xf32>
    %281 = tpu.matmul %278, %280, %cst_197 {dimension_numbers = #tpu.dot_dimension_numbers<[1], [0], [0], [1], [0, 0, 1, 1], [], []>} : vector<8x32xf32>, vector<32x32xf32>, vector<8x32xf32> -> vector<8x32xf32>
    %c2_198 = arith.constant 2 : index
    %c0_199 = arith.constant 0 : index
    %c0_200 = arith.constant 0 : index
    %282 = vector.load %arg12[%c2_198, %c0_199, %c0_200] : memref<3x1x32xf32, #tpu.memory_space<vmem>>, vector<1x1x32xf32>
    %283 = vector.shape_cast %282 : vector<1x1x32xf32> to vector<1x32xf32>
    %284 = vector.broadcast %283 : vector<1x32xf32> to vector<8x32xf32>
    %285 = arith.addf %281, %284 : vector<8x32xf32>
    %286 = arith.addf %243, %285 : vector<8x32xf32>
    %cst_201 = arith.constant dense<0.000000e+00> : vector<8xf32>
    %287 = vector.multi_reduction <add>, %286, %cst_201 [1] : vector<8x32xf32> to vector<8xf32>
    %288 = vector.shape_cast %287 : vector<8xf32> to vector<8x1xf32>
    %cst_202 = arith.constant 3.200000e+01 : f32
    %289 = vector.broadcast %cst_202 : f32 to vector<8x1xf32>
    %290 = arith.divf %288, %289 : vector<8x1xf32>
    %291 = vector.broadcast %290 : vector<8x1xf32> to vector<8x32xf32>
    %292 = arith.subf %286, %291 : vector<8x32xf32>
    %293 = arith.mulf %292, %292 : vector<8x32xf32>
    %cst_203 = arith.constant dense<0.000000e+00> : vector<8xf32>
    %294 = vector.multi_reduction <add>, %293, %cst_203 [1] : vector<8x32xf32> to vector<8xf32>
    %295 = vector.shape_cast %294 : vector<8xf32> to vector<8x1xf32>
    %cst_204 = arith.constant 3.200000e+01 : f32
    %296 = vector.broadcast %cst_204 : f32 to vector<8x1xf32>
    %297 = arith.divf %295, %296 : vector<8x1xf32>
    %298 = vector.broadcast %290 : vector<8x1xf32> to vector<8x32xf32>
    %299 = arith.subf %286, %298 : vector<8x32xf32>
    %cst_205 = arith.constant 9.99999974E-6 : f32
    %300 = vector.broadcast %cst_205 : f32 to vector<8x1xf32>
    %301 = arith.addf %297, %300 : vector<8x1xf32>
    %302 = math.rsqrt %301 : vector<8x1xf32>
    %303 = vector.broadcast %302 : vector<8x1xf32> to vector<8x32xf32>
    %304 = arith.mulf %299, %303 : vector<8x32xf32>
    %c2_206 = arith.constant 2 : index
    %c0_207 = arith.constant 0 : index
    %c0_208 = arith.constant 0 : index
    %305 = vector.load %arg13[%c2_206, %c0_207, %c0_208] : memref<3x1x32xf32, #tpu.memory_space<vmem>>, vector<1x1x32xf32>
    %306 = vector.shape_cast %305 : vector<1x1x32xf32> to vector<1x32xf32>
    %307 = vector.broadcast %306 : vector<1x32xf32> to vector<8x32xf32>
    %308 = arith.mulf %304, %307 : vector<8x32xf32>
    %c2_209 = arith.constant 2 : index
    %c0_210 = arith.constant 0 : index
    %c0_211 = arith.constant 0 : index
    %309 = vector.load %arg14[%c2_209, %c0_210, %c0_211] : memref<3x1x32xf32, #tpu.memory_space<vmem>>, vector<1x1x32xf32>
    %310 = vector.shape_cast %309 : vector<1x1x32xf32> to vector<1x32xf32>
    %311 = vector.broadcast %310 : vector<1x32xf32> to vector<8x32xf32>
    %312 = arith.addf %308, %311 : vector<8x32xf32>
    %c2_212 = arith.constant 2 : index
    %c0_213 = arith.constant 0 : index
    %c0_214 = arith.constant 0 : index
    %313 = vector.load %arg15[%c2_212, %c0_213, %c0_214] : memref<3x32x8xf32, #tpu.memory_space<vmem>>, vector<1x32x8xf32>
    %314 = vector.shape_cast %313 : vector<1x32x8xf32> to vector<32x8xf32>
    %cst_215 = arith.constant dense<0.000000e+00> : vector<8x8xf32>
    %315 = tpu.matmul %312, %314, %cst_215 {dimension_numbers = #tpu.dot_dimension_numbers<[1], [0], [0], [1], [0, 0, 1, 1], [], []>} : vector<8x32xf32>, vector<32x8xf32>, vector<8x8xf32> -> vector<8x8xf32>
    %c2_216 = arith.constant 2 : index
    %c0_217 = arith.constant 0 : index
    %c0_218 = arith.constant 0 : index
    %316 = vector.load %arg16[%c2_216, %c0_217, %c0_218] : memref<3x1x8xf32, #tpu.memory_space<vmem>>, vector<1x1x8xf32>
    %317 = vector.shape_cast %316 : vector<1x1x8xf32> to vector<1x8xf32>
    %318 = vector.broadcast %317 : vector<1x8xf32> to vector<8x8xf32>
    %319 = arith.addf %315, %318 : vector<8x8xf32>
    %cst_219 = arith.constant 0.000000e+00 : f32
    %320 = vector.broadcast %cst_219 : f32 to vector<8x8xf32>
    %321 = arith.maximumf %319, %320 : vector<8x8xf32>
    %c2_220 = arith.constant 2 : index
    %c0_221 = arith.constant 0 : index
    %c0_222 = arith.constant 0 : index
    %322 = vector.load %arg17[%c2_220, %c0_221, %c0_222] : memref<3x8x32xf32, #tpu.memory_space<vmem>>, vector<1x8x32xf32>
    %323 = vector.shape_cast %322 : vector<1x8x32xf32> to vector<8x32xf32>
    %cst_223 = arith.constant dense<0.000000e+00> : vector<8x32xf32>
    %324 = tpu.matmul %321, %323, %cst_223 {dimension_numbers = #tpu.dot_dimension_numbers<[1], [0], [0], [1], [0, 0, 1, 1], [], []>} : vector<8x8xf32>, vector<8x32xf32>, vector<8x32xf32> -> vector<8x32xf32>
    %c2_224 = arith.constant 2 : index
    %c0_225 = arith.constant 0 : index
    %c0_226 = arith.constant 0 : index
    %325 = vector.load %arg18[%c2_224, %c0_225, %c0_226] : memref<3x1x32xf32, #tpu.memory_space<vmem>>, vector<1x1x32xf32>
    %326 = vector.shape_cast %325 : vector<1x1x32xf32> to vector<1x32xf32>
    %327 = vector.broadcast %326 : vector<1x32xf32> to vector<8x32xf32>
    %328 = arith.addf %324, %327 : vector<8x32xf32>
    %329 = arith.addf %312, %328 : vector<8x32xf32>
    %cst_227 = arith.constant dense<0.000000e+00> : vector<8xf32>
    %330 = vector.multi_reduction <add>, %329, %cst_227 [1] : vector<8x32xf32> to vector<8xf32>
    %331 = vector.shape_cast %330 : vector<8xf32> to vector<8x1xf32>
    %cst_228 = arith.constant 3.200000e+01 : f32
    %332 = vector.broadcast %cst_228 : f32 to vector<8x1xf32>
    %333 = arith.divf %331, %332 : vector<8x1xf32>
    %334 = vector.broadcast %333 : vector<8x1xf32> to vector<8x32xf32>
    %335 = arith.subf %329, %334 : vector<8x32xf32>
    %336 = arith.mulf %335, %335 : vector<8x32xf32>
    %cst_229 = arith.constant dense<0.000000e+00> : vector<8xf32>
    %337 = vector.multi_reduction <add>, %336, %cst_229 [1] : vector<8x32xf32> to vector<8xf32>
    %338 = vector.shape_cast %337 : vector<8xf32> to vector<8x1xf32>
    %cst_230 = arith.constant 3.200000e+01 : f32
    %339 = vector.broadcast %cst_230 : f32 to vector<8x1xf32>
    %340 = arith.divf %338, %339 : vector<8x1xf32>
    %341 = vector.broadcast %333 : vector<8x1xf32> to vector<8x32xf32>
    %342 = arith.subf %329, %341 : vector<8x32xf32>
    %cst_231 = arith.constant 9.99999974E-6 : f32
    %343 = vector.broadcast %cst_231 : f32 to vector<8x1xf32>
    %344 = arith.addf %340, %343 : vector<8x1xf32>
    %345 = math.rsqrt %344 : vector<8x1xf32>
    %346 = vector.broadcast %345 : vector<8x1xf32> to vector<8x32xf32>
    %347 = arith.mulf %342, %346 : vector<8x32xf32>
    %c2_232 = arith.constant 2 : index
    %c0_233 = arith.constant 0 : index
    %c0_234 = arith.constant 0 : index
    %348 = vector.load %arg19[%c2_232, %c0_233, %c0_234] : memref<3x1x32xf32, #tpu.memory_space<vmem>>, vector<1x1x32xf32>
    %349 = vector.shape_cast %348 : vector<1x1x32xf32> to vector<1x32xf32>
    %350 = vector.broadcast %349 : vector<1x32xf32> to vector<8x32xf32>
    %351 = arith.mulf %347, %350 : vector<8x32xf32>
    %c2_235 = arith.constant 2 : index
    %c0_236 = arith.constant 0 : index
    %c0_237 = arith.constant 0 : index
    %352 = vector.load %arg20[%c2_235, %c0_236, %c0_237] : memref<3x1x32xf32, #tpu.memory_space<vmem>>, vector<1x1x32xf32>
    %353 = vector.shape_cast %352 : vector<1x1x32xf32> to vector<1x32xf32>
    %354 = vector.broadcast %353 : vector<1x32xf32> to vector<8x32xf32>
    %355 = arith.addf %351, %354 : vector<8x32xf32>
    %356 = arith.addf %355, %243 : vector<8x32xf32>
    %c0_238 = arith.constant 0 : index
    %c0_239 = arith.constant 0 : index
    %357 = vector.load %arg21[%c0_238, %c0_239] : memref<32x32xf32, #tpu.memory_space<vmem>>, vector<32x32xf32>
    %cst_240 = arith.constant dense<0.000000e+00> : vector<8x32xf32>
    %358 = tpu.matmul %356, %357, %cst_240 {dimension_numbers = #tpu.dot_dimension_numbers<[1], [0], [0], [1], [0, 0, 1, 1], [], []>} : vector<8x32xf32>, vector<32x32xf32>, vector<8x32xf32> -> vector<8x32xf32>
    %c0_241 = arith.constant 0 : index
    %c0_242 = arith.constant 0 : index
    %359 = vector.load %arg22[%c0_241, %c0_242] : memref<32x32xf32, #tpu.memory_space<vmem>>, vector<32x32xf32>
    %cst_243 = arith.constant dense<0.000000e+00> : vector<8x32xf32>
    %360 = tpu.matmul %16, %359, %cst_243 {dimension_numbers = #tpu.dot_dimension_numbers<[1], [0], [0], [1], [0, 0, 1, 1], [], []>} : vector<8x32xf32>, vector<32x32xf32>, vector<8x32xf32> -> vector<8x32xf32>
    %361 = arith.addf %358, %360 : vector<8x32xf32>
    %c0_244 = arith.constant 0 : index
    %c0_245 = arith.constant 0 : index
    %362 = vector.load %arg23[%c0_244, %c0_245] : memref<1x32xf32, #tpu.memory_space<vmem>>, vector<1x32xf32>
    %363 = vector.broadcast %362 : vector<1x32xf32> to vector<8x32xf32>
    %364 = arith.mulf %361, %363 : vector<8x32xf32>
    %c0_246 = arith.constant 0 : index
    %c0_247 = arith.constant 0 : index
    %365 = vector.load %arg24[%c0_246, %c0_247] : memref<1x32xf32, #tpu.memory_space<vmem>>, vector<1x32xf32>
    %366 = vector.broadcast %365 : vector<1x32xf32> to vector<8x32xf32>
    %367 = arith.addf %364, %366 : vector<8x32xf32>
    %cst_248 = arith.constant 0.000000e+00 : f32
    %368 = vector.broadcast %cst_248 : f32 to vector<8x32xf32>
    %369 = arith.maximumf %367, %368 : vector<8x32xf32>
    %c0_249 = arith.constant 0 : index
    %c0_250 = arith.constant 0 : index
    %370 = vector.load %arg25[%c0_249, %c0_250] : memref<32x128xf32, #tpu.memory_space<vmem>>, vector<32x128xf32>
    %cst_251 = arith.constant dense<0.000000e+00> : vector<8x128xf32>
    %371 = tpu.matmul %369, %370, %cst_251 {dimension_numbers = #tpu.dot_dimension_numbers<[1], [0], [0], [1], [0, 0, 1, 1], [], []>} : vector<8x32xf32>, vector<32x128xf32>, vector<8x128xf32> -> vector<8x128xf32>
    %c0_252 = arith.constant 0 : index
    %c0_253 = arith.constant 0 : index
    %372 = vector.load %arg26[%c0_252, %c0_253] : memref<1x128xf32, #tpu.memory_space<vmem>>, vector<1x128xf32>
    %373 = vector.broadcast %372 : vector<1x128xf32> to vector<8x128xf32>
    %374 = arith.mulf %371, %373 : vector<8x128xf32>
    %c0_254 = arith.constant 0 : index
    %c0_255 = arith.constant 0 : index
    %375 = vector.load %arg27[%c0_254, %c0_255] : memref<1x128xf32, #tpu.memory_space<vmem>>, vector<1x128xf32>
    %376 = vector.broadcast %375 : vector<1x128xf32> to vector<8x128xf32>
    %377 = arith.addf %374, %376 : vector<8x128xf32>
    %c0_256 = arith.constant 0 : index
    %c0_257 = arith.constant 0 : index
    %378 = vector.load %arg28[%c0_256, %c0_257] : memref<1x128xf32, #tpu.memory_space<vmem>>, vector<1x128xf32>
    %379 = vector.broadcast %378 : vector<1x128xf32> to vector<8x128xf32>
    %380 = arith.mulf %377, %379 : vector<8x128xf32>
    %c0_258 = arith.constant 0 : index
    %c0_259 = arith.constant 0 : index
    %381 = vector.load %arg29[%c0_258, %c0_259] : memref<1x128xf32, #tpu.memory_space<vmem>>, vector<1x128xf32>
    %382 = vector.broadcast %381 : vector<1x128xf32> to vector<8x128xf32>
    %383 = arith.addf %380, %382 : vector<8x128xf32>
    %cst_260 = arith.constant 0.000000e+00 : f32
    %384 = vector.broadcast %cst_260 : f32 to vector<8x128xf32>
    %385 = arith.maximumf %383, %384 : vector<8x128xf32>
    %c0_261 = arith.constant 0 : index
    %c0_262 = arith.constant 0 : index
    %c0_263 = arith.constant 0 : index
    %386 = vector.load %arg31[%c0_261, %c0_262, %c0_263] : memref<1x8x128xf32, #tpu.memory_space<vmem>>, vector<1x8x128xf32>
    %387 = vector.shape_cast %386 : vector<1x8x128xf32> to vector<8x128xf32>
    %388 = vector.shape_cast %385 : vector<8x128xf32> to vector<1x8x128xf32>
    tpu.vector_store %arg31[%c0_261, %c0_262, %c0_263], %388 {strides = array<i32>} : memref<1x8x128xf32, #tpu.memory_space<vmem>>, vector<1x8x128xf32>,
    %c0_264 = arith.constant 0 : index
    %c0_265 = arith.constant 0 : index
    %c0_266 = arith.constant 0 : index
    %389 = vector.load %arg3[%c0_264, %c0_265, %c0_266] : memref<1x8x128xf32, #tpu.memory_space<vmem>>, vector<1x8x128xf32>
    %390 = vector.shape_cast %389 : vector<1x8x128xf32> to vector<8x128xf32>
    %391 = arith.mulf %385, %390 : vector<8x128xf32>
    %c0_267 = arith.constant 0 : index
    %c0_268 = arith.constant 0 : index
    %c0_269 = arith.constant 0 : index
    %392 = vector.load %arg30[%c0_267, %c0_268, %c0_269] : memref<1x8x128xf32, #tpu.memory_space<vmem>>, vector<1x8x128xf32>
    %393 = vector.shape_cast %392 : vector<1x8x128xf32> to vector<8x128xf32>
    %394 = vector.shape_cast %391 : vector<8x128xf32> to vector<1x8x128xf32>
    tpu.vector_store %arg30[%c0_267, %c0_268, %c0_269], %394 {strides = array<i32>} : memref<1x8x128xf32, #tpu.memory_space<vmem>>, vector<1x8x128xf32>,
    return
  }
  func.func @transform_0(%arg0: i32) -> (i32, i32) {
    %c0_i32 = arith.constant 0 : i32
    %c0_i32_0 = arith.constant 0 : i32
    %c0_i32_1 = arith.constant 0 : i32
    return %c0_i32, %c0_i32_0 : i32, i32
  }
  func.func @transform_1(%arg0: i32) -> (i32, i32, i32) {
    %c0_i32 = arith.constant 0 : i32
    %c0_i32_0 = arith.constant 0 : i32
    %c0_i32_1 = arith.constant 0 : i32
    return %arg0, %c0_i32, %c0_i32_0 : i32, i32, i32
  }
  func.func @transform_2(%arg0: i32) -> (i32, i32, i32) {
    %c0_i32 = arith.constant 0 : i32
    %c0_i32_0 = arith.constant 0 : i32
    %c0_i32_1 = arith.constant 0 : i32
    return %arg0, %c0_i32, %c0_i32_0 : i32, i32, i32
  }
  func.func @transform_3(%arg0: i32) -> (i32, i32) {
    %c0_i32 = arith.constant 0 : i32
    %c0_i32_0 = arith.constant 0 : i32
    %c0_i32_1 = arith.constant 0 : i32
    return %c0_i32, %c0_i32_0 : i32, i32
  }
  func.func @transform_4(%arg0: i32) -> (i32, i32) {
    %c0_i32 = arith.constant 0 : i32
    %c0_i32_0 = arith.constant 0 : i32
    %c0_i32_1 = arith.constant 0 : i32
    return %c0_i32, %c0_i32_0 : i32, i32
  }
  func.func @transform_5(%arg0: i32) -> (i32, i32) {
    %c0_i32 = arith.constant 0 : i32
    %c0_i32_0 = arith.constant 0 : i32
    %c0_i32_1 = arith.constant 0 : i32
    return %c0_i32, %c0_i32_0 : i32, i32
  }
  func.func @transform_6(%arg0: i32) -> (i32, i32) {
    %c0_i32 = arith.constant 0 : i32
    %c0_i32_0 = arith.constant 0 : i32
    %c0_i32_1 = arith.constant 0 : i32
    return %c0_i32, %c0_i32_0 : i32, i32
  }
  func.func @transform_7(%arg0: i32) -> (i32, i32) {
    %c0_i32 = arith.constant 0 : i32
    %c0_i32_0 = arith.constant 0 : i32
    %c0_i32_1 = arith.constant 0 : i32
    return %c0_i32, %c0_i32_0 : i32, i32
  }
  func.func @transform_8(%arg0: i32) -> (i32, i32, i32, i32) {
    %c0_i32 = arith.constant 0 : i32
    %c0_i32_0 = arith.constant 0 : i32
    %c0_i32_1 = arith.constant 0 : i32
    %c0_i32_2 = arith.constant 0 : i32
    %c0_i32_3 = arith.constant 0 : i32
    return %c0_i32, %c0_i32_0, %c0_i32_1, %c0_i32_2 : i32, i32, i32, i32
  }
  func.func @transform_9(%arg0: i32) -> (i32, i32, i32, i32) {
    %c0_i32 = arith.constant 0 : i32
    %c0_i32_0 = arith.constant 0 : i32
    %c0_i32_1 = arith.constant 0 : i32
    %c0_i32_2 = arith.constant 0 : i32
    %c0_i32_3 = arith.constant 0 : i32
    return %c0_i32, %c0_i32_0, %c0_i32_1, %c0_i32_2 : i32, i32, i32, i32
  }
  func.func @transform_10(%arg0: i32) -> (i32, i32, i32) {
    %c0_i32 = arith.constant 0 : i32
    %c0_i32_0 = arith.constant 0 : i32
    %c0_i32_1 = arith.constant 0 : i32
    %c0_i32_2 = arith.constant 0 : i32
    return %c0_i32, %c0_i32_0, %c0_i32_1 : i32, i32, i32
  }
  func.func @transform_11(%arg0: i32) -> (i32, i32, i32) {
    %c0_i32 = arith.constant 0 : i32
    %c0_i32_0 = arith.constant 0 : i32
    %c0_i32_1 = arith.constant 0 : i32
    %c0_i32_2 = arith.constant 0 : i32
    return %c0_i32, %c0_i32_0, %c0_i32_1 : i32, i32, i32
  }
  func.func @transform_12(%arg0: i32) -> (i32, i32, i32) {
    %c0_i32 = arith.constant 0 : i32
    %c0_i32_0 = arith.constant 0 : i32
    %c0_i32_1 = arith.constant 0 : i32
    %c0_i32_2 = arith.constant 0 : i32
    return %c0_i32, %c0_i32_0, %c0_i32_1 : i32, i32, i32
  }
  func.func @transform_13(%arg0: i32) -> (i32, i32, i32) {
    %c0_i32 = arith.constant 0 : i32
    %c0_i32_0 = arith.constant 0 : i32
    %c0_i32_1 = arith.constant 0 : i32
    %c0_i32_2 = arith.constant 0 : i32
    return %c0_i32, %c0_i32_0, %c0_i32_1 : i32, i32, i32
  }
  func.func @transform_14(%arg0: i32) -> (i32, i32, i32) {
    %c0_i32 = arith.constant 0 : i32
    %c0_i32_0 = arith.constant 0 : i32
    %c0_i32_1 = arith.constant 0 : i32
    %c0_i32_2 = arith.constant 0 : i32
    return %c0_i32, %c0_i32_0, %c0_i32_1 : i32, i32, i32
  }
  func.func @transform_15(%arg0: i32) -> (i32, i32, i32) {
    %c0_i32 = arith.constant 0 : i32
    %c0_i32_0 = arith.constant 0 : i32
    %c0_i32_1 = arith.constant 0 : i32
    %c0_i32_2 = arith.constant 0 : i32
    return %c0_i32, %c0_i32_0, %c0_i32_1 : i32, i32, i32
  }
  func.func @transform_16(%arg0: i32) -> (i32, i32, i32) {
    %c0_i32 = arith.constant 0 : i32
    %c0_i32_0 = arith.constant 0 : i32
    %c0_i32_1 = arith.constant 0 : i32
    %c0_i32_2 = arith.constant 0 : i32
    return %c0_i32, %c0_i32_0, %c0_i32_1 : i32, i32, i32
  }
  func.func @transform_17(%arg0: i32) -> (i32, i32, i32) {
    %c0_i32 = arith.constant 0 : i32
    %c0_i32_0 = arith.constant 0 : i32
    %c0_i32_1 = arith.constant 0 : i32
    %c0_i32_2 = arith.constant 0 : i32
    return %c0_i32, %c0_i32_0, %c0_i32_1 : i32, i32, i32
  }
  func.func @transform_18(%arg0: i32) -> (i32, i32, i32) {
    %c0_i32 = arith.constant 0 : i32
    %c0_i32_0 = arith.constant 0 : i32
    %c0_i32_1 = arith.constant 0 : i32
    %c0_i32_2 = arith.constant 0 : i32
    return %c0_i32, %c0_i32_0, %c0_i32_1 : i32, i32, i32
  }
  func.func @transform_19(%arg0: i32) -> (i32, i32, i32) {
    %c0_i32 = arith.constant 0 : i32
    %c0_i32_0 = arith.constant 0 : i32
    %c0_i32_1 = arith.constant 0 : i32
    %c0_i32_2 = arith.constant 0 : i32
    return %c0_i32, %c0_i32_0, %c0_i32_1 : i32, i32, i32
  }
  func.func @transform_20(%arg0: i32) -> (i32, i32) {
    %c0_i32 = arith.constant 0 : i32
    %c0_i32_0 = arith.constant 0 : i32
    %c0_i32_1 = arith.constant 0 : i32
    return %c0_i32, %c0_i32_0 : i32, i32
  }
  func.func @transform_21(%arg0: i32) -> (i32, i32) {
    %c0_i32 = arith.constant 0 : i32
    %c0_i32_0 = arith.constant 0 : i32
    %c0_i32_1 = arith.constant 0 : i32
    return %c0_i32, %c0_i32_0 : i32, i32
  }
  func.func @transform_22(%arg0: i32) -> (i32, i32) {
    %c0_i32 = arith.constant 0 : i32
    %c0_i32_0 = arith.constant 0 : i32
    %c0_i32_1 = arith.constant 0 : i32
    return %c0_i32, %c0_i32_0 : i32, i32
  }
  func.func @transform_23(%arg0: i32) -> (i32, i32) {
    %c0_i32 = arith.constant 0 : i32
    %c0_i32_0 = arith.constant 0 : i32
    %c0_i32_1 = arith.constant 0 : i32
    return %c0_i32, %c0_i32_0 : i32, i32
  }
  func.func @transform_24(%arg0: i32) -> (i32, i32) {
    %c0_i32 = arith.constant 0 : i32
    %c0_i32_0 = arith.constant 0 : i32
    %c0_i32_1 = arith.constant 0 : i32
    return %c0_i32, %c0_i32_0 : i32, i32
  }
  func.func @transform_25(%arg0: i32) -> (i32, i32) {
    %c0_i32 = arith.constant 0 : i32
    %c0_i32_0 = arith.constant 0 : i32
    %c0_i32_1 = arith.constant 0 : i32
    return %c0_i32, %c0_i32_0 : i32, i32
  }
  func.func @transform_26(%arg0: i32) -> (i32, i32) {
    %c0_i32 = arith.constant 0 : i32
    %c0_i32_0 = arith.constant 0 : i32
    %c0_i32_1 = arith.constant 0 : i32
    return %c0_i32, %c0_i32_0 : i32, i32
  }
  func.func @transform_27(%arg0: i32) -> (i32, i32) {
    %c0_i32 = arith.constant 0 : i32
    %c0_i32_0 = arith.constant 0 : i32
    %c0_i32_1 = arith.constant 0 : i32
    return %c0_i32, %c0_i32_0 : i32, i32
  }
  func.func @transform_28(%arg0: i32) -> (i32, i32) {
    %c0_i32 = arith.constant 0 : i32
    %c0_i32_0 = arith.constant 0 : i32
    %c0_i32_1 = arith.constant 0 : i32
    return %c0_i32, %c0_i32_0 : i32, i32
  }
  func.func @transform_29(%arg0: i32) -> (i32, i32, i32) {
    %c0_i32 = arith.constant 0 : i32
    %c0_i32_0 = arith.constant 0 : i32
    %c0_i32_1 = arith.constant 0 : i32
    return %arg0, %c0_i32, %c0_i32_0 : i32, i32, i32
  }
  func.func @transform_30(%arg0: i32) -> (i32, i32, i32) {
    %c0_i32 = arith.constant 0 : i32
    %c0_i32_0 = arith.constant 0 : i32
    %c0_i32_1 = arith.constant 0 : i32
    return %arg0, %c0_i32, %c0_i32_0 : i32, i32, i32
  }
}

</mosaic_0001>

<llo_original>
// kernel: _lambda_.1
$region0: #{_lambda_.1}
  #allocation0 [shape = 'u32[]', space=smem, size = 0x4, offset = 0x4, fixed_abs, tag = 'smem constant byte address 0x4 - core index']
  #allocation1 [shape = 'u32[144,128]{1,0:T(1,128)}', space=vmem, size = 0x12000, scoped, tag = 'internal scratch']
  #allocation2 [shape = 'f32[1,1]{1,0:T(1,128)S(6)}', space=smem, size = 0x200, scoped, tag = 'scoped memory for _lambda_.1']
  %s0 = inlined_call_operand.smem [shape: u32[31], index: -1, kind: input, shape index: {}]
  %s1 = sld [smem:[%s0]]
  %s2 = scalar_lea.smem %s0, 1
  %s3 = sld [smem:[%s2]]
  %s4 = scalar_lea.smem %s0, 2
  %s5 = sld [smem:[%s4]]
  %s6 = scalar_lea.smem %s0, 3
  %s7 = sld [smem:[%s6]]
  %s8 = scalar_lea.smem %s0, 4
  %s9 = sld [smem:[%s8]]
  %s10 = scalar_lea.smem %s0, 5
  %s11 = sld [smem:[%s10]]
  %s12 = scalar_lea.smem %s0, 6
  %s13 = sld [smem:[%s12]]
  %s14 = scalar_lea.smem %s0, 7
  %s15 = sld [smem:[%s14]]
  %s16 = scalar_lea.smem %s0, 8
  %s17 = sld [smem:[%s16]]
  %s18 = scalar_lea.smem %s0, 9
  %s19 = sld [smem:[%s18]]
  %s20 = scalar_lea.smem %s0, 10
  %s21 = sld [smem:[%s20]]
  %s22 = scalar_lea.smem %s0, 11
  %s23 = sld [smem:[%s22]]
  %s24 = scalar_lea.smem %s0, 12
  %s25 = sld [smem:[%s24]]
  %s26 = scalar_lea.smem %s0, 13
  %s27 = sld [smem:[%s26]]
  %s28 = scalar_lea.smem %s0, 14
  %s29 = sld [smem:[%s28]]
  %s30 = scalar_lea.smem %s0, 15
  %s31 = sld [smem:[%s30]]
  %s32 = scalar_lea.smem %s0, 16
  %s33 = sld [smem:[%s32]]
  %s34 = scalar_lea.smem %s0, 17
  %s35 = sld [smem:[%s34]]
  %s36 = scalar_lea.smem %s0, 18
  %s37 = sld [smem:[%s36]]
  %s38 = scalar_lea.smem %s0, 19
  %s39 = sld [smem:[%s38]]
  %s40 = scalar_lea.smem %s0, 20
  %s41 = sld [smem:[%s40]]
  %s42 = scalar_lea.smem %s0, 21
  %s43 = sld [smem:[%s42]]
  %s44 = scalar_lea.smem %s0, 22
  %s45 = sld [smem:[%s44]]
  %s46 = scalar_lea.smem %s0, 23
  %s47 = sld [smem:[%s46]]
  %s48 = scalar_lea.smem %s0, 24
  %s49 = sld [smem:[%s48]]
  %s50 = scalar_lea.smem %s0, 25
  %s51 = sld [smem:[%s50]]
  %s52 = scalar_lea.smem %s0, 26
  %s53 = sld [smem:[%s52]]
  %s54 = scalar_lea.smem %s0, 27
  %s55 = sld [smem:[%s54]]
  %s56 = scalar_lea.smem %s0, 28
  %s57 = sld [smem:[%s56]]
  %s58 = scalar_lea.smem %s0, 29
  %s59 = sld [smem:[%s58]]
  %s60 = scalar_lea.smem %s0, 30
  %s61 = sld [smem:[%s60]]
  %62 = xla_tuple %s59, %s61
  %s63 = sld [smem:[#allocation0]]
  $region193: #{_lambda_.1} parent=0
    _
  %s65 = ssub.s32 1, %s63
  %s66 = scalar_select 0, %s65, %s63
  %67 = sst [smem:[#allocation2]] %s1
  $region1: #{_lambda_.1} parent=0
    #allocation3 [shape = 'u8[32768]{0}', space=vmem, size = 0x8000, scoped, tag = 'input window, operand 5, single buffered']
    #allocation4 [shape = 's32[2]{0}', space=sflag, size = 0x8, scoped, tag = 'scoped memory for _lambda_.1']
    #allocation5 [shape = 'u8[512]{0}', space=vmem, size = 0x400, scoped, tag = 'input window, operand 6, single buffered']
    #allocation6 [shape = 's32[1]{0}', space=sflag, size = 0x4, scoped, tag = 'scoped memory for _lambda_.1']
    #allocation7 [shape = 'u8[512]{0}', space=vmem, size = 0x400, scoped, tag = 'input window, operand 7, single buffered']
    #allocation8 [shape = 'u8[147456]{0}', space=vmem, size = 0x24000, scoped, tag = 'input window, operand 8, single buffered']
    #allocation9 [shape = 's32[1]{0}', space=sflag, size = 0x4, scoped, tag = 'scoped memory for _lambda_.1']
    #allocation10 [shape = 'u8[4608]{0}', space=vmem, size = 0x1400, scoped, tag = 'input window, operand 9, single buffered']
    #allocation11 [shape = 'u8[1536]{0}', space=vmem, size = 0x800, scoped, tag = 'input window, operand 11, single buffered']
    #allocation12 [shape = 's32[1]{0}', space=sflag, size = 0x4, scoped, tag = 'scoped memory for _lambda_.1']
    #allocation13 [shape = 'u8[1536]{0}', space=vmem, size = 0x800, scoped, tag = 'input window, operand 15, single buffered']
    #allocation14 [shape = 'u8[12288]{0}', space=vmem, size = 0x3000, scoped, tag = 'input window, operand 16, single buffered']
    #allocation15 [shape = 's32[1]{0}', space=sflag, size = 0x4, scoped, tag = 'scoped memory for _lambda_.1']
    #allocation16 [shape = 'u8[16384]{0}', space=vmem, size = 0x4000, scoped, tag = 'input window, operand 20, single buffered']
    %68 = vsyncpa [#allocation4], 0
    %69 = vsyncpa [#allocation6], 0
    %70 = vsyncpa [#allocation9], 0
    %71 = vsyncpa [#allocation12], 0
    %72 = vsyncpa [#allocation15], 0
    loop: start=0, step=1, limit=4
    $region2: #{_lambda_.1} parent=1 // loop_pre_header
      _
    $region3: #{_lambda_.1} parent=1 // loop_header
      %s74 = sphi 0, %s78
      %p75 = scmp.ge.s32.totalorder %s74, 4
      %s82 = sphi 0, %s82
      %s84 = sphi 0, %s82
      %s85 = sphi 0, %s84
      %s99 = sphi 0, %s85
      %s105 = sphi 0, %s107
      %s108 = sphi 0, %s105
      %s109 = sphi 0, %s108
      %s125 = sphi 0, %s109
      %s131 = sphi 0, %s133
      %s134 = sphi 0, %s131
      %s135 = sphi 0, %s134
      %s151 = sphi 0, %s135
      %s155 = sphi 0, %s155
      %s157 = sphi 0, %s155
      %s158 = sphi 0, %s157
      %s172 = sphi 0, %s158
      %s176 = sphi 0, %s176
      %s178 = sphi 0, %s176
      %s179 = sphi 0, %s178
      %s193 = sphi 0, %s179
      %s197 = sphi 0, %s197
      %s199 = sphi 0, %s197
      %s200 = sphi 0, %s199
      %s214 = sphi 0, %s200
      %s218 = sphi 0, %s218
      %s220 = sphi 0, %s218
      %s221 = sphi 0, %s220
      %s235 = sphi 0, %s221
      %s239 = sphi 0, %s239
      %s241 = sphi 0, %s239
      %s242 = sphi 0, %s241
      %s256 = sphi 0, %s242
      %s260 = sphi 0, %s260
      %s262 = sphi 0, %s260
      %s263 = sphi 0, %s262
      %s277 = sphi 0, %s263
      %s281 = sphi 0, %s281
      %s283 = sphi 0, %s281
      %s284 = sphi 0, %s283
      %s298 = sphi 0, %s284
      %s302 = sphi 0, %s302
      %s304 = sphi 0, %s302
      %s305 = sphi 0, %s304
      %s319 = sphi 0, %s305
      %s323 = sphi 0, %s323
      %s325 = sphi 0, %s323
      %s326 = sphi 0, %s325
      %s340 = sphi 0, %s326
      %s344 = sphi 0, %s344
      %s346 = sphi 0, %s344
      %s347 = sphi 0, %s346
      %s361 = sphi 0, %s347
      %s365 = sphi 0, %s365
      %s367 = sphi 0, %s365
      %s368 = sphi 0, %s367
      %s382 = sphi 0, %s368
      %s386 = sphi 0, %s386
      %s388 = sphi 0, %s386
      %s389 = sphi 0, %s388
      %s403 = sphi 0, %s389
      %s407 = sphi 0, %s407
      %s409 = sphi 0, %s407
      %s410 = sphi 0, %s409
      %s424 = sphi 0, %s410
      %s428 = sphi 0, %s428
      %s430 = sphi 0, %s428
      %s431 = sphi 0, %s430
      %s445 = sphi 0, %s431
      %s449 = sphi 0, %s449
      %s451 = sphi 0, %s449
      %s452 = sphi 0, %s451
      %s466 = sphi 0, %s452
      %s470 = sphi 0, %s470
      %s472 = sphi 0, %s470
      %s473 = sphi 0, %s472
      %s487 = sphi 0, %s473
      %s491 = sphi 0, %s491
      %s493 = sphi 0, %s491
      %s494 = sphi 0, %s493
      %s508 = sphi 0, %s494
      %s512 = sphi 0, %s512
      %s514 = sphi 0, %s512
      %s515 = sphi 0, %s514
      %s529 = sphi 0, %s515
      %s533 = sphi 0, %s533
      %s535 = sphi 0, %s533
      %s536 = sphi 0, %s535
      %s550 = sphi 0, %s536
      %s554 = sphi 0, %s554
      %s556 = sphi 0, %s554
      %s557 = sphi 0, %s556
      %s571 = sphi 0, %s557
      %s575 = sphi 0, %s575
      %s577 = sphi 0, %s575
      %s578 = sphi 0, %s577
      %s592 = sphi 0, %s578
      %s596 = sphi 0, %s596
      %s598 = sphi 0, %s596
      %s599 = sphi 0, %s598
      %s613 = sphi 0, %s599
      %s617 = sphi 0, %s617
      %s619 = sphi 0, %s617
      %s620 = sphi 0, %s619
      %s634 = sphi 0, %s620
      %s638 = sphi 0, %s638
      %s640 = sphi 0, %s638
      %s641 = sphi 0, %s640
      %s655 = sphi 0, %s641
      %s659 = sphi 0, %s659
      %s661 = sphi 0, %s659
      %s662 = sphi 0, %s661
      %s676 = sphi 0, %s662
      %s680 = sphi 0, %s680
      %s682 = sphi 0, %s680
      %s683 = sphi 0, %s682
      %s697 = sphi 0, %s683
      %s703 = sphi 0, %s705
      %s706 = sphi 0, %s703
      %s707 = sphi 0, %s706
      %s723 = sphi 0, %s707
      %s729 = sphi 0, %s731
      %s732 = sphi 0, %s729
      %s733 = sphi 0, %s732
      %s749 = sphi 0, %s733
    $region4: #{_lambda_.1} parent=1 // loop_header_branch
      %77 = sbr.rel (%p75) target = $region8
    $region5: #{_lambda_.1} parent=1 // loop_body
      %s79 = ssub.s32 %s74, 1
      %s80 = ssub.s32 %s74, 2
      %s81 = sadd.s32 %s74, 1
      %s83 = sadd.s32 %s82, 1
      %p86 = scmp.eq.s32.totalorder %s74, 1
      %p87 = scmp.ne.s32.totalorder %s82, %s84
      %p88 = scmp.eq.s32.totalorder %s74, 0
      %p89 = por %p87, %p88
      %p90 = scmp.ne.s32.totalorder %s82, %s84
      %p91 = scmp.eq.s32.totalorder %s79, 1
      %p92 = por %p90, %p91
      %p93 = scmp.ne.s32.totalorder %s84, %s85
      %p94 = scmp.eq.s32.totalorder %s79, 0
      %p95 = por %p93, %p94
      %p96 = scmp.ne.s32.totalorder %s84, %s85
      %p97 = scmp.eq.s32.totalorder %s80, 1
      %p98 = por %p96, %p97
      %p100 = scmp.ne.s32.totalorder %s85, %s99
      %p101 = scmp.eq.s32.totalorder %s80, 0
      %p102 = por %p100, %p101
      %s103 = ssub.s32 %s74, %s81
      %p104 = scmp.eq.s32.totalorder %s103, 0
      %s106 = sadd.s32 %s105, 1
      %s107 = scalar_select %p104, %s105, %s106
      %p110 = pneg %p104
      %p111 = scmp.eq.s32.totalorder %s74, 1
      %p112 = por %p110, %p111
      %p113 = scmp.ne.s32.totalorder %s105, %s108
      %p114 = scmp.eq.s32.totalorder %s74, 0
      %p115 = por %p113, %p114
      %p116 = scmp.ne.s32.totalorder %s105, %s108
      %p117 = scmp.eq.s32.totalorder %s79, 1
      %p118 = por %p116, %p117
      %p119 = scmp.ne.s32.totalorder %s108, %s109
      %p120 = scmp.eq.s32.totalorder %s79, 0
      %p121 = por %p119, %p120
      %p122 = scmp.ne.s32.totalorder %s108, %s109
      %p123 = scmp.eq.s32.totalorder %s80, 1
      %p124 = por %p122, %p123
      %p126 = scmp.ne.s32.totalorder %s109, %s125
      %p127 = scmp.eq.s32.totalorder %s80, 0
      %p128 = por %p126, %p127
      %s129 = ssub.s32 %s74, %s81
      %p130 = scmp.eq.s32.totalorder %s129, 0
      %s132 = sadd.s32 %s131, 1
      %s133 = scalar_select %p130, %s131, %s132
      %p136 = pneg %p130
      %p137 = scmp.eq.s32.totalorder %s74, 1
      %p138 = por %p136, %p137
      %p139 = scmp.ne.s32.totalorder %s131, %s134
      %p140 = scmp.eq.s32.totalorder %s74, 0
      %p141 = por %p139, %p140
      %p142 = scmp.ne.s32.totalorder %s131, %s134
      %p143 = scmp.eq.s32.totalorder %s79, 1
      %p144 = por %p142, %p143
      %p145 = scmp.ne.s32.totalorder %s134, %s135
      %p146 = scmp.eq.s32.totalorder %s79, 0
      %p147 = por %p145, %p146
      %p148 = scmp.ne.s32.totalorder %s134, %s135
      %p149 = scmp.eq.s32.totalorder %s80, 1
      %p150 = por %p148, %p149
      %p152 = scmp.ne.s32.totalorder %s135, %s151
      %p153 = scmp.eq.s32.totalorder %s80, 0
      %p154 = por %p152, %p153
      %s156 = sadd.s32 %s155, 1
      %p159 = scmp.eq.s32.totalorder %s74, 1
      %p160 = scmp.ne.s32.totalorder %s155, %s157
      %p161 = scmp.eq.s32.totalorder %s74, 0
      %p162 = por %p160, %p161
      %p163 = scmp.ne.s32.totalorder %s155, %s157
      %p164 = scmp.eq.s32.totalorder %s79, 1
      %p165 = por %p163, %p164
      %p166 = scmp.ne.s32.totalorder %s157, %s158
      %p167 = scmp.eq.s32.totalorder %s79, 0
      %p168 = por %p166, %p167
      %p169 = scmp.ne.s32.totalorder %s157, %s158
      %p170 = scmp.eq.s32.totalorder %s80, 1
      %p171 = por %p169, %p170
      %p173 = scmp.ne.s32.totalorder %s158, %s172
      %p174 = scmp.eq.s32.totalorder %s80, 0
      %p175 = por %p173, %p174
      %s177 = sadd.s32 %s176, 1
      %p180 = scmp.eq.s32.totalorder %s74, 1
      %p181 = scmp.ne.s32.totalorder %s176, %s178
      %p182 = scmp.eq.s32.totalorder %s74, 0
      %p183 = por %p181, %p182
      %p184 = scmp.ne.s32.totalorder %s176, %s178
      %p185 = scmp.eq.s32.totalorder %s79, 1
      %p186 = por %p184, %p185
      %p187 = scmp.ne.s32.totalorder %s178, %s179
      %p188 = scmp.eq.s32.totalorder %s79, 0
      %p189 = por %p187, %p188
      %p190 = scmp.ne.s32.totalorder %s178, %s179
      %p191 = scmp.eq.s32.totalorder %s80, 1
      %p192 = por %p190, %p191
      %p194 = scmp.ne.s32.totalorder %s179, %s193
      %p195 = scmp.eq.s32.totalorder %s80, 0
      %p196 = por %p194, %p195
      %s198 = sadd.s32 %s197, 1
      %p201 = scmp.eq.s32.totalorder %s74, 1
      %p202 = scmp.ne.s32.totalorder %s197, %s199
      %p203 = scmp.eq.s32.totalorder %s74, 0
      %p204 = por %p202, %p203
      %p205 = scmp.ne.s32.totalorder %s197, %s199
      %p206 = scmp.eq.s32.totalorder %s79, 1
      %p207 = por %p205, %p206
      %p208 = scmp.ne.s32.totalorder %s199, %s200
      %p209 = scmp.eq.s32.totalorder %s79, 0
      %p210 = por %p208, %p209
      %p211 = scmp.ne.s32.totalorder %s199, %s200
      %p212 = scmp.eq.s32.totalorder %s80, 1
      %p213 = por %p211, %p212
      %p215 = scmp.ne.s32.totalorder %s200, %s214
      %p216 = scmp.eq.s32.totalorder %s80, 0
      %p217 = por %p215, %p216
      %s219 = sadd.s32 %s218, 1
      %p222 = scmp.eq.s32.totalorder %s74, 1
      %p223 = scmp.ne.s32.totalorder %s218, %s220
      %p224 = scmp.eq.s32.totalorder %s74, 0
      %p225 = por %p223, %p224
      %p226 = scmp.ne.s32.totalorder %s218, %s220
      %p227 = scmp.eq.s32.totalorder %s79, 1
      %p228 = por %p226, %p227
      %p229 = scmp.ne.s32.totalorder %s220, %s221
      %p230 = scmp.eq.s32.totalorder %s79, 0
      %p231 = por %p229, %p230
      %p232 = scmp.ne.s32.totalorder %s220, %s221
      %p233 = scmp.eq.s32.totalorder %s80, 1
      %p234 = por %p232, %p233
      %p236 = scmp.ne.s32.totalorder %s221, %s235
      %p237 = scmp.eq.s32.totalorder %s80, 0
      %p238 = por %p236, %p237
      %s240 = sadd.s32 %s239, 1
      %p243 = scmp.eq.s32.totalorder %s74, 1
      %p244 = scmp.ne.s32.totalorder %s239, %s241
      %p245 = scmp.eq.s32.totalorder %s74, 0
      %p246 = por %p244, %p245
      %p247 = scmp.ne.s32.totalorder %s239, %s241
      %p248 = scmp.eq.s32.totalorder %s79, 1
      %p249 = por %p247, %p248
      %p250 = scmp.ne.s32.totalorder %s241, %s242
      %p251 = scmp.eq.s32.totalorder %s79, 0
      %p252 = por %p250, %p251
      %p253 = scmp.ne.s32.totalorder %s241, %s242
      %p254 = scmp.eq.s32.totalorder %s80, 1
      %p255 = por %p253, %p254
      %p257 = scmp.ne.s32.totalorder %s242, %s256
      %p258 = scmp.eq.s32.totalorder %s80, 0
      %p259 = por %p257, %p258
      %s261 = sadd.s32 %s260, 1
      %p264 = scmp.eq.s32.totalorder %s74, 1
      %p265 = scmp.ne.s32.totalorder %s260, %s262
      %p266 = scmp.eq.s32.totalorder %s74, 0
      %p267 = por %p265, %p266
      %p268 = scmp.ne.s32.totalorder %s260, %s262
      %p269 = scmp.eq.s32.totalorder %s79, 1
      %p270 = por %p268, %p269
      %p271 = scmp.ne.s32.totalorder %s262, %s263
      %p272 = scmp.eq.s32.totalorder %s79, 0
      %p273 = por %p271, %p272
      %p274 = scmp.ne.s32.totalorder %s262, %s263
      %p275 = scmp.eq.s32.totalorder %s80, 1
      %p276 = por %p274, %p275
      %p278 = scmp.ne.s32.totalorder %s263, %s277
      %p279 = scmp.eq.s32.totalorder %s80, 0
      %p280 = por %p278, %p279
      %s282 = sadd.s32 %s281, 1
      %p285 = scmp.eq.s32.totalorder %s74, 1
      %p286 = scmp.ne.s32.totalorder %s281, %s283
      %p287 = scmp.eq.s32.totalorder %s74, 0
      %p288 = por %p286, %p287
      %p289 = scmp.ne.s32.totalorder %s281, %s283
      %p290 = scmp.eq.s32.totalorder %s79, 1
      %p291 = por %p289, %p290
      %p292 = scmp.ne.s32.totalorder %s283, %s284
      %p293 = scmp.eq.s32.totalorder %s79, 0
      %p294 = por %p292, %p293
      %p295 = scmp.ne.s32.totalorder %s283, %s284
      %p296 = scmp.eq.s32.totalorder %s80, 1
      %p297 = por %p295, %p296
      %p299 = scmp.ne.s32.totalorder %s284, %s298
      %p300 = scmp.eq.s32.totalorder %s80, 0
      %p301 = por %p299, %p300
      %s303 = sadd.s32 %s302, 1
      %p306 = scmp.eq.s32.totalorder %s74, 1
      %p307 = scmp.ne.s32.totalorder %s302, %s304
      %p308 = scmp.eq.s32.totalorder %s74, 0
      %p309 = por %p307, %p308
      %p310 = scmp.ne.s32.totalorder %s302, %s304
      %p311 = scmp.eq.s32.totalorder %s79, 1
      %p312 = por %p310, %p311
      %p313 = scmp.ne.s32.totalorder %s304, %s305
      %p314 = scmp.eq.s32.totalorder %s79, 0
      %p315 = por %p313, %p314
      %p316 = scmp.ne.s32.totalorder %s304, %s305
      %p317 = scmp.eq.s32.totalorder %s80, 1
      %p318 = por %p316, %p317
      %p320 = scmp.ne.s32.totalorder %s305, %s319
      %p321 = scmp.eq.s32.totalorder %s80, 0
      %p322 = por %p320, %p321
      %s324 = sadd.s32 %s323, 1
      %p327 = scmp.eq.s32.totalorder %s74, 1
      %p328 = scmp.ne.s32.totalorder %s323, %s325
      %p329 = scmp.eq.s32.totalorder %s74, 0
      %p330 = por %p328, %p329
      %p331 = scmp.ne.s32.totalorder %s323, %s325
      %p332 = scmp.eq.s32.totalorder %s79, 1
      %p333 = por %p331, %p332
      %p334 = scmp.ne.s32.totalorder %s325, %s326
      %p335 = scmp.eq.s32.totalorder %s79, 0
      %p336 = por %p334, %p335
      %p337 = scmp.ne.s32.totalorder %s325, %s326
      %p338 = scmp.eq.s32.totalorder %s80, 1
      %p339 = por %p337, %p338
      %p341 = scmp.ne.s32.totalorder %s326, %s340
      %p342 = scmp.eq.s32.totalorder %s80, 0
      %p343 = por %p341, %p342
      %s345 = sadd.s32 %s344, 1
      %p348 = scmp.eq.s32.totalorder %s74, 1
      %p349 = scmp.ne.s32.totalorder %s344, %s346
      %p350 = scmp.eq.s32.totalorder %s74, 0
      %p351 = por %p349, %p350
      %p352 = scmp.ne.s32.totalorder %s344, %s346
      %p353 = scmp.eq.s32.totalorder %s79, 1
      %p354 = por %p352, %p353
      %p355 = scmp.ne.s32.totalorder %s346, %s347
      %p356 = scmp.eq.s32.totalorder %s79, 0
      %p357 = por %p355, %p356
      %p358 = scmp.ne.s32.totalorder %s346, %s347
      %p359 = scmp.eq.s32.totalorder %s80, 1
      %p360 = por %p358, %p359
      %p362 = scmp.ne.s32.totalorder %s347, %s361
      %p363 = scmp.eq.s32.totalorder %s80, 0
      %p364 = por %p362, %p363
      %s366 = sadd.s32 %s365, 1
      %p369 = scmp.eq.s32.totalorder %s74, 1
      %p370 = scmp.ne.s32.totalorder %s365, %s367
      %p371 = scmp.eq.s32.totalorder %s74, 0
      %p372 = por %p370, %p371
      %p373 = scmp.ne.s32.totalorder %s365, %s367
      %p374 = scmp.eq.s32.totalorder %s79, 1
      %p375 = por %p373, %p374
      %p376 = scmp.ne.s32.totalorder %s367, %s368
      %p377 = scmp.eq.s32.totalorder %s79, 0
      %p378 = por %p376, %p377
      %p379 = scmp.ne.s32.totalorder %s367, %s368
      %p380 = scmp.eq.s32.totalorder %s80, 1
      %p381 = por %p379, %p380
      %p383 = scmp.ne.s32.totalorder %s368, %s382
      %p384 = scmp.eq.s32.totalorder %s80, 0
      %p385 = por %p383, %p384
      %s387 = sadd.s32 %s386, 1
      %p390 = scmp.eq.s32.totalorder %s74, 1
      %p391 = scmp.ne.s32.totalorder %s386, %s388
      %p392 = scmp.eq.s32.totalorder %s74, 0
      %p393 = por %p391, %p392
      %p394 = scmp.ne.s32.totalorder %s386, %s388
      %p395 = scmp.eq.s32.totalorder %s79, 1
      %p396 = por %p394, %p395
      %p397 = scmp.ne.s32.totalorder %s388, %s389
      %p398 = scmp.eq.s32.totalorder %s79, 0
      %p399 = por %p397, %p398
      %p400 = scmp.ne.s32.totalorder %s388, %s389
      %p401 = scmp.eq.s32.totalorder %s80, 1
      %p402 = por %p400, %p401
      %p404 = scmp.ne.s32.totalorder %s389, %s403
      %p405 = scmp.eq.s32.totalorder %s80, 0
      %p406 = por %p404, %p405
      %s408 = sadd.s32 %s407, 1
      %p411 = scmp.eq.s32.totalorder %s74, 1
      %p412 = scmp.ne.s32.totalorder %s407, %s409
      %p413 = scmp.eq.s32.totalorder %s74, 0
      %p414 = por %p412, %p413
      %p415 = scmp.ne.s32.totalorder %s407, %s409
      %p416 = scmp.eq.s32.totalorder %s79, 1
      %p417 = por %p415, %p416
      %p418 = scmp.ne.s32.totalorder %s409, %s410
      %p419 = scmp.eq.s32.totalorder %s79, 0
      %p420 = por %p418, %p419
      %p421 = scmp.ne.s32.totalorder %s409, %s410
      %p422 = scmp.eq.s32.totalorder %s80, 1
      %p423 = por %p421, %p422
      %p425 = scmp.ne.s32.totalorder %s410, %s424
      %p426 = scmp.eq.s32.totalorder %s80, 0
      %p427 = por %p425, %p426
      %s429 = sadd.s32 %s428, 1
      %p432 = scmp.eq.s32.totalorder %s74, 1
      %p433 = scmp.ne.s32.totalorder %s428, %s430
      %p434 = scmp.eq.s32.totalorder %s74, 0
      %p435 = por %p433, %p434
      %p436 = scmp.ne.s32.totalorder %s428, %s430
      %p437 = scmp.eq.s32.totalorder %s79, 1
      %p438 = por %p436, %p437
      %p439 = scmp.ne.s32.totalorder %s430, %s431
      %p440 = scmp.eq.s32.totalorder %s79, 0
      %p441 = por %p439, %p440
      %p442 = scmp.ne.s32.totalorder %s430, %s431
      %p443 = scmp.eq.s32.totalorder %s80, 1
      %p444 = por %p442, %p443
      %p446 = scmp.ne.s32.totalorder %s431, %s445
      %p447 = scmp.eq.s32.totalorder %s80, 0
      %p448 = por %p446, %p447
      %s450 = sadd.s32 %s449, 1
      %p453 = scmp.eq.s32.totalorder %s74, 1
      %p454 = scmp.ne.s32.totalorder %s449, %s451
      %p455 = scmp.eq.s32.totalorder %s74, 0
      %p456 = por %p454, %p455
      %p457 = scmp.ne.s32.totalorder %s449, %s451
      %p458 = scmp.eq.s32.totalorder %s79, 1
      %p459 = por %p457, %p458
      %p460 = scmp.ne.s32.totalorder %s451, %s452
      %p461 = scmp.eq.s32.totalorder %s79, 0
      %p462 = por %p460, %p461
      %p463 = scmp.ne.s32.totalorder %s451, %s452
      %p464 = scmp.eq.s32.totalorder %s80, 1
      %p465 = por %p463, %p464
      %p467 = scmp.ne.s32.totalorder %s452, %s466
      %p468 = scmp.eq.s32.totalorder %s80, 0
      %p469 = por %p467, %p468
      %s471 = sadd.s32 %s470, 1
      %p474 = scmp.eq.s32.totalorder %s74, 1
      %p475 = scmp.ne.s32.totalorder %s470, %s472
      %p476 = scmp.eq.s32.totalorder %s74, 0
      %p477 = por %p475, %p476
      %p478 = scmp.ne.s32.totalorder %s470, %s472
      %p479 = scmp.eq.s32.totalorder %s79, 1
      %p480 = por %p478, %p479
      %p481 = scmp.ne.s32.totalorder %s472, %s473
      %p482 = scmp.eq.s32.totalorder %s79, 0
      %p483 = por %p481, %p482
      %p484 = scmp.ne.s32.totalorder %s472, %s473
      %p485 = scmp.eq.s32.totalorder %s80, 1
      %p486 = por %p484, %p485
      %p488 = scmp.ne.s32.totalorder %s473, %s487
      %p489 = scmp.eq.s32.totalorder %s80, 0
      %p490 = por %p488, %p489
      %s492 = sadd.s32 %s491, 1
      %p495 = scmp.eq.s32.totalorder %s74, 1
      %p496 = scmp.ne.s32.totalorder %s491, %s493
      %p497 = scmp.eq.s32.totalorder %s74, 0
      %p498 = por %p496, %p497
      %p499 = scmp.ne.s32.totalorder %s491, %s493
      %p500 = scmp.eq.s32.totalorder %s79, 1
      %p501 = por %p499, %p500
      %p502 = scmp.ne.s32.totalorder %s493, %s494
      %p503 = scmp.eq.s32.totalorder %s79, 0
      %p504 = por %p502, %p503
      %p505 = scmp.ne.s32.totalorder %s493, %s494
      %p506 = scmp.eq.s32.totalorder %s80, 1
      %p507 = por %p505, %p506
      %p509 = scmp.ne.s32.totalorder %s494, %s508
      %p510 = scmp.eq.s32.totalorder %s80, 0
      %p511 = por %p509, %p510
      %s513 = sadd.s32 %s512, 1
      %p516 = scmp.eq.s32.totalorder %s74, 1
      %p517 = scmp.ne.s32.totalorder %s512, %s514
      %p518 = scmp.eq.s32.totalorder %s74, 0
      %p519 = por %p517, %p518
      %p520 = scmp.ne.s32.totalorder %s512, %s514
      %p521 = scmp.eq.s32.totalorder %s79, 1
      %p522 = por %p520, %p521
      %p523 = scmp.ne.s32.totalorder %s514, %s515
      %p524 = scmp.eq.s32.totalorder %s79, 0
      %p525 = por %p523, %p524
      %p526 = scmp.ne.s32.totalorder %s514, %s515
      %p527 = scmp.eq.s32.totalorder %s80, 1
      %p528 = por %p526, %p527
      %p530 = scmp.ne.s32.totalorder %s515, %s529
      %p531 = scmp.eq.s32.totalorder %s80, 0
      %p532 = por %p530, %p531
      %s534 = sadd.s32 %s533, 1
      %p537 = scmp.eq.s32.totalorder %s74, 1
      %p538 = scmp.ne.s32.totalorder %s533, %s535
      %p539 = scmp.eq.s32.totalorder %s74, 0
      %p540 = por %p538, %p539
      %p541 = scmp.ne.s32.totalorder %s533, %s535
      %p542 = scmp.eq.s32.totalorder %s79, 1
      %p543 = por %p541, %p542
      %p544 = scmp.ne.s32.totalorder %s535, %s536
      %p545 = scmp.eq.s32.totalorder %s79, 0
      %p546 = por %p544, %p545
      %p547 = scmp.ne.s32.totalorder %s535, %s536
      %p548 = scmp.eq.s32.totalorder %s80, 1
      %p549 = por %p547, %p548
      %p551 = scmp.ne.s32.totalorder %s536, %s550
      %p552 = scmp.eq.s32.totalorder %s80, 0
      %p553 = por %p551, %p552
      %s555 = sadd.s32 %s554, 1
      %p558 = scmp.eq.s32.totalorder %s74, 1
      %p559 = scmp.ne.s32.totalorder %s554, %s556
      %p560 = scmp.eq.s32.totalorder %s74, 0
      %p561 = por %p559, %p560
      %p562 = scmp.ne.s32.totalorder %s554, %s556
      %p563 = scmp.eq.s32.totalorder %s79, 1
      %p564 = por %p562, %p563
      %p565 = scmp.ne.s32.totalorder %s556, %s557
      %p566 = scmp.eq.s32.totalorder %s79, 0
      %p567 = por %p565, %p566
      %p568 = scmp.ne.s32.totalorder %s556, %s557
      %p569 = scmp.eq.s32.totalorder %s80, 1
      %p570 = por %p568, %p569
      %p572 = scmp.ne.s32.totalorder %s557, %s571
      %p573 = scmp.eq.s32.totalorder %s80, 0
      %p574 = por %p572, %p573
      %s576 = sadd.s32 %s575, 1
      %p579 = scmp.eq.s32.totalorder %s74, 1
      %p580 = scmp.ne.s32.totalorder %s575, %s577
      %p581 = scmp.eq.s32.totalorder %s74, 0
      %p582 = por %p580, %p581
      %p583 = scmp.ne.s32.totalorder %s575, %s577
      %p584 = scmp.eq.s32.totalorder %s79, 1
      %p585 = por %p583, %p584
      %p586 = scmp.ne.s32.totalorder %s577, %s578
      %p587 = scmp.eq.s32.totalorder %s79, 0
      %p588 = por %p586, %p587
      %p589 = scmp.ne.s32.totalorder %s577, %s578
      %p590 = scmp.eq.s32.totalorder %s80, 1
      %p591 = por %p589, %p590
      %p593 = scmp.ne.s32.totalorder %s578, %s592
      %p594 = scmp.eq.s32.totalorder %s80, 0
      %p595 = por %p593, %p594
      %s597 = sadd.s32 %s596, 1
      %p600 = scmp.eq.s32.totalorder %s74, 1
      %p601 = scmp.ne.s32.totalorder %s596, %s598
      %p602 = scmp.eq.s32.totalorder %s74, 0
      %p603 = por %p601, %p602
      %p604 = scmp.ne.s32.totalorder %s596, %s598
      %p605 = scmp.eq.s32.totalorder %s79, 1
      %p606 = por %p604, %p605
      %p607 = scmp.ne.s32.totalorder %s598, %s599
      %p608 = scmp.eq.s32.totalorder %s79, 0
      %p609 = por %p607, %p608
      %p610 = scmp.ne.s32.totalorder %s598, %s599
      %p611 = scmp.eq.s32.totalorder %s80, 1
      %p612 = por %p610, %p611
      %p614 = scmp.ne.s32.totalorder %s599, %s613
      %p615 = scmp.eq.s32.totalorder %s80, 0
      %p616 = por %p614, %p615
      %s618 = sadd.s32 %s617, 1
      %p621 = scmp.eq.s32.totalorder %s74, 1
      %p622 = scmp.ne.s32.totalorder %s617, %s619
      %p623 = scmp.eq.s32.totalorder %s74, 0
      %p624 = por %p622, %p623
      %p625 = scmp.ne.s32.totalorder %s617, %s619
      %p626 = scmp.eq.s32.totalorder %s79, 1
      %p627 = por %p625, %p626
      %p628 = scmp.ne.s32.totalorder %s619, %s620
      %p629 = scmp.eq.s32.totalorder %s79, 0
      %p630 = por %p628, %p629
      %p631 = scmp.ne.s32.totalorder %s619, %s620
      %p632 = scmp.eq.s32.totalorder %s80, 1
      %p633 = por %p631, %p632
      %p635 = scmp.ne.s32.totalorder %s620, %s634
      %p636 = scmp.eq.s32.totalorder %s80, 0
      %p637 = por %p635, %p636
      %s639 = sadd.s32 %s638, 1
      %p642 = scmp.eq.s32.totalorder %s74, 1
      %p643 = scmp.ne.s32.totalorder %s638, %s640
      %p644 = scmp.eq.s32.totalorder %s74, 0
      %p645 = por %p643, %p644
      %p646 = scmp.ne.s32.totalorder %s638, %s640
      %p647 = scmp.eq.s32.totalorder %s79, 1
      %p648 = por %p646, %p647
      %p649 = scmp.ne.s32.totalorder %s640, %s641
      %p650 = scmp.eq.s32.totalorder %s79, 0
      %p651 = por %p649, %p650
      %p652 = scmp.ne.s32.totalorder %s640, %s641
      %p653 = scmp.eq.s32.totalorder %s80, 1
      %p654 = por %p652, %p653
      %p656 = scmp.ne.s32.totalorder %s641, %s655
      %p657 = scmp.eq.s32.totalorder %s80, 0
      %p658 = por %p656, %p657
      %s660 = sadd.s32 %s659, 1
      %p663 = scmp.eq.s32.totalorder %s74, 1
      %p664 = scmp.ne.s32.totalorder %s659, %s661
      %p665 = scmp.eq.s32.totalorder %s74, 0
      %p666 = por %p664, %p665
      %p667 = scmp.ne.s32.totalorder %s659, %s661
      %p668 = scmp.eq.s32.totalorder %s79, 1
      %p669 = por %p667, %p668
      %p670 = scmp.ne.s32.totalorder %s661, %s662
      %p671 = scmp.eq.s32.totalorder %s79, 0
      %p672 = por %p670, %p671
      %p673 = scmp.ne.s32.totalorder %s661, %s662
      %p674 = scmp.eq.s32.totalorder %s80, 1
      %p675 = por %p673, %p674
      %p677 = scmp.ne.s32.totalorder %s662, %s676
      %p678 = scmp.eq.s32.totalorder %s80, 0
      %p679 = por %p677, %p678
      %s681 = sadd.s32 %s680, 1
      %p684 = scmp.eq.s32.totalorder %s74, 1
      %p685 = scmp.ne.s32.totalorder %s680, %s682
      %p686 = scmp.eq.s32.totalorder %s74, 0
      %p687 = por %p685, %p686
      %p688 = scmp.ne.s32.totalorder %s680, %s682
      %p689 = scmp.eq.s32.totalorder %s79, 1
      %p690 = por %p688, %p689
      %p691 = scmp.ne.s32.totalorder %s682, %s683
      %p692 = scmp.eq.s32.totalorder %s79, 0
      %p693 = por %p691, %p692
      %p694 = scmp.ne.s32.totalorder %s682, %s683
      %p695 = scmp.eq.s32.totalorder %s80, 1
      %p696 = por %p694, %p695
      %p698 = scmp.ne.s32.totalorder %s683, %s697
      %p699 = scmp.eq.s32.totalorder %s80, 0
      %p700 = por %p698, %p699
      %s701 = ssub.s32 %s74, %s81
      %p702 = scmp.eq.s32.totalorder %s701, 0
      %s704 = sadd.s32 %s703, 1
      %s705 = scalar_select %p702, %s703, %s704
      %p708 = pneg %p702
      %p709 = scmp.eq.s32.totalorder %s74, 1
      %p710 = por %p708, %p709
      %p711 = scmp.ne.s32.totalorder %s703, %s706
      %p712 = scmp.eq.s32.totalorder %s74, 0
      %p713 = por %p711, %p712
      %p714 = scmp.ne.s32.totalorder %s703, %s706
      %p715 = scmp.eq.s32.totalorder %s79, 1
      %p716 = por %p714, %p715
      %p717 = scmp.ne.s32.totalorder %s706, %s707
      %p718 = scmp.eq.s32.totalorder %s79, 0
      %p719 = por %p717, %p718
      %p720 = scmp.ne.s32.totalorder %s706, %s707
      %p721 = scmp.eq.s32.totalorder %s80, 1
      %p722 = por %p720, %p721
      %p724 = scmp.ne.s32.totalorder %s707, %s723
      %p725 = scmp.eq.s32.totalorder %s80, 0
      %p726 = por %p724, %p725
      %s727 = ssub.s32 %s74, %s81
      %p728 = scmp.eq.s32.totalorder %s727, 0
      %s730 = sadd.s32 %s729, 1
      %s731 = scalar_select %p728, %s729, %s730
      %p734 = pneg %p728
      %p735 = scmp.eq.s32.totalorder %s74, 1
      %p736 = por %p734, %p735
      %p737 = scmp.ne.s32.totalorder %s729, %s732
      %p738 = scmp.eq.s32.totalorder %s74, 0
      %p739 = por %p737, %p738
      %p740 = scmp.ne.s32.totalorder %s729, %s732
      %p741 = scmp.eq.s32.totalorder %s79, 1
      %p742 = por %p740, %p741
      %p743 = scmp.ne.s32.totalorder %s732, %s733
      %p744 = scmp.eq.s32.totalorder %s79, 0
      %p745 = por %p743, %p744
      %p746 = scmp.ne.s32.totalorder %s732, %s733
      %p747 = scmp.eq.s32.totalorder %s80, 1
      %p748 = por %p746, %p747
      %p750 = scmp.ne.s32.totalorder %s733, %s749
      %p751 = scmp.eq.s32.totalorder %s80, 0
      %p752 = por %p750, %p751
      %p753 = scmp.le.s32.totalorder 1, %s74
      %p754 = scmp.lt.s32.totalorder %s74, 3
      %p755 = pnand %p753, %p754
      %p756 = pneg %p755
      // Predicated region
      $region9: #{_lambda_.1} parent=5 // pred_check
        _
      $region10: #{_lambda_.1} parent=5 // pred_check_branch
        %758 = sbr.rel (%p755) target = $region12
      $region11: #{_lambda_.1} parent=5 // pred_region
        %s759 = ssub.s32 %s74, 1
        // Predicated region
        $region13: #{_lambda_.1} parent=11 // pred_check
          %p760 = pneg %p95
        $region14: #{_lambda_.1} parent=11 // pred_check_branch
          %762 = sbr.rel (%p760) target = $region16
        $region15: #{_lambda_.1} parent=11 // pred_region
          _
        $region16: #{_lambda_.1} parent=11 // pred_fallthru
          _
        // Predicated region
        $region17: #{_lambda_.1} parent=11 // pred_check
          %p763 = pneg %p168
        $region18: #{_lambda_.1} parent=11 // pred_check_branch
          %765 = sbr.rel (%p763) target = $region20
        $region19: #{_lambda_.1} parent=11 // pred_region
          _
        $region20: #{_lambda_.1} parent=11 // pred_fallthru
          _
        // Predicated region
        $region21: #{_lambda_.1} parent=11 // pred_check
          %p766 = pneg %p189
        $region22: #{_lambda_.1} parent=11 // pred_check_branch
          %768 = sbr.rel (%p766) target = $region24
        $region23: #{_lambda_.1} parent=11 // pred_region
          _
        $region24: #{_lambda_.1} parent=11 // pred_fallthru
          _
        // Predicated region
        $region25: #{_lambda_.1} parent=11 // pred_check
          %p769 = pneg %p210
        $region26: #{_lambda_.1} parent=11 // pred_check_branch
          %771 = sbr.rel (%p769) target = $region28
        $region27: #{_lambda_.1} parent=11 // pred_region
          %s773 = ssub.s32 1024, 1024
          %774 = vsyncadd [#allocation4], %s773
          %s775 = sshll.u32 [#allocation3], 4
          %s776 = int_to_ptr.vmem [resolvable:$true] %s775
          %781 = dma.hbm_to_vmem [thread:$0]  %s11, 1024, %s776, [#allocation4], 128, 128, 8
        $region28: #{_lambda_.1} parent=11 // pred_fallthru
          _
        // Predicated region
        $region29: #{_lambda_.1} parent=11 // pred_check
          %p782 = pneg %p231
        $region30: #{_lambda_.1} parent=11 // pred_check_branch
          %784 = sbr.rel (%p782) target = $region32
        $region31: #{_lambda_.1} parent=11 // pred_region
          %s786 = ssub.s32 16, 16
          %787 = vsyncadd [#allocation6], %s786
          %s789 = sshll.u32 [#allocation5], 4
          %s790 = int_to_ptr.vmem [resolvable:$true] %s789
          %792 = dma.hbm_to_vmem [thread:$0]  %s13, 16, %s790, [#allocation6]
        $region32: #{_lambda_.1} parent=11 // pred_fallthru
          _
        // Predicated region
        $region33: #{_lambda_.1} parent=11 // pred_check
          %p793 = pneg %p252
        $region34: #{_lambda_.1} parent=11 // pred_check_branch
          %795 = sbr.rel (%p793) target = $region36
        $region35: #{_lambda_.1} parent=11 // pred_region
          %s797 = ssub.s32 16, 16
          %798 = vsyncadd [#allocation6], %s797
          %s800 = sshll.u32 [#allocation7], 4
          %s801 = int_to_ptr.vmem [resolvable:$true] %s800
          %803 = dma.hbm_to_vmem [thread:$0]  %s15, 16, %s801, [#allocation6]
        $region36: #{_lambda_.1} parent=11 // pred_fallthru
          _
        // Predicated region
        $region37: #{_lambda_.1} parent=11 // pred_check
          %p804 = pneg %p273
        $region38: #{_lambda_.1} parent=11 // pred_check_branch
          %806 = sbr.rel (%p804) target = $region40
        $region39: #{_lambda_.1} parent=11 // pred_region
          %s808 = ssub.s32 4608, 4608
          %809 = vsyncadd [#allocation9], %s808
          %s810 = sshll.u32 [#allocation8], 4
          %s811 = int_to_ptr.vmem [resolvable:$true] %s810
          %816 = dma.hbm_to_vmem [thread:$0]  %s17, 4608, %s811, [#allocation9], 128, 128, 8
        $region40: #{_lambda_.1} parent=11 // pred_fallthru
          _
        // Predicated region
        $region41: #{_lambda_.1} parent=11 // pred_check
          %p817 = pneg %p294
        $region42: #{_lambda_.1} parent=11 // pred_check_branch
          %819 = sbr.rel (%p817) target = $region44
        $region43: #{_lambda_.1} parent=11 // pred_region
          %s821 = ssub.s32 144, 144
          %822 = vsyncadd [#allocation9], %s821
          %s823 = sshll.u32 [#allocation10], 4
          %s824 = int_to_ptr.vmem [resolvable:$true] %s823
          %829 = dma.hbm_to_vmem [thread:$0]  %s19, 144, %s824, [#allocation9], 16, 16, 1
        $region44: #{_lambda_.1} parent=11 // pred_fallthru
          _
        // Predicated region
        $region45: #{_lambda_.1} parent=11 // pred_check
          %p830 = pneg %p315
        $region46: #{_lambda_.1} parent=11 // pred_check_branch
          %832 = sbr.rel (%p830) target = $region48
        $region47: #{_lambda_.1} parent=11 // pred_region
          _
        $region48: #{_lambda_.1} parent=11 // pred_fallthru
          _
        // Predicated region
        $region49: #{_lambda_.1} parent=11 // pred_check
          %p833 = pneg %p336
        $region50: #{_lambda_.1} parent=11 // pred_check_branch
          %835 = sbr.rel (%p833) target = $region52
        $region51: #{_lambda_.1} parent=11 // pred_region
          %s837 = ssub.s32 48, 48
          %838 = vsyncadd [#allocation12], %s837
          %s839 = sshll.u32 [#allocation11], 4
          %s840 = int_to_ptr.vmem [resolvable:$true] %s839
          %845 = dma.hbm_to_vmem [thread:$0]  %s23, 48, %s840, [#allocation12], 16, 16, 1
        $region52: #{_lambda_.1} parent=11 // pred_fallthru
          _
        // Predicated region
        $region53: #{_lambda_.1} parent=11 // pred_check
          %p846 = pneg %p357
        $region54: #{_lambda_.1} parent=11 // pred_check_branch
          %848 = sbr.rel (%p846) target = $region56
        $region55: #{_lambda_.1} parent=11 // pred_region
          _
        $region56: #{_lambda_.1} parent=11 // pred_fallthru
          _
        // Predicated region
        $region57: #{_lambda_.1} parent=11 // pred_check
          %p849 = pneg %p378
        $region58: #{_lambda_.1} parent=11 // pred_check_branch
          %851 = sbr.rel (%p849) target = $region60
        $region59: #{_lambda_.1} parent=11 // pred_region
          _
        $region60: #{_lambda_.1} parent=11 // pred_fallthru
          _
        // Predicated region
        $region61: #{_lambda_.1} parent=11 // pred_check
          %p852 = pneg %p399
        $region62: #{_lambda_.1} parent=11 // pred_check_branch
          %854 = sbr.rel (%p852) target = $region64
        $region63: #{_lambda_.1} parent=11 // pred_region
          _
        $region64: #{_lambda_.1} parent=11 // pred_fallthru
          _
        // Predicated region
        $region65: #{_lambda_.1} parent=11 // pred_check
          %p855 = pneg %p420
        $region66: #{_lambda_.1} parent=11 // pred_check_branch
          %857 = sbr.rel (%p855) target = $region68
        $region67: #{_lambda_.1} parent=11 // pred_region
          %s859 = ssub.s32 48, 48
          %860 = vsyncadd [#allocation12], %s859
          %s861 = sshll.u32 [#allocation13], 4
          %s862 = int_to_ptr.vmem [resolvable:$true] %s861
          %867 = dma.hbm_to_vmem [thread:$0]  %s31, 48, %s862, [#allocation12], 16, 16, 1
        $region68: #{_lambda_.1} parent=11 // pred_fallthru
          _
        // Predicated region
        $region69: #{_lambda_.1} parent=11 // pred_check
          %p868 = pneg %p441
        $region70: #{_lambda_.1} parent=11 // pred_check_branch
          %870 = sbr.rel (%p868) target = $region72
        $region71: #{_lambda_.1} parent=11 // pred_region
          %s872 = ssub.s32 384, 384
          %873 = vsyncadd [#allocation15], %s872
          %s874 = sshll.u32 [#allocation14], 4
          %s875 = int_to_ptr.vmem [resolvable:$true] %s874
          %880 = dma.hbm_to_vmem [thread:$0]  %s33, 384, %s875, [#allocation15], 128, 128, 8
        $region72: #{_lambda_.1} parent=11 // pred_fallthru
          _
        // Predicated region
        $region73: #{_lambda_.1} parent=11 // pred_check
          %p881 = pneg %p462
        $region74: #{_lambda_.1} parent=11 // pred_check_branch
          %883 = sbr.rel (%p881) target = $region76
        $region75: #{_lambda_.1} parent=11 // pred_region
          _
        $region76: #{_lambda_.1} parent=11 // pred_fallthru
          _
        // Predicated region
        $region77: #{_lambda_.1} parent=11 // pred_check
          %p884 = pneg %p483
        $region78: #{_lambda_.1} parent=11 // pred_check_branch
          %886 = sbr.rel (%p884) target = $region80
        $region79: #{_lambda_.1} parent=11 // pred_region
          _
        $region80: #{_lambda_.1} parent=11 // pred_fallthru
          _
        // Predicated region
        $region81: #{_lambda_.1} parent=11 // pred_check
          %p887 = pneg %p504
        $region82: #{_lambda_.1} parent=11 // pred_check_branch
          %889 = sbr.rel (%p887) target = $region84
        $region83: #{_lambda_.1} parent=11 // pred_region
          _
        $region84: #{_lambda_.1} parent=11 // pred_fallthru
          _
        // Predicated region
        $region85: #{_lambda_.1} parent=11 // pred_check
          %p890 = pneg %p525
        $region86: #{_lambda_.1} parent=11 // pred_check_branch
          %892 = sbr.rel (%p890) target = $region88
        $region87: #{_lambda_.1} parent=11 // pred_region
          %s894 = ssub.s32 512, 512
          %895 = vsyncadd [#allocation15], %s894
          %s896 = sshll.u32 [#allocation16], 4
          %s897 = int_to_ptr.vmem [resolvable:$true] %s896
          %902 = dma.hbm_to_vmem [thread:$0]  %s41, 512, %s897, [#allocation15], 128, 128, 8
        $region88: #{_lambda_.1} parent=11 // pred_fallthru
          _
        // Predicated region
        $region89: #{_lambda_.1} parent=11 // pred_check
          %p903 = pneg %p546
        $region90: #{_lambda_.1} parent=11 // pred_check_branch
          %905 = sbr.rel (%p903) target = $region92
        $region91: #{_lambda_.1} parent=11 // pred_region
          _
        $region92: #{_lambda_.1} parent=11 // pred_fallthru
          _
        // Predicated region
        $region93: #{_lambda_.1} parent=11 // pred_check
          %p906 = pneg %p567
        $region94: #{_lambda_.1} parent=11 // pred_check_branch
          %908 = sbr.rel (%p906) target = $region96
        $region95: #{_lambda_.1} parent=11 // pred_region
          _
        $region96: #{_lambda_.1} parent=11 // pred_fallthru
          _
        // Predicated region
        $region97: #{_lambda_.1} parent=11 // pred_check
          %p909 = pneg %p588
        $region98: #{_lambda_.1} parent=11 // pred_check_branch
          %911 = sbr.rel (%p909) target = $region100
        $region99: #{_lambda_.1} parent=11 // pred_region
          _
        $region100: #{_lambda_.1} parent=11 // pred_fallthru
          _
        // Predicated region
        $region101: #{_lambda_.1} parent=11 // pred_check
          %p912 = pneg %p609
        $region102: #{_lambda_.1} parent=11 // pred_check_branch
          %914 = sbr.rel (%p912) target = $region104
        $region103: #{_lambda_.1} parent=11 // pred_region
          _
        $region104: #{_lambda_.1} parent=11 // pred_fallthru
          _
        // Predicated region
        $region105: #{_lambda_.1} parent=11 // pred_check
          %p915 = pneg %p630
        $region106: #{_lambda_.1} parent=11 // pred_check_branch
          %917 = sbr.rel (%p915) target = $region108
        $region107: #{_lambda_.1} parent=11 // pred_region
          _
        $region108: #{_lambda_.1} parent=11 // pred_fallthru
          _
        // Predicated region
        $region109: #{_lambda_.1} parent=11 // pred_check
          %p918 = pneg %p651
        $region110: #{_lambda_.1} parent=11 // pred_check_branch
          %920 = sbr.rel (%p918) target = $region112
        $region111: #{_lambda_.1} parent=11 // pred_region
          _
        $region112: #{_lambda_.1} parent=11 // pred_fallthru
          _
        // Predicated region
        $region113: #{_lambda_.1} parent=11 // pred_check
          %p921 = pneg %p672
        $region114: #{_lambda_.1} parent=11 // pred_check_branch
          %923 = sbr.rel (%p921) target = $region116
        $region115: #{_lambda_.1} parent=11 // pred_region
          _
        $region116: #{_lambda_.1} parent=11 // pred_fallthru
          _
        // Predicated region
        $region117: #{_lambda_.1} parent=11 // pred_check
          %p924 = pneg %p693
        $region118: #{_lambda_.1} parent=11 // pred_check_branch
          %926 = sbr.rel (%p924) target = $region120
        $region119: #{_lambda_.1} parent=11 // pred_region
          _
        $region120: #{_lambda_.1} parent=11 // pred_fallthru
          _
      $region12: #{_lambda_.1} parent=5 // pred_fallthru
        _
      %p927 = scmp.lt.s32.totalorder %s74, 2
      // Predicated region
      $region121: #{_lambda_.1} parent=5 // pred_check
        %p928 = pneg %p927
      $region122: #{_lambda_.1} parent=5 // pred_check_branch
        %930 = sbr.rel (%p928) target = $region124
      $region123: #{_lambda_.1} parent=5 // pred_region
        // Predicated region
        $region125: #{_lambda_.1} parent=123 // pred_check
          %p931 = pneg %p115
        $region126: #{_lambda_.1} parent=123 // pred_check_branch
          %933 = sbr.rel (%p931) target = $region128
        $region127: #{_lambda_.1} parent=123 // pred_region
          %p934 = scmp.lt.s32.totalorder %s74, 1
          %s935 = scalar_select %p934, %s74, 1
          %s936 = smul.addr %s935, 8
          %s937 = scalar_lea.vmem %s3, %s936
        $region128: #{_lambda_.1} parent=123 // pred_fallthru
          _
        // Predicated region
        $region129: #{_lambda_.1} parent=123 // pred_check
          %p938 = pneg %p141
        $region130: #{_lambda_.1} parent=123 // pred_check_branch
          %940 = sbr.rel (%p938) target = $region132
        $region131: #{_lambda_.1} parent=123 // pred_region
          %p941 = scmp.lt.s32.totalorder %s74, 1
          %s942 = scalar_select %p941, %s74, 1
          %s943 = smul.addr %s942, 8
          %s944 = scalar_lea.vmem %s5, %s943
        $region132: #{_lambda_.1} parent=123 // pred_fallthru
          _
      $region124: #{_lambda_.1} parent=5 // pred_fallthru
        _
      %p945 = scmp.le.s32.totalorder 1, %s74
      %p946 = scmp.lt.s32.totalorder %s74, 3
      %p947 = pnand %p945, %p946
      %p948 = pneg %p947
      // Predicated region
      $region133: #{_lambda_.1} parent=5 // pred_check
        _
      $region134: #{_lambda_.1} parent=5 // pred_check_branch
        %950 = sbr.rel (%p947) target = $region136
      $region135: #{_lambda_.1} parent=5 // pred_region
        %s951 = ssub.s32 %s74, 1
        // Predicated region
        $region137: #{_lambda_.1} parent=135 // pred_check
          %p952 = pneg %p210
        $region138: #{_lambda_.1} parent=135 // pred_check_branch
          %954 = sbr.rel (%p952) target = $region140
        $region139: #{_lambda_.1} parent=135 // pred_region
          %955 = dma.done [#allocation4], 1024
        $region140: #{_lambda_.1} parent=135 // pred_fallthru
          _
        // Predicated region
        $region141: #{_lambda_.1} parent=135 // pred_check
          %p956 = pneg %p231
        $region142: #{_lambda_.1} parent=135 // pred_check_branch
          %958 = sbr.rel (%p956) target = $region144
        $region143: #{_lambda_.1} parent=135 // pred_region
          %959 = dma.done [#allocation6], 16
        $region144: #{_lambda_.1} parent=135 // pred_fallthru
          _
        // Predicated region
        $region145: #{_lambda_.1} parent=135 // pred_check
          %p960 = pneg %p252
        $region146: #{_lambda_.1} parent=135 // pred_check_branch
          %962 = sbr.rel (%p960) target = $region148
        $region147: #{_lambda_.1} parent=135 // pred_region
          %963 = dma.done [#allocation6], 16
        $region148: #{_lambda_.1} parent=135 // pred_fallthru
          _
        // Predicated region
        $region149: #{_lambda_.1} parent=135 // pred_check
          %p964 = pneg %p273
        $region150: #{_lambda_.1} parent=135 // pred_check_branch
          %966 = sbr.rel (%p964) target = $region152
        $region151: #{_lambda_.1} parent=135 // pred_region
          %967 = dma.done [#allocation9], 4608
        $region152: #{_lambda_.1} parent=135 // pred_fallthru
          _
        // Predicated region
        $region153: #{_lambda_.1} parent=135 // pred_check
          %p968 = pneg %p294
        $region154: #{_lambda_.1} parent=135 // pred_check_branch
          %970 = sbr.rel (%p968) target = $region156
        $region155: #{_lambda_.1} parent=135 // pred_region
          %971 = dma.done [#allocation9], 144
        $region156: #{_lambda_.1} parent=135 // pred_fallthru
          _
        // Predicated region
        $region157: #{_lambda_.1} parent=135 // pred_check
          %p972 = pneg %p336
        $region158: #{_lambda_.1} parent=135 // pred_check_branch
          %974 = sbr.rel (%p972) target = $region160
        $region159: #{_lambda_.1} parent=135 // pred_region
          %975 = dma.done [#allocation12], 48
        $region160: #{_lambda_.1} parent=135 // pred_fallthru
          _
        // Predicated region
        $region161: #{_lambda_.1} parent=135 // pred_check
          %p976 = pneg %p420
        $region162: #{_lambda_.1} parent=135 // pred_check_branch
          %978 = sbr.rel (%p976) target = $region164
        $region163: #{_lambda_.1} parent=135 // pred_region
          %979 = dma.done [#allocation12], 48
        $region164: #{_lambda_.1} parent=135 // pred_fallthru
          _
        // Predicated region
        $region165: #{_lambda_.1} parent=135 // pred_check
          %p980 = pneg %p441
        $region166: #{_lambda_.1} parent=135 // pred_check_branch
          %982 = sbr.rel (%p980) target = $region168
        $region167: #{_lambda_.1} parent=135 // pred_region
          %983 = dma.done [#allocation15], 384
        $region168: #{_lambda_.1} parent=135 // pred_fallthru
          _
        // Predicated region
        $region169: #{_lambda_.1} parent=135 // pred_check
          %p984 = pneg %p525
        $region170: #{_lambda_.1} parent=135 // pred_check_branch
          %986 = sbr.rel (%p984) target = $region172
        $region171: #{_lambda_.1} parent=135 // pred_region
          %987 = dma.done [#allocation15], 512
        $region172: #{_lambda_.1} parent=135 // pred_fallthru
          _
        %p988 = pneg %p95
        %p989 = pneg %p92
        %p990 = scmp.lt.s32.totalorder %s79, 1
        %s991 = scalar_select %p990, %s79, 1
        %s992 = smul.addr %s991, 8
        %s993 = scalar_lea.vmem %s3, %s992
        %p994 = pneg %p121
        %p995 = pneg %p118
        %p996 = scmp.lt.s32.totalorder %s79, 1
        %s997 = scalar_select %p996, %s79, 1
        %s998 = smul.addr %s997, 8
        %s999 = scalar_lea.vmem %s5, %s998
        %p1000 = pneg %p147
        %p1001 = pneg %p144
        %p1002 = pneg %p168
        %p1003 = pneg %p165
        %p1004 = pneg %p189
        %p1005 = pneg %p186
        %p1006 = pneg %p210
        %p1007 = pneg %p207
        %p1008 = pneg %p231
        %p1009 = pneg %p228
        %p1010 = pneg %p252
        %p1011 = pneg %p249
        %p1012 = pneg %p273
        %p1013 = pneg %p270
        %p1014 = pneg %p294
        %p1015 = pneg %p291
        %p1016 = pneg %p315
        %p1017 = pneg %p312
        %p1018 = pneg %p336
        %p1019 = pneg %p333
        %p1020 = pneg %p357
        %p1021 = pneg %p354
        %p1022 = pneg %p378
        %p1023 = pneg %p375
        %p1024 = pneg %p399
        %p1025 = pneg %p396
        %p1026 = pneg %p420
        %p1027 = pneg %p417
        %p1028 = pneg %p441
        %p1029 = pneg %p438
        %p1030 = pneg %p462
        %p1031 = pneg %p459
        %p1032 = pneg %p483
        %p1033 = pneg %p480
        %p1034 = pneg %p504
        %p1035 = pneg %p501
        %p1036 = pneg %p525
        %p1037 = pneg %p522
        %p1038 = pneg %p546
        %p1039 = pneg %p543
        %p1040 = pneg %p567
        %p1041 = pneg %p564
        %p1042 = pneg %p588
        %p1043 = pneg %p585
        %p1044 = pneg %p609
        %p1045 = pneg %p606
        %p1046 = pneg %p630
        %p1047 = pneg %p627
        %p1048 = pneg %p651
        %p1049 = pneg %p648
        %p1050 = pneg %p672
        %p1051 = pneg %p669
        %p1052 = pneg %p693
        %p1053 = pneg %p690
        %p1054 = pneg %p719
        %p1055 = pneg %p716
        %p1056 = scmp.lt.s32.totalorder %s79, 1
        %s1057 = scalar_select %p1056, %s79, 1
        %s1058 = smul.addr %s1057, 8
        %s1059 = scalar_lea.vmem %s59, %s1058
        %p1060 = pneg %p745
        %p1061 = pneg %p742
        %p1062 = scmp.lt.s32.totalorder %s79, 1
        %s1063 = scalar_select %p1062, %s79, 1
        %s1064 = smul.addr %s1063, 8
        %s1065 = scalar_lea.vmem %s61, %s1064
        %p1066 = scmp.lt.s32.totalorder %s79, 1
        %s1067 = scalar_select %p1066, %s79, 1
        %s1068 = smul.addr %s1067, 8
        %s1069 = scalar_lea.vmem %s3, %s1068
        %p1070 = scmp.lt.s32.totalorder %s79, 1
        %s1071 = scalar_select %p1070, %s79, 1
        %s1072 = smul.addr %s1071, 8
        %s1073 = scalar_lea.vmem %s5, %s1072
        %p1074 = scmp.lt.s32.totalorder %s79, 1
        %s1075 = scalar_select %p1074, %s79, 1
        %s1076 = smul.addr %s1075, 8
        %s1077 = scalar_lea.vmem %s59, %s1076
        %p1078 = scmp.lt.s32.totalorder %s79, 1
        %s1079 = scalar_select %p1078, %s79, 1
        %s1080 = smul.addr %s1079, 8
        %s1081 = scalar_lea.vmem %s61, %s1080
        %s1082 = sld [smem:[#allocation2]]
        %v1083 = vld [vmem:[%s1069] sm:$0xff]
        %v1084 = vld [vmem:[%s7] sm:$0x1]
        %v1086 = vlaneseq
        %v1087 = vshrl.u32 %v1086, 7
        %v1088 = vsub.s32 0, %v1087
        %v1089 = vrot.slane %v1084, %v1088
        %v1091 = vadd.f32 %v1083, %v1089
        %v1092 = vld [vmem:[%s9] sm:$0x1]
        %v1094 = vlaneseq
        %v1095 = vshrl.u32 %v1094, 7
        %v1096 = vsub.s32 0, %v1095
        %v1097 = vrot.slane %v1092, %v1096
        %v1099 = vmul.f32 %v1091, %v1097
        %v1100 = vld [vmem:[#allocation3] sm:$0xff]
        %v1101 = vld [vmem:[#allocation3 + $0x8] sm:$0xff]
        %v1102 = vld [vmem:[#allocation3 + $0x10] sm:$0xff]
        %v1103 = vld [vmem:[#allocation3 + $0x18] sm:$0xff]
        %v1104 = vld [vmem:[#allocation3 + $0x20] sm:$0xff]
        %v1105 = vld [vmem:[#allocation3 + $0x28] sm:$0xff]
        %v1106 = vld [vmem:[#allocation3 + $0x30] sm:$0xff]
        %v1107 = vld [vmem:[#allocation3 + $0x38] sm:$0xff]
        %vm1108 = vcmask 523264
        %v1110 = vsel %vm1108, %v1099, 0
        %1112 = vmatprep.subr.mxu0 0.0
        %1113 = vmatpush1.msra.mxu0 %v1100
        %1114 = vmatprep.subr.mxu0 0.0
        %1115 = vmatpush1.msra.mxu0 %v1101
        %1116 = vmatprep.subr.mxu0 0.0
        %1117 = vmatpush1.msra.mxu0 %v1102
        %1118 = vmatprep.subr.mxu0 0.0
        %1119 = vmatpush1.msra.mxu0 %v1103
        %1120 = vmatprep.subr.mxu0 0.0
        %1121 = vmatpush1.msra.mxu0 %v1104
        %1122 = vmatprep.subr.mxu0 0.0
        %1123 = vmatpush1.msra.mxu0 %v1105
        %1124 = vmatprep.subr.mxu0 0.0
        %1125 = vmatpush1.msra.mxu0 %v1106
        %1126 = vmatprep.subr.mxu0 0.0
        %1127 = vmatpush1.msra.mxu0 %v1107
        %1128 = vmatprep.subr.mxu0 0.0
        %1129 = vmatpush1.msra.mxu0 0.0
        %1130 = vmatprep.subr.mxu0 0.0
        %1131 = vmatpush1.msra.mxu0 0.0
        %1132 = vmatprep.subr.mxu0 0.0
        %1133 = vmatpush1.msra.mxu0 0.0
        %1134 = vmatprep.subr.mxu0 0.0
        %1135 = vmatpush1.msra.mxu0 0.0
        %1136 = vmatprep.subr.mxu0 0.0
        %1137 = vmatpush1.msra.mxu0 0.0
        %1138 = vmatprep.subr.mxu0 0.0
        %1139 = vmatpush1.msra.mxu0 0.0
        %1140 = vmatprep.subr.mxu0 0.0
        %1141 = vmatpush1.msra.mxu0 0.0
        %1142 = vmatprep.subr.mxu0 0.0
        %1143 = vmatpush1.msra.mxu0 0.0
        %1144 = vmatprep.subr.mxu0 0.0
        %1145 = vmatpush1.msra.mxu0 0.0
        %1146 = vmatprep.subr.mxu0 0.0
        %1147 = vmatpush1.msra.mxu0 0.0
        %1148 = vmatprep.subr.mxu0 0.0
        %1149 = vmatpush1.msra.mxu0 0.0
        %1150 = vmatprep.subr.mxu0 0.0
        %1151 = vmatpush1.msra.mxu0 0.0
        %1152 = vmatprep.subr.mxu0 0.0
        %1153 = vmatpush1.msra.mxu0 0.0
        %1154 = vmatprep.subr.mxu0 0.0
        %1155 = vmatpush1.msra.mxu0 0.0
        %1156 = vmatprep.subr.mxu0 0.0
        %1157 = vmatpush1.msra.mxu0 0.0
        %1158 = vmatprep.subr.mxu0 0.0
        %1159 = vmatpush1.msra.mxu0 0.0
        %1160 = vmatprep.subr.mxu0 0.0
        %1161 = vmatpush1.msra.mxu0 0.0
        %1162 = vmatprep.subr.mxu0 0.0
        %1163 = vmatpush1.msra.mxu0 0.0
        %1164 = vmatprep.subr.mxu0 0.0
        %1165 = vmatpush1.msra.mxu0 0.0
        %1166 = vmatprep.subr.mxu0 0.0
        %1167 = vmatpush1.msra.mxu0 0.0
        %1168 = vmatprep.subr.mxu0 0.0
        %1169 = vmatpush1.msra.mxu0 0.0
        %1170 = vmatprep.subr.mxu0 0.0
        %1171 = vmatpush1.msra.mxu0 0.0
        %1172 = vmatprep.subr.mxu0 0.0
        %1173 = vmatpush1.msra.mxu0 0.0
        %1174 = vmatprep.subr.mxu0 0.0
        %1175 = vmatpush1.msra.mxu0 0.0
        %1176 = vmatprep.mubr.f32.mxu0 0.0
        %1177 = vmatmul.mubr.f32.gmra.mrb[0].mxu0 %v1110
        %v1178 = vpop.f32.mrb[0].mxu0
        %v1179 = vadd.f32 0.0, %v1178
        %v1180 = vpop.f32.mrb[0].mxu0
        %1181 = vdwg.mxu0
        %v1182 = vld [vmem:[#allocation5] sm:$0x1]
        %v1184 = vlaneseq
        %v1185 = vshrl.u32 %v1184, 7
        %v1186 = vsub.s32 0, %v1185
        %v1187 = vrot.slane %v1182, %v1186
        %v1189 = vmul.f32 %v1179, %v1187
        %v1190 = vld [vmem:[#allocation7] sm:$0x1]
        %v1192 = vlaneseq
        %v1193 = vshrl.u32 %v1192, 7
        %v1194 = vsub.s32 0, %v1193
        %v1195 = vrot.slane %v1190, %v1194
        %v1197 = vadd.f32 %v1189, %v1195
        %s1198 = smul.f32 %s1082, 0.17677669
        %v1199 = vld [vmem:[#allocation8] sm:$0xff]
        %v1200 = vld [vmem:[#allocation8 + $0x8] sm:$0xff]
        %v1201 = vld [vmem:[#allocation8 + $0x10] sm:$0xff]
        %v1202 = vld [vmem:[#allocation8 + $0x18] sm:$0xff]
        %v1203 = vld [vmem:[#allocation10] sm:$0x1]
        %v1205 = vlaneseq
        %v1206 = vshrl.u32 %v1205, 7
        %v1207 = vsub.s32 0, %v1206
        %v1208 = vrot.slane %v1203, %v1207
        %vm1210 = vcmask 261120
        %v1212 = vsel %vm1210, %v1197, 0
        %1214 = vmatprep.subr.mxu0 0.0
        %1215 = vmatpush1.msra.mxu0 %v1199
        %1216 = vmatprep.subr.mxu0 0.0
        %1217 = vmatpush1.msra.mxu0 %v1200
        %1218 = vmatprep.subr.mxu0 0.0
        %1219 = vmatpush1.msra.mxu0 %v1201
        %1220 = vmatprep.subr.mxu0 0.0
        %1221 = vmatpush1.msra.mxu0 %v1202
        %1222 = vmatprep.subr.mxu0 0.0
        %1223 = vmatpush1.msra.mxu0 0.0
        %1224 = vmatprep.subr.mxu0 0.0
        %1225 = vmatpush1.msra.mxu0 0.0
        %1226 = vmatprep.subr.mxu0 0.0
        %1227 = vmatpush1.msra.mxu0 0.0
        %1228 = vmatprep.subr.mxu0 0.0
        %1229 = vmatpush1.msra.mxu0 0.0
        %1230 = vmatprep.subr.mxu0 0.0
        %1231 = vmatpush1.msra.mxu0 0.0
        %1232 = vmatprep.subr.mxu0 0.0
        %1233 = vmatpush1.msra.mxu0 0.0
        %1234 = vmatprep.subr.mxu0 0.0
        %1235 = vmatpush1.msra.mxu0 0.0
        %1236 = vmatprep.subr.mxu0 0.0
        %1237 = vmatpush1.msra.mxu0 0.0
        %1238 = vmatprep.subr.mxu0 0.0
        %1239 = vmatpush1.msra.mxu0 0.0
        %1240 = vmatprep.subr.mxu0 0.0
        %1241 = vmatpush1.msra.mxu0 0.0
        %1242 = vmatprep.subr.mxu0 0.0
        %1243 = vmatpush1.msra.mxu0 0.0
        %1244 = vmatprep.subr.mxu0 0.0
        %1245 = vmatpush1.msra.mxu0 0.0
        %1246 = vmatprep.subr.mxu0 0.0
        %1247 = vmatpush1.msra.mxu0 0.0
        %1248 = vmatprep.subr.mxu0 0.0
        %1249 = vmatpush1.msra.mxu0 0.0
        %1250 = vmatprep.subr.mxu0 0.0
        %1251 = vmatpush1.msra.mxu0 0.0
        %1252 = vmatprep.subr.mxu0 0.0
        %1253 = vmatpush1.msra.mxu0 0.0
        %1254 = vmatprep.subr.mxu0 0.0
        %1255 = vmatpush1.msra.mxu0 0.0
        %1256 = vmatprep.subr.mxu0 0.0
        %1257 = vmatpush1.msra.mxu0 0.0
        %1258 = vmatprep.subr.mxu0 0.0
        %1259 = vmatpush1.msra.mxu0 0.0
        %1260 = vmatprep.subr.mxu0 0.0
        %1261 = vmatpush1.msra.mxu0 0.0
        %1262 = vmatprep.subr.mxu0 0.0
        %1263 = vmatpush1.msra.mxu0 0.0
        %1264 = vmatprep.subr.mxu0 0.0
        %1265 = vmatpush1.msra.mxu0 0.0
        %1266 = vmatprep.subr.mxu0 0.0
        %1267 = vmatpush1.msra.mxu0 0.0
        %1268 = vmatprep.subr.mxu0 0.0
        %1269 = vmatpush1.msra.mxu0 0.0
        %1270 = vmatprep.subr.mxu0 0.0
        %1271 = vmatpush1.msra.mxu0 0.0
        %1272 = vmatprep.subr.mxu0 0.0
        %1273 = vmatpush1.msra.mxu0 0.0
        %1274 = vmatprep.subr.mxu0 0.0
        %1275 = vmatpush1.msra.mxu0 0.0
        %1276 = vmatprep.subr.mxu0 0.0
        %1277 = vmatpush1.msra.mxu0 0.0
        %1278 = vmatprep.mubr.f32.mxu0 0.0
        %1279 = vmatmul.mubr.f32.gmra.mrb[0].mxu0 %v1212
        %v1280 = vpop.f32.mrb[0].mxu0
        %v1281 = vadd.f32 %v1208, %v1280
        %v1282 = vpop.f32.mrb[0].mxu0
        %1283 = vdwg.mxu0
        %s1284 = scalar_lea.vmem [#allocation8], 32
        %v1285 = vld [vmem:[%s1284] sm:$0xff]
        %v1286 = vld [vmem:[%s1284 + $0x8] sm:$0xff]
        %v1287 = vld [vmem:[%s1284 + $0x10] sm:$0xff]
        %v1288 = vld [vmem:[%s1284 + $0x18] sm:$0xff]
        %s1289 = scalar_lea.vmem [#allocation10], 1
        %v1290 = vld [vmem:[%s1289] sm:$0x1]
        %v1292 = vlaneseq
        %v1293 = vshrl.u32 %v1292, 7
        %v1294 = vsub.s32 0, %v1293
        %v1295 = vrot.slane %v1290, %v1294
        %1297 = vmatprep.subr.mxu0 0.0
        %1298 = vmatpush1.msra.mxu0 %v1285
        %1299 = vmatprep.subr.mxu0 0.0
        %1300 = vmatpush1.msra.mxu0 %v1286
        %1301 = vmatprep.subr.mxu0 0.0
        %1302 = vmatpush1.msra.mxu0 %v1287
        %1303 = vmatprep.subr.mxu0 0.0
        %1304 = vmatpush1.msra.mxu0 %v1288
        %1305 = vmatprep.subr.mxu0 0.0
        %1306 = vmatpush1.msra.mxu0 0.0
        %1307 = vmatprep.subr.mxu0 0.0
        %1308 = vmatpush1.msra.mxu0 0.0
        %1309 = vmatprep.subr.mxu0 0.0
        %1310 = vmatpush1.msra.mxu0 0.0
        %1311 = vmatprep.subr.mxu0 0.0
        %1312 = vmatpush1.msra.mxu0 0.0
        %1313 = vmatprep.subr.mxu0 0.0
        %1314 = vmatpush1.msra.mxu0 0.0
        %1315 = vmatprep.subr.mxu0 0.0
        %1316 = vmatpush1.msra.mxu0 0.0
        %1317 = vmatprep.subr.mxu0 0.0
        %1318 = vmatpush1.msra.mxu0 0.0
        %1319 = vmatprep.subr.mxu0 0.0
        %1320 = vmatpush1.msra.mxu0 0.0
        %1321 = vmatprep.subr.mxu0 0.0
        %1322 = vmatpush1.msra.mxu0 0.0
        %1323 = vmatprep.subr.mxu0 0.0
        %1324 = vmatpush1.msra.mxu0 0.0
        %1325 = vmatprep.subr.mxu0 0.0
        %1326 = vmatpush1.msra.mxu0 0.0
        %1327 = vmatprep.subr.mxu0 0.0
        %1328 = vmatpush1.msra.mxu0 0.0
        %1329 = vmatprep.subr.mxu0 0.0
        %1330 = vmatpush1.msra.mxu0 0.0
        %1331 = vmatprep.subr.mxu0 0.0
        %1332 = vmatpush1.msra.mxu0 0.0
        %1333 = vmatprep.subr.mxu0 0.0
        %1334 = vmatpush1.msra.mxu0 0.0
        %1335 = vmatprep.subr.mxu0 0.0
        %1336 = vmatpush1.msra.mxu0 0.0
        %1337 = vmatprep.subr.mxu0 0.0
        %1338 = vmatpush1.msra.mxu0 0.0
        %1339 = vmatprep.subr.mxu0 0.0
        %1340 = vmatpush1.msra.mxu0 0.0
        %1341 = vmatprep.subr.mxu0 0.0
        %1342 = vmatpush1.msra.mxu0 0.0
        %1343 = vmatprep.subr.mxu0 0.0
        %1344 = vmatpush1.msra.mxu0 0.0
        %1345 = vmatprep.subr.mxu0 0.0
        %1346 = vmatpush1.msra.mxu0 0.0
        %1347 = vmatprep.subr.mxu0 0.0
        %1348 = vmatpush1.msra.mxu0 0.0
        %1349 = vmatprep.subr.mxu0 0.0
        %1350 = vmatpush1.msra.mxu0 0.0
        %1351 = vmatprep.subr.mxu0 0.0
        %1352 = vmatpush1.msra.mxu0 0.0
        %1353 = vmatprep.subr.mxu0 0.0
        %1354 = vmatpush1.msra.mxu0 0.0
        %1355 = vmatprep.subr.mxu0 0.0
        %1356 = vmatpush1.msra.mxu0 0.0
        %1357 = vmatprep.subr.mxu0 0.0
        %1358 = vmatpush1.msra.mxu0 0.0
        %1359 = vmatprep.subr.mxu0 0.0
        %1360 = vmatpush1.msra.mxu0 0.0
        %1361 = vmatprep.mubr.f32.mxu0 0.0
        %1362 = vmatmul.mubr.f32.gmra.mrb[0].mxu0 %v1212
        %v1363 = vpop.f32.mrb[0].mxu0
        %v1364 = vadd.f32 %v1295, %v1363
        %v1365 = vpop.f32.mrb[0].mxu0
        %1366 = vdwg.mxu0
        %s1367 = scalar_lea.vmem [#allocation8], 64
        %v1368 = vld [vmem:[%s1367] sm:$0xff]
        %v1369 = vld [vmem:[%s1367 + $0x8] sm:$0xff]
        %v1370 = vld [vmem:[%s1367 + $0x10] sm:$0xff]
        %v1371 = vld [vmem:[%s1367 + $0x18] sm:$0xff]
        %s1372 = scalar_lea.vmem [#allocation10], 2
        %v1373 = vld [vmem:[%s1372] sm:$0x1]
        %v1375 = vlaneseq
        %v1376 = vshrl.u32 %v1375, 7
        %v1377 = vsub.s32 0, %v1376
        %v1378 = vrot.slane %v1373, %v1377
        %1380 = vmatprep.subr.mxu0 0.0
        %1381 = vmatpush1.msra.mxu0 %v1368
        %1382 = vmatprep.subr.mxu0 0.0
        %1383 = vmatpush1.msra.mxu0 %v1369
        %1384 = vmatprep.subr.mxu0 0.0
        %1385 = vmatpush1.msra.mxu0 %v1370
        %1386 = vmatprep.subr.mxu0 0.0
        %1387 = vmatpush1.msra.mxu0 %v1371
        %1388 = vmatprep.subr.mxu0 0.0
        %1389 = vmatpush1.msra.mxu0 0.0
        %1390 = vmatprep.subr.mxu0 0.0
        %1391 = vmatpush1.msra.mxu0 0.0
        %1392 = vmatprep.subr.mxu0 0.0
        %1393 = vmatpush1.msra.mxu0 0.0
        %1394 = vmatprep.subr.mxu0 0.0
        %1395 = vmatpush1.msra.mxu0 0.0
        %1396 = vmatprep.subr.mxu0 0.0
        %1397 = vmatpush1.msra.mxu0 0.0
        %1398 = vmatprep.subr.mxu0 0.0
        %1399 = vmatpush1.msra.mxu0 0.0
        %1400 = vmatprep.subr.mxu0 0.0
        %1401 = vmatpush1.msra.mxu0 0.0
        %1402 = vmatprep.subr.mxu0 0.0
        %1403 = vmatpush1.msra.mxu0 0.0
        %1404 = vmatprep.subr.mxu0 0.0
        %1405 = vmatpush1.msra.mxu0 0.0
        %1406 = vmatprep.subr.mxu0 0.0
        %1407 = vmatpush1.msra.mxu0 0.0
        %1408 = vmatprep.subr.mxu0 0.0
        %1409 = vmatpush1.msra.mxu0 0.0
        %1410 = vmatprep.subr.mxu0 0.0
        %1411 = vmatpush1.msra.mxu0 0.0
        %1412 = vmatprep.subr.mxu0 0.0
        %1413 = vmatpush1.msra.mxu0 0.0
        %1414 = vmatprep.subr.mxu0 0.0
        %1415 = vmatpush1.msra.mxu0 0.0
        %1416 = vmatprep.subr.mxu0 0.0
        %1417 = vmatpush1.msra.mxu0 0.0
        %1418 = vmatprep.subr.mxu0 0.0
        %1419 = vmatpush1.msra.mxu0 0.0
        %1420 = vmatprep.subr.mxu0 0.0
        %1421 = vmatpush1.msra.mxu0 0.0
        %1422 = vmatprep.subr.mxu0 0.0
        %1423 = vmatpush1.msra.mxu0 0.0
        %1424 = vmatprep.subr.mxu0 0.0
        %1425 = vmatpush1.msra.mxu0 0.0
        %1426 = vmatprep.subr.mxu0 0.0
        %1427 = vmatpush1.msra.mxu0 0.0
        %1428 = vmatprep.subr.mxu0 0.0
        %1429 = vmatpush1.msra.mxu0 0.0
        %1430 = vmatprep.subr.mxu0 0.0
        %1431 = vmatpush1.msra.mxu0 0.0
        %1432 = vmatprep.subr.mxu0 0.0
        %1433 = vmatpush1.msra.mxu0 0.0
        %1434 = vmatprep.subr.mxu0 0.0
        %1435 = vmatpush1.msra.mxu0 0.0
        %1436 = vmatprep.subr.mxu0 0.0
        %1437 = vmatpush1.msra.mxu0 0.0
        %1438 = vmatprep.subr.mxu0 0.0
        %1439 = vmatpush1.msra.mxu0 0.0
        %1440 = vmatprep.subr.mxu0 0.0
        %1441 = vmatpush1.msra.mxu0 0.0
        %1442 = vmatprep.subr.mxu0 0.0
        %1443 = vmatpush1.msra.mxu0 0.0
        %1444 = vmatprep.mubr.f32.mxu0 0.0
        %1445 = vmatmul.mubr.f32.gmra.mrb[0].mxu0 %v1212
        %v1446 = vpop.f32.mrb[0].mxu0
        %v1447 = vadd.f32 %v1378, %v1446
        %v1448 = vpop.f32.mrb[0].mxu0
        %1449 = vdwg.mxu0
        %v1451 = vsel %vm1210, %v1281, 0
        %v1454 = vsel %vm1210, %v1364, 0
        %1456 = vmatprep.subr.mxu0 0.0
        %1457 = vmatpush1.xpose.msra.mxu0 %v1454
        %1458 = vmatprep.subr.mxu0 0.0
        %1459 = vmatpush1.xpose.msra.mxu0 0.0
        %1460 = vmatprep.subr.mxu0 0.0
        %1461 = vmatpush1.xpose.msra.mxu0 0.0
        %1462 = vmatprep.subr.mxu0 0.0
        %1463 = vmatpush1.xpose.msra.mxu0 0.0
        %1464 = vmatprep.subr.mxu0 0.0
        %1465 = vmatpush1.xpose.msra.mxu0 0.0
        %1466 = vmatprep.subr.mxu0 0.0
        %1467 = vmatpush1.xpose.msra.mxu0 0.0
        %1468 = vmatprep.subr.mxu0 0.0
        %1469 = vmatpush1.xpose.msra.mxu0 0.0
        %1470 = vmatprep.subr.mxu0 0.0
        %1471 = vmatpush1.xpose.msra.mxu0 0.0
        %1472 = vmatprep.subr.mxu0 0.0
        %1473 = vmatpush1.xpose.msra.mxu0 0.0
        %1474 = vmatprep.subr.mxu0 0.0
        %1475 = vmatpush1.xpose.msra.mxu0 0.0
        %1476 = vmatprep.subr.mxu0 0.0
        %1477 = vmatpush1.xpose.msra.mxu0 0.0
        %1478 = vmatprep.subr.mxu0 0.0
        %1479 = vmatpush1.xpose.msra.mxu0 0.0
        %1480 = vmatprep.subr.mxu0 0.0
        %1481 = vmatpush1.xpose.msra.mxu0 0.0
        %1482 = vmatprep.subr.mxu0 0.0
        %1483 = vmatpush1.xpose.msra.mxu0 0.0
        %1484 = vmatprep.subr.mxu0 0.0
        %1485 = vmatpush1.xpose.msra.mxu0 0.0
        %1486 = vmatprep.subr.mxu0 0.0
        %1487 = vmatpush1.xpose.msra.mxu0 0.0
        %1488 = vmatprep.subr.mxu0 0.0
        %1489 = vmatpush1.xpose.msra.mxu0 0.0
        %1490 = vmatprep.subr.mxu0 0.0
        %1491 = vmatpush1.xpose.msra.mxu0 0.0
        %1492 = vmatprep.subr.mxu0 0.0
        %1493 = vmatpush1.xpose.msra.mxu0 0.0
        %1494 = vmatprep.subr.mxu0 0.0
        %1495 = vmatpush1.xpose.msra.mxu0 0.0
        %1496 = vmatprep.subr.mxu0 0.0
        %1497 = vmatpush1.xpose.msra.mxu0 0.0
        %1498 = vmatprep.subr.mxu0 0.0
        %1499 = vmatpush1.xpose.msra.mxu0 0.0
        %1500 = vmatprep.subr.mxu0 0.0
        %1501 = vmatpush1.xpose.msra.mxu0 0.0
        %1502 = vmatprep.subr.mxu0 0.0
        %1503 = vmatpush1.xpose.msra.mxu0 0.0
        %1504 = vmatprep.subr.mxu0 0.0
        %1505 = vmatpush1.xpose.msra.mxu0 0.0
        %1506 = vmatprep.subr.mxu0 0.0
        %1507 = vmatpush1.xpose.msra.mxu0 0.0
        %1508 = vmatprep.subr.mxu0 0.0
        %1509 = vmatpush1.xpose.msra.mxu0 0.0
        %1510 = vmatprep.subr.mxu0 0.0
        %1511 = vmatpush1.xpose.msra.mxu0 0.0
        %1512 = vmatprep.subr.mxu0 0.0
        %1513 = vmatpush1.xpose.msra.mxu0 0.0
        %1514 = vmatprep.subr.mxu0 0.0
        %1515 = vmatpush1.xpose.msra.mxu0 0.0
        %1516 = vmatprep.subr.mxu0 0.0
        %1517 = vmatpush1.xpose.msra.mxu0 0.0
        %1518 = vmatprep.subr.mxu0 0.0
        %1519 = vmatpush1.xpose.msra.mxu0 0.0
        %1520 = vmatprep.mubr.f32.mxu0 0.0
        %1521 = vmatmul.mubr.f32.gmra.mrb[0].mxu0 %v1451
        %v1522 = vpop.f32.mrb[0].mxu0
        %v1523 = vadd.f32 0.0, %v1522
        %v1524 = vpop.f32.mrb[0].mxu0
        %1525 = vdwg.mxu0
        %v1526 = vstv %s1198
        %v1527 = vmul.f32 %v1523, %v1526
        %vm1528 = vcmask 64512
        %v1529 = vsel %vm1528, %v1527, -inf
        %1530 = vmax.xlane.f32.xlu0 %v1529
        %v1531 = vpop.xlane.xlu0 %1530
        %v1532 = vsub.f32 %v1527, %v1531
        %v1533 = vmul.f32 %v1532, 1.442695
        %v1534 = vpow.pop %v1533
        %v1535 = vsel %vm1528, %v1534, 0.0
        %1536 = vadd.xlane.f32.xlu0 %v1535
        %v1537 = vpop.xlane.xlu0 %1536
        %v1538 = vrcp.pop %v1537
        %v1539 = vmul.f32 %v1534, %v1538
        %v1541 = vsel %vm1528, %v1539, 0
        %1543 = vmatprep.subr.mxu0 0.0
        %1544 = vmatpush1.msra.mxu0 %v1447
        %1545 = vmatprep.subr.mxu0 0.0
        %1546 = vmatpush1.msra.mxu0 0.0
        %1547 = vmatprep.subr.mxu0 0.0
        %1548 = vmatpush1.msra.mxu0 0.0
        %1549 = vmatprep.subr.mxu0 0.0
        %1550 = vmatpush1.msra.mxu0 0.0
        %1551 = vmatprep.subr.mxu0 0.0
        %1552 = vmatpush1.msra.mxu0 0.0
        %1553 = vmatprep.subr.mxu0 0.0
        %1554 = vmatpush1.msra.mxu0 0.0
        %1555 = vmatprep.subr.mxu0 0.0
        %1556 = vmatpush1.msra.mxu0 0.0
        %1557 = vmatprep.subr.mxu0 0.0
        %1558 = vmatpush1.msra.mxu0 0.0
        %1559 = vmatprep.subr.mxu0 0.0
        %1560 = vmatpush1.msra.mxu0 0.0
        %1561 = vmatprep.subr.mxu0 0.0
        %1562 = vmatpush1.msra.mxu0 0.0
        %1563 = vmatprep.subr.mxu0 0.0
        %1564 = vmatpush1.msra.mxu0 0.0
        %1565 = vmatprep.subr.mxu0 0.0
        %1566 = vmatpush1.msra.mxu0 0.0
        %1567 = vmatprep.subr.mxu0 0.0
        %1568 = vmatpush1.msra.mxu0 0.0
        %1569 = vmatprep.subr.mxu0 0.0
        %1570 = vmatpush1.msra.mxu0 0.0
        %1571 = vmatprep.subr.mxu0 0.0
        %1572 = vmatpush1.msra.mxu0 0.0
        %1573 = vmatprep.subr.mxu0 0.0
        %1574 = vmatpush1.msra.mxu0 0.0
        %1575 = vmatprep.subr.mxu0 0.0
        %1576 = vmatpush1.msra.mxu0 0.0
        %1577 = vmatprep.subr.mxu0 0.0
        %1578 = vmatpush1.msra.mxu0 0.0
        %1579 = vmatprep.subr.mxu0 0.0
        %1580 = vmatpush1.msra.mxu0 0.0
        %1581 = vmatprep.subr.mxu0 0.0
        %1582 = vmatpush1.msra.mxu0 0.0
        %1583 = vmatprep.subr.mxu0 0.0
        %1584 = vmatpush1.msra.mxu0 0.0
        %1585 = vmatprep.subr.mxu0 0.0
        %1586 = vmatpush1.msra.mxu0 0.0
        %1587 = vmatprep.subr.mxu0 0.0
        %1588 = vmatpush1.msra.mxu0 0.0
        %1589 = vmatprep.subr.mxu0 0.0
        %1590 = vmatpush1.msra.mxu0 0.0
        %1591 = vmatprep.subr.mxu0 0.0
        %1592 = vmatpush1.msra.mxu0 0.0
        %1593 = vmatprep.subr.mxu0 0.0
        %1594 = vmatpush1.msra.mxu0 0.0
        %1595 = vmatprep.subr.mxu0 0.0
        %1596 = vmatpush1.msra.mxu0 0.0
        %1597 = vmatprep.subr.mxu0 0.0
        %1598 = vmatpush1.msra.mxu0 0.0
        %1599 = vmatprep.subr.mxu0 0.0
        %1600 = vmatpush1.msra.mxu0 0.0
        %1601 = vmatprep.subr.mxu0 0.0
        %1602 = vmatpush1.msra.mxu0 0.0
        %1603 = vmatprep.subr.mxu0 0.0
        %1604 = vmatpush1.msra.mxu0 0.0
        %1605 = vmatprep.subr.mxu0 0.0
        %1606 = vmatpush1.msra.mxu0 0.0
        %1607 = vmatprep.mubr.f32.mxu0 0.0
        %1608 = vmatmul.mubr.f32.gmra.mrb[0].mxu0 %v1541
        %v1609 = vpop.f32.mrb[0].mxu0
        %v1610 = vadd.f32 0.0, %v1609
        %v1611 = vpop.f32.mrb[0].mxu0
        %1612 = vdwg.mxu0
        %v1613 = vld [vmem:[%s21] sm:$0xff]
        %v1614 = vld [vmem:[%s21 + $0x8] sm:$0xff]
        %v1615 = vld [vmem:[%s21 + $0x10] sm:$0xff]
        %v1616 = vld [vmem:[%s21 + $0x18] sm:$0xff]
        %v1617 = vld [vmem:[#allocation11] sm:$0x1]
        %v1619 = vlaneseq
        %v1620 = vshrl.u32 %v1619, 7
        %v1621 = vsub.s32 0, %v1620
        %v1622 = vrot.slane %v1617, %v1621
        %v1625 = vsel %vm1210, %v1610, 0
        %1627 = vmatprep.subr.mxu0 0.0
        %1628 = vmatpush1.msra.mxu0 %v1613
        %1629 = vmatprep.subr.mxu0 0.0
        %1630 = vmatpush1.msra.mxu0 %v1614
        %1631 = vmatprep.subr.mxu0 0.0
        %1632 = vmatpush1.msra.mxu0 %v1615
        %1633 = vmatprep.subr.mxu0 0.0
        %1634 = vmatpush1.msra.mxu0 %v1616
        %1635 = vmatprep.subr.mxu0 0.0
        %1636 = vmatpush1.msra.mxu0 0.0
        %1637 = vmatprep.subr.mxu0 0.0
        %1638 = vmatpush1.msra.mxu0 0.0
        %1639 = vmatprep.subr.mxu0 0.0
        %1640 = vmatpush1.msra.mxu0 0.0
        %1641 = vmatprep.subr.mxu0 0.0
        %1642 = vmatpush1.msra.mxu0 0.0
        %1643 = vmatprep.subr.mxu0 0.0
        %1644 = vmatpush1.msra.mxu0 0.0
        %1645 = vmatprep.subr.mxu0 0.0
        %1646 = vmatpush1.msra.mxu0 0.0
        %1647 = vmatprep.subr.mxu0 0.0
        %1648 = vmatpush1.msra.mxu0 0.0
        %1649 = vmatprep.subr.mxu0 0.0
        %1650 = vmatpush1.msra.mxu0 0.0
        %1651 = vmatprep.subr.mxu0 0.0
        %1652 = vmatpush1.msra.mxu0 0.0
        %1653 = vmatprep.subr.mxu0 0.0
        %1654 = vmatpush1.msra.mxu0 0.0
        %1655 = vmatprep.subr.mxu0 0.0
        %1656 = vmatpush1.msra.mxu0 0.0
        %1657 = vmatprep.subr.mxu0 0.0
        %1658 = vmatpush1.msra.mxu0 0.0
        %1659 = vmatprep.subr.mxu0 0.0
        %1660 = vmatpush1.msra.mxu0 0.0
        %1661 = vmatprep.subr.mxu0 0.0
        %1662 = vmatpush1.msra.mxu0 0.0
        %1663 = vmatprep.subr.mxu0 0.0
        %1664 = vmatpush1.msra.mxu0 0.0
        %1665 = vmatprep.subr.mxu0 0.0
        %1666 = vmatpush1.msra.mxu0 0.0
        %1667 = vmatprep.subr.mxu0 0.0
        %1668 = vmatpush1.msra.mxu0 0.0
        %1669 = vmatprep.subr.mxu0 0.0
        %1670 = vmatpush1.msra.mxu0 0.0
        %1671 = vmatprep.subr.mxu0 0.0
        %1672 = vmatpush1.msra.mxu0 0.0
        %1673 = vmatprep.subr.mxu0 0.0
        %1674 = vmatpush1.msra.mxu0 0.0
        %1675 = vmatprep.subr.mxu0 0.0
        %1676 = vmatpush1.msra.mxu0 0.0
        %1677 = vmatprep.subr.mxu0 0.0
        %1678 = vmatpush1.msra.mxu0 0.0
        %1679 = vmatprep.subr.mxu0 0.0
        %1680 = vmatpush1.msra.mxu0 0.0
        %1681 = vmatprep.subr.mxu0 0.0
        %1682 = vmatpush1.msra.mxu0 0.0
        %1683 = vmatprep.subr.mxu0 0.0
        %1684 = vmatpush1.msra.mxu0 0.0
        %1685 = vmatprep.subr.mxu0 0.0
        %1686 = vmatpush1.msra.mxu0 0.0
        %1687 = vmatprep.subr.mxu0 0.0
        %1688 = vmatpush1.msra.mxu0 0.0
        %1689 = vmatprep.subr.mxu0 0.0
        %1690 = vmatpush1.msra.mxu0 0.0
        %1691 = vmatprep.mubr.f32.mxu0 0.0
        %1692 = vmatmul.mubr.f32.gmra.mrb[0].mxu0 %v1625
        %v1693 = vpop.f32.mrb[0].mxu0
        %v1694 = vadd.f32 %v1622, %v1693
        %v1695 = vpop.f32.mrb[0].mxu0
        %1696 = vdwg.mxu0
        %v1697 = vadd.f32 %v1197, %v1694
        %v1698 = vsel %vm1210, %v1697, 0.0
        %1699 = vadd.xlane.f32.xlu0 %v1698
        %v1700 = vpop.xlane.xlu0 %1699
        %v1701 = vrcp.pop 32.0
        %v1702 = vmul.f32 %v1700, %v1701
        %v1703 = vsub.f32 %v1697, %v1702
        %v1704 = vmul.f32 %v1703, %v1703
        %v1705 = vsel %vm1210, %v1704, 0.0
        %1706 = vadd.xlane.f32.xlu0 %v1705
        %v1707 = vpop.xlane.xlu0 %1706
        %v1708 = vmul.f32 %v1707, %v1701
        %v1709 = vadd.f32 %v1708, 1e-05
        %v1710 = vrsqrt.pop %v1709
        %v1711 = vmul.f32 %v1703, %v1710
        %v1712 = vld [vmem:[%s25] sm:$0x1]
        %v1714 = vlaneseq
        %v1715 = vshrl.u32 %v1714, 7
        %v1716 = vsub.s32 0, %v1715
        %v1717 = vrot.slane %v1712, %v1716
        %v1719 = vmul.f32 %v1711, %v1717
        %v1720 = vld [vmem:[%s27] sm:$0x1]
        %v1722 = vlaneseq
        %v1723 = vshrl.u32 %v1722, 7
        %v1724 = vsub.s32 0, %v1723
        %v1725 = vrot.slane %v1720, %v1724
        %v1727 = vadd.f32 %v1719, %v1725
        %v1728 = vld [vmem:[%s29] sm:$0xff]
        %v1729 = vld [vmem:[%s29 + $0x8] sm:$0xff]
        %v1730 = vld [vmem:[%s29 + $0x10] sm:$0xff]
        %v1731 = vld [vmem:[%s29 + $0x18] sm:$0xff]
        %v1732 = vld [vmem:[#allocation13] sm:$0x1]
        %v1734 = vlaneseq
        %v1735 = vshrl.u32 %v1734, 7
        %v1736 = vsub.s32 0, %v1735
        %v1737 = vrot.slane %v1732, %v1736
        %v1740 = vsel %vm1210, %v1727, 0
        %1742 = vmatprep.subr.mxu0 0.0
        %1743 = vmatpush1.msra.mxu0 %v1728
        %1744 = vmatprep.subr.mxu0 0.0
        %1745 = vmatpush1.msra.mxu0 %v1729
        %1746 = vmatprep.subr.mxu0 0.0
        %1747 = vmatpush1.msra.mxu0 %v1730
        %1748 = vmatprep.subr.mxu0 0.0
        %1749 = vmatpush1.msra.mxu0 %v1731
        %1750 = vmatprep.subr.mxu0 0.0
        %1751 = vmatpush1.msra.mxu0 0.0
        %1752 = vmatprep.subr.mxu0 0.0
        %1753 = vmatpush1.msra.mxu0 0.0
        %1754 = vmatprep.subr.mxu0 0.0
        %1755 = vmatpush1.msra.mxu0 0.0
        %1756 = vmatprep.subr.mxu0 0.0
        %1757 = vmatpush1.msra.mxu0 0.0
        %1758 = vmatprep.subr.mxu0 0.0
        %1759 = vmatpush1.msra.mxu0 0.0
        %1760 = vmatprep.subr.mxu0 0.0
        %1761 = vmatpush1.msra.mxu0 0.0
        %1762 = vmatprep.subr.mxu0 0.0
        %1763 = vmatpush1.msra.mxu0 0.0
        %1764 = vmatprep.subr.mxu0 0.0
        %1765 = vmatpush1.msra.mxu0 0.0
        %1766 = vmatprep.subr.mxu0 0.0
        %1767 = vmatpush1.msra.mxu0 0.0
        %1768 = vmatprep.subr.mxu0 0.0
        %1769 = vmatpush1.msra.mxu0 0.0
        %1770 = vmatprep.subr.mxu0 0.0
        %1771 = vmatpush1.msra.mxu0 0.0
        %1772 = vmatprep.subr.mxu0 0.0
        %1773 = vmatpush1.msra.mxu0 0.0
        %1774 = vmatprep.subr.mxu0 0.0
        %1775 = vmatpush1.msra.mxu0 0.0
        %1776 = vmatprep.subr.mxu0 0.0
        %1777 = vmatpush1.msra.mxu0 0.0
        %1778 = vmatprep.subr.mxu0 0.0
        %1779 = vmatpush1.msra.mxu0 0.0
        %1780 = vmatprep.subr.mxu0 0.0
        %1781 = vmatpush1.msra.mxu0 0.0
        %1782 = vmatprep.subr.mxu0 0.0
        %1783 = vmatpush1.msra.mxu0 0.0
        %1784 = vmatprep.subr.mxu0 0.0
        %1785 = vmatpush1.msra.mxu0 0.0
        %1786 = vmatprep.subr.mxu0 0.0
        %1787 = vmatpush1.msra.mxu0 0.0
        %1788 = vmatprep.subr.mxu0 0.0
        %1789 = vmatpush1.msra.mxu0 0.0
        %1790 = vmatprep.subr.mxu0 0.0
        %1791 = vmatpush1.msra.mxu0 0.0
        %1792 = vmatprep.subr.mxu0 0.0
        %1793 = vmatpush1.msra.mxu0 0.0
        %1794 = vmatprep.subr.mxu0 0.0
        %1795 = vmatpush1.msra.mxu0 0.0
        %1796 = vmatprep.subr.mxu0 0.0
        %1797 = vmatpush1.msra.mxu0 0.0
        %1798 = vmatprep.subr.mxu0 0.0
        %1799 = vmatpush1.msra.mxu0 0.0
        %1800 = vmatprep.subr.mxu0 0.0
        %1801 = vmatpush1.msra.mxu0 0.0
        %1802 = vmatprep.subr.mxu0 0.0
        %1803 = vmatpush1.msra.mxu0 0.0
        %1804 = vmatprep.subr.mxu0 0.0
        %1805 = vmatpush1.msra.mxu0 0.0
        %1806 = vmatprep.mubr.f32.mxu0 0.0
        %1807 = vmatmul.mubr.f32.gmra.mrb[0].mxu0 %v1740
        %v1808 = vpop.f32.mrb[0].mxu0
        %v1809 = vadd.f32 %v1737, %v1808
        %v1810 = vpop.f32.mrb[0].mxu0
        %1811 = vdwg.mxu0
        %v1812 = vmax.f32 %v1809, 0.0
        %v1813 = vld [vmem:[#allocation14] sm:$0xff]
        %v1814 = vld [vmem:[%s35] sm:$0x1]
        %v1816 = vlaneseq
        %v1817 = vshrl.u32 %v1816, 7
        %v1818 = vsub.s32 0, %v1817
        %v1819 = vrot.slane %v1814, %v1818
        %v1822 = vsel %vm1528, %v1812, 0
        %1824 = vmatprep.subr.mxu0 0.0
        %1825 = vmatpush1.msra.mxu0 %v1813
        %1826 = vmatprep.subr.mxu0 0.0
        %1827 = vmatpush1.msra.mxu0 0.0
        %1828 = vmatprep.subr.mxu0 0.0
        %1829 = vmatpush1.msra.mxu0 0.0
        %1830 = vmatprep.subr.mxu0 0.0
        %1831 = vmatpush1.msra.mxu0 0.0
        %1832 = vmatprep.subr.mxu0 0.0
        %1833 = vmatpush1.msra.mxu0 0.0
        %1834 = vmatprep.subr.mxu0 0.0
        %1835 = vmatpush1.msra.mxu0 0.0
        %1836 = vmatprep.subr.mxu0 0.0
        %1837 = vmatpush1.msra.mxu0 0.0
        %1838 = vmatprep.subr.mxu0 0.0
        %1839 = vmatpush1.msra.mxu0 0.0
        %1840 = vmatprep.subr.mxu0 0.0
        %1841 = vmatpush1.msra.mxu0 0.0
        %1842 = vmatprep.subr.mxu0 0.0
        %1843 = vmatpush1.msra.mxu0 0.0
        %1844 = vmatprep.subr.mxu0 0.0
        %1845 = vmatpush1.msra.mxu0 0.0
        %1846 = vmatprep.subr.mxu0 0.0
        %1847 = vmatpush1.msra.mxu0 0.0
        %1848 = vmatprep.subr.mxu0 0.0
        %1849 = vmatpush1.msra.mxu0 0.0
        %1850 = vmatprep.subr.mxu0 0.0
        %1851 = vmatpush1.msra.mxu0 0.0
        %1852 = vmatprep.subr.mxu0 0.0
        %1853 = vmatpush1.msra.mxu0 0.0
        %1854 = vmatprep.subr.mxu0 0.0
        %1855 = vmatpush1.msra.mxu0 0.0
        %1856 = vmatprep.subr.mxu0 0.0
        %1857 = vmatpush1.msra.mxu0 0.0
        %1858 = vmatprep.subr.mxu0 0.0
        %1859 = vmatpush1.msra.mxu0 0.0
        %1860 = vmatprep.subr.mxu0 0.0
        %1861 = vmatpush1.msra.mxu0 0.0
        %1862 = vmatprep.subr.mxu0 0.0
        %1863 = vmatpush1.msra.mxu0 0.0
        %1864 = vmatprep.subr.mxu0 0.0
        %1865 = vmatpush1.msra.mxu0 0.0
        %1866 = vmatprep.subr.mxu0 0.0
        %1867 = vmatpush1.msra.mxu0 0.0
        %1868 = vmatprep.subr.mxu0 0.0
        %1869 = vmatpush1.msra.mxu0 0.0
        %1870 = vmatprep.subr.mxu0 0.0
        %1871 = vmatpush1.msra.mxu0 0.0
        %1872 = vmatprep.subr.mxu0 0.0
        %1873 = vmatpush1.msra.mxu0 0.0
        %1874 = vmatprep.subr.mxu0 0.0
        %1875 = vmatpush1.msra.mxu0 0.0
        %1876 = vmatprep.subr.mxu0 0.0
        %1877 = vmatpush1.msra.mxu0 0.0
        %1878 = vmatprep.subr.mxu0 0.0
        %1879 = vmatpush1.msra.mxu0 0.0
        %1880 = vmatprep.subr.mxu0 0.0
        %1881 = vmatpush1.msra.mxu0 0.0
        %1882 = vmatprep.subr.mxu0 0.0
        %1883 = vmatpush1.msra.mxu0 0.0
        %1884 = vmatprep.subr.mxu0 0.0
        %1885 = vmatpush1.msra.mxu0 0.0
        %1886 = vmatprep.subr.mxu0 0.0
        %1887 = vmatpush1.msra.mxu0 0.0
        %1888 = vmatprep.mubr.f32.mxu0 0.0
        %1889 = vmatmul.mubr.f32.gmra.mrb[0].mxu0 %v1822
        %v1890 = vpop.f32.mrb[0].mxu0
        %v1891 = vadd.f32 %v1819, %v1890
        %v1892 = vpop.f32.mrb[0].mxu0
        %1893 = vdwg.mxu0
        %v1894 = vadd.f32 %v1727, %v1891
        %v1895 = vsel %vm1210, %v1894, 0.0
        %1896 = vadd.xlane.f32.xlu0 %v1895
        %v1897 = vpop.xlane.xlu0 %1896
        %v1898 = vmul.f32 %v1897, %v1701
        %v1899 = vsub.f32 %v1894, %v1898
        %v1900 = vmul.f32 %v1899, %v1899
        %v1901 = vsel %vm1210, %v1900, 0.0
        %1902 = vadd.xlane.f32.xlu0 %v1901
        %v1903 = vpop.xlane.xlu0 %1902
        %v1904 = vmul.f32 %v1903, %v1701
        %v1905 = vadd.f32 %v1904, 1e-05
        %v1906 = vrsqrt.pop %v1905
        %v1907 = vmul.f32 %v1899, %v1906
        %v1908 = vld [vmem:[%s37] sm:$0x1]
        %v1910 = vlaneseq
        %v1911 = vshrl.u32 %v1910, 7
        %v1912 = vsub.s32 0, %v1911
        %v1913 = vrot.slane %v1908, %v1912
        %v1915 = vmul.f32 %v1907, %v1913
        %v1916 = vld [vmem:[%s39] sm:$0x1]
        %v1918 = vlaneseq
        %v1919 = vshrl.u32 %v1918, 7
        %v1920 = vsub.s32 0, %v1919
        %v1921 = vrot.slane %v1916, %v1920
        %v1923 = vadd.f32 %v1915, %v1921
        %v1924 = vadd.f32 %v1923, %v1197
        %s1925 = scalar_lea.vmem [#allocation8], 96
        %v1926 = vld [vmem:[%s1925] sm:$0xff]
        %v1927 = vld [vmem:[%s1925 + $0x8] sm:$0xff]
        %v1928 = vld [vmem:[%s1925 + $0x10] sm:$0xff]
        %v1929 = vld [vmem:[%s1925 + $0x18] sm:$0xff]
        %s1930 = scalar_lea.vmem [#allocation10], 3
        %v1931 = vld [vmem:[%s1930] sm:$0x1]
        %v1933 = vlaneseq
        %v1934 = vshrl.u32 %v1933, 7
        %v1935 = vsub.s32 0, %v1934
        %v1936 = vrot.slane %v1931, %v1935
        %v1939 = vsel %vm1210, %v1924, 0
        %1941 = vmatprep.subr.mxu0 0.0
        %1942 = vmatpush1.msra.mxu0 %v1926
        %1943 = vmatprep.subr.mxu0 0.0
        %1944 = vmatpush1.msra.mxu0 %v1927
        %1945 = vmatprep.subr.mxu0 0.0
        %1946 = vmatpush1.msra.mxu0 %v1928
        %1947 = vmatprep.subr.mxu0 0.0
        %1948 = vmatpush1.msra.mxu0 %v1929
        %1949 = vmatprep.subr.mxu0 0.0
        %1950 = vmatpush1.msra.mxu0 0.0
        %1951 = vmatprep.subr.mxu0 0.0
        %1952 = vmatpush1.msra.mxu0 0.0
        %1953 = vmatprep.subr.mxu0 0.0
        %1954 = vmatpush1.msra.mxu0 0.0
        %1955 = vmatprep.subr.mxu0 0.0
        %1956 = vmatpush1.msra.mxu0 0.0
        %1957 = vmatprep.subr.mxu0 0.0
        %1958 = vmatpush1.msra.mxu0 0.0
        %1959 = vmatprep.subr.mxu0 0.0
        %1960 = vmatpush1.msra.mxu0 0.0
        %1961 = vmatprep.subr.mxu0 0.0
        %1962 = vmatpush1.msra.mxu0 0.0
        %1963 = vmatprep.subr.mxu0 0.0
        %1964 = vmatpush1.msra.mxu0 0.0
        %1965 = vmatprep.subr.mxu0 0.0
        %1966 = vmatpush1.msra.mxu0 0.0
        %1967 = vmatprep.subr.mxu0 0.0
        %1968 = vmatpush1.msra.mxu0 0.0
        %1969 = vmatprep.subr.mxu0 0.0
        %1970 = vmatpush1.msra.mxu0 0.0
        %1971 = vmatprep.subr.mxu0 0.0
        %1972 = vmatpush1.msra.mxu0 0.0
        %1973 = vmatprep.subr.mxu0 0.0
        %1974 = vmatpush1.msra.mxu0 0.0
        %1975 = vmatprep.subr.mxu0 0.0
        %1976 = vmatpush1.msra.mxu0 0.0
        %1977 = vmatprep.subr.mxu0 0.0
        %1978 = vmatpush1.msra.mxu0 0.0
        %1979 = vmatprep.subr.mxu0 0.0
        %1980 = vmatpush1.msra.mxu0 0.0
        %1981 = vmatprep.subr.mxu0 0.0
        %1982 = vmatpush1.msra.mxu0 0.0
        %1983 = vmatprep.subr.mxu0 0.0
        %1984 = vmatpush1.msra.mxu0 0.0
        %1985 = vmatprep.subr.mxu0 0.0
        %1986 = vmatpush1.msra.mxu0 0.0
        %1987 = vmatprep.subr.mxu0 0.0
        %1988 = vmatpush1.msra.mxu0 0.0
        %1989 = vmatprep.subr.mxu0 0.0
        %1990 = vmatpush1.msra.mxu0 0.0
        %1991 = vmatprep.subr.mxu0 0.0
        %1992 = vmatpush1.msra.mxu0 0.0
        %1993 = vmatprep.subr.mxu0 0.0
        %1994 = vmatpush1.msra.mxu0 0.0
        %1995 = vmatprep.subr.mxu0 0.0
        %1996 = vmatpush1.msra.mxu0 0.0
        %1997 = vmatprep.subr.mxu0 0.0
        %1998 = vmatpush1.msra.mxu0 0.0
        %1999 = vmatprep.subr.mxu0 0.0
        %2000 = vmatpush1.msra.mxu0 0.0
        %2001 = vmatprep.subr.mxu0 0.0
        %2002 = vmatpush1.msra.mxu0 0.0
        %2003 = vmatprep.subr.mxu0 0.0
        %2004 = vmatpush1.msra.mxu0 0.0
        %2005 = vmatprep.mubr.f32.mxu0 0.0
        %2006 = vmatmul.mubr.f32.gmra.mrb[0].mxu0 %v1939
        %v2007 = vpop.f32.mrb[0].mxu0
        %v2008 = vadd.f32 %v1936, %v2007
        %v2009 = vpop.f32.mrb[0].mxu0
        %2010 = vdwg.mxu0
        %s2011 = scalar_lea.vmem [#allocation8], 128
        %v2012 = vld [vmem:[%s2011] sm:$0xff]
        %v2013 = vld [vmem:[%s2011 + $0x8] sm:$0xff]
        %v2014 = vld [vmem:[%s2011 + $0x10] sm:$0xff]
        %v2015 = vld [vmem:[%s2011 + $0x18] sm:$0xff]
        %s2016 = scalar_lea.vmem [#allocation10], 4
        %v2017 = vld [vmem:[%s2016] sm:$0x1]
        %v2019 = vlaneseq
        %v2020 = vshrl.u32 %v2019, 7
        %v2021 = vsub.s32 0, %v2020
        %v2022 = vrot.slane %v2017, %v2021
        %2024 = vmatprep.subr.mxu0 0.0
        %2025 = vmatpush1.msra.mxu0 %v2012
        %2026 = vmatprep.subr.mxu0 0.0
        %2027 = vmatpush1.msra.mxu0 %v2013
        %2028 = vmatprep.subr.mxu0 0.0
        %2029 = vmatpush1.msra.mxu0 %v2014
        %2030 = vmatprep.subr.mxu0 0.0
        %2031 = vmatpush1.msra.mxu0 %v2015
        %2032 = vmatprep.subr.mxu0 0.0
        %2033 = vmatpush1.msra.mxu0 0.0
        %2034 = vmatprep.subr.mxu0 0.0
        %2035 = vmatpush1.msra.mxu0 0.0
        %2036 = vmatprep.subr.mxu0 0.0
        %2037 = vmatpush1.msra.mxu0 0.0
        %2038 = vmatprep.subr.mxu0 0.0
        %2039 = vmatpush1.msra.mxu0 0.0
        %2040 = vmatprep.subr.mxu0 0.0
        %2041 = vmatpush1.msra.mxu0 0.0
        %2042 = vmatprep.subr.mxu0 0.0
        %2043 = vmatpush1.msra.mxu0 0.0
        %2044 = vmatprep.subr.mxu0 0.0
        %2045 = vmatpush1.msra.mxu0 0.0
        %2046 = vmatprep.subr.mxu0 0.0
        %2047 = vmatpush1.msra.mxu0 0.0
        %2048 = vmatprep.subr.mxu0 0.0
        %2049 = vmatpush1.msra.mxu0 0.0
        %2050 = vmatprep.subr.mxu0 0.0
        %2051 = vmatpush1.msra.mxu0 0.0
        %2052 = vmatprep.subr.mxu0 0.0
        %2053 = vmatpush1.msra.mxu0 0.0
        %2054 = vmatprep.subr.mxu0 0.0
        %2055 = vmatpush1.msra.mxu0 0.0
        %2056 = vmatprep.subr.mxu0 0.0
        %2057 = vmatpush1.msra.mxu0 0.0
        %2058 = vmatprep.subr.mxu0 0.0
        %2059 = vmatpush1.msra.mxu0 0.0
        %2060 = vmatprep.subr.mxu0 0.0
        %2061 = vmatpush1.msra.mxu0 0.0
        %2062 = vmatprep.subr.mxu0 0.0
        %2063 = vmatpush1.msra.mxu0 0.0
        %2064 = vmatprep.subr.mxu0 0.0
        %2065 = vmatpush1.msra.mxu0 0.0
        %2066 = vmatprep.subr.mxu0 0.0
        %2067 = vmatpush1.msra.mxu0 0.0
        %2068 = vmatprep.subr.mxu0 0.0
        %2069 = vmatpush1.msra.mxu0 0.0
        %2070 = vmatprep.subr.mxu0 0.0
        %2071 = vmatpush1.msra.mxu0 0.0
        %2072 = vmatprep.subr.mxu0 0.0
        %2073 = vmatpush1.msra.mxu0 0.0
        %2074 = vmatprep.subr.mxu0 0.0
        %2075 = vmatpush1.msra.mxu0 0.0
        %2076 = vmatprep.subr.mxu0 0.0
        %2077 = vmatpush1.msra.mxu0 0.0
        %2078 = vmatprep.subr.mxu0 0.0
        %2079 = vmatpush1.msra.mxu0 0.0
        %2080 = vmatprep.subr.mxu0 0.0
        %2081 = vmatpush1.msra.mxu0 0.0
        %2082 = vmatprep.subr.mxu0 0.0
        %2083 = vmatpush1.msra.mxu0 0.0
        %2084 = vmatprep.subr.mxu0 0.0
        %2085 = vmatpush1.msra.mxu0 0.0
        %2086 = vmatprep.subr.mxu0 0.0
        %2087 = vmatpush1.msra.mxu0 0.0
        %2088 = vmatprep.mubr.f32.mxu0 0.0
        %2089 = vmatmul.mubr.f32.gmra.mrb[0].mxu0 %v1939
        %v2090 = vpop.f32.mrb[0].mxu0
        %v2091 = vadd.f32 %v2022, %v2090
        %v2092 = vpop.f32.mrb[0].mxu0
        %2093 = vdwg.mxu0
        %s2094 = scalar_lea.vmem [#allocation8], 160
        %v2095 = vld [vmem:[%s2094] sm:$0xff]
        %v2096 = vld [vmem:[%s2094 + $0x8] sm:$0xff]
        %v2097 = vld [vmem:[%s2094 + $0x10] sm:$0xff]
        %v2098 = vld [vmem:[%s2094 + $0x18] sm:$0xff]
        %s2099 = scalar_lea.vmem [#allocation10], 5
        %v2100 = vld [vmem:[%s2099] sm:$0x1]
        %v2102 = vlaneseq
        %v2103 = vshrl.u32 %v2102, 7
        %v2104 = vsub.s32 0, %v2103
        %v2105 = vrot.slane %v2100, %v2104
        %2107 = vmatprep.subr.mxu0 0.0
        %2108 = vmatpush1.msra.mxu0 %v2095
        %2109 = vmatprep.subr.mxu0 0.0
        %2110 = vmatpush1.msra.mxu0 %v2096
        %2111 = vmatprep.subr.mxu0 0.0
        %2112 = vmatpush1.msra.mxu0 %v2097
        %2113 = vmatprep.subr.mxu0 0.0
        %2114 = vmatpush1.msra.mxu0 %v2098
        %2115 = vmatprep.subr.mxu0 0.0
        %2116 = vmatpush1.msra.mxu0 0.0
        %2117 = vmatprep.subr.mxu0 0.0
        %2118 = vmatpush1.msra.mxu0 0.0
        %2119 = vmatprep.subr.mxu0 0.0
        %2120 = vmatpush1.msra.mxu0 0.0
        %2121 = vmatprep.subr.mxu0 0.0
        %2122 = vmatpush1.msra.mxu0 0.0
        %2123 = vmatprep.subr.mxu0 0.0
        %2124 = vmatpush1.msra.mxu0 0.0
        %2125 = vmatprep.subr.mxu0 0.0
        %2126 = vmatpush1.msra.mxu0 0.0
        %2127 = vmatprep.subr.mxu0 0.0
        %2128 = vmatpush1.msra.mxu0 0.0
        %2129 = vmatprep.subr.mxu0 0.0
        %2130 = vmatpush1.msra.mxu0 0.0
        %2131 = vmatprep.subr.mxu0 0.0
        %2132 = vmatpush1.msra.mxu0 0.0
        %2133 = vmatprep.subr.mxu0 0.0
        %2134 = vmatpush1.msra.mxu0 0.0
        %2135 = vmatprep.subr.mxu0 0.0
        %2136 = vmatpush1.msra.mxu0 0.0
        %2137 = vmatprep.subr.mxu0 0.0
        %2138 = vmatpush1.msra.mxu0 0.0
        %2139 = vmatprep.subr.mxu0 0.0
        %2140 = vmatpush1.msra.mxu0 0.0
        %2141 = vmatprep.subr.mxu0 0.0
        %2142 = vmatpush1.msra.mxu0 0.0
        %2143 = vmatprep.subr.mxu0 0.0
        %2144 = vmatpush1.msra.mxu0 0.0
        %2145 = vmatprep.subr.mxu0 0.0
        %2146 = vmatpush1.msra.mxu0 0.0
        %2147 = vmatprep.subr.mxu0 0.0
        %2148 = vmatpush1.msra.mxu0 0.0
        %2149 = vmatprep.subr.mxu0 0.0
        %2150 = vmatpush1.msra.mxu0 0.0
        %2151 = vmatprep.subr.mxu0 0.0
        %2152 = vmatpush1.msra.mxu0 0.0
        %2153 = vmatprep.subr.mxu0 0.0
        %2154 = vmatpush1.msra.mxu0 0.0
        %2155 = vmatprep.subr.mxu0 0.0
        %2156 = vmatpush1.msra.mxu0 0.0
        %2157 = vmatprep.subr.mxu0 0.0
        %2158 = vmatpush1.msra.mxu0 0.0
        %2159 = vmatprep.subr.mxu0 0.0
        %2160 = vmatpush1.msra.mxu0 0.0
        %2161 = vmatprep.subr.mxu0 0.0
        %2162 = vmatpush1.msra.mxu0 0.0
        %2163 = vmatprep.subr.mxu0 0.0
        %2164 = vmatpush1.msra.mxu0 0.0
        %2165 = vmatprep.subr.mxu0 0.0
        %2166 = vmatpush1.msra.mxu0 0.0
        %2167 = vmatprep.subr.mxu0 0.0
        %2168 = vmatpush1.msra.mxu0 0.0
        %2169 = vmatprep.subr.mxu0 0.0
        %2170 = vmatpush1.msra.mxu0 0.0
        %2171 = vmatprep.mubr.f32.mxu0 0.0
        %2172 = vmatmul.mubr.f32.gmra.mrb[0].mxu0 %v1939
        %v2173 = vpop.f32.mrb[0].mxu0
        %v2174 = vadd.f32 %v2105, %v2173
        %v2175 = vpop.f32.mrb[0].mxu0
        %2176 = vdwg.mxu0
        %v2178 = vsel %vm1210, %v2008, 0
        %v2181 = vsel %vm1210, %v2091, 0
        %2183 = vmatprep.subr.mxu0 0.0
        %2184 = vmatpush1.xpose.msra.mxu0 %v2181
        %2185 = vmatprep.subr.mxu0 0.0
        %2186 = vmatpush1.xpose.msra.mxu0 0.0
        %2187 = vmatprep.subr.mxu0 0.0
        %2188 = vmatpush1.xpose.msra.mxu0 0.0
        %2189 = vmatprep.subr.mxu0 0.0
        %2190 = vmatpush1.xpose.msra.mxu0 0.0
        %2191 = vmatprep.subr.mxu0 0.0
        %2192 = vmatpush1.xpose.msra.mxu0 0.0
        %2193 = vmatprep.subr.mxu0 0.0
        %2194 = vmatpush1.xpose.msra.mxu0 0.0
        %2195 = vmatprep.subr.mxu0 0.0
        %2196 = vmatpush1.xpose.msra.mxu0 0.0
        %2197 = vmatprep.subr.mxu0 0.0
        %2198 = vmatpush1.xpose.msra.mxu0 0.0
        %2199 = vmatprep.subr.mxu0 0.0
        %2200 = vmatpush1.xpose.msra.mxu0 0.0
        %2201 = vmatprep.subr.mxu0 0.0
        %2202 = vmatpush1.xpose.msra.mxu0 0.0
        %2203 = vmatprep.subr.mxu0 0.0
        %2204 = vmatpush1.xpose.msra.mxu0 0.0
        %2205 = vmatprep.subr.mxu0 0.0
        %2206 = vmatpush1.xpose.msra.mxu0 0.0
        %2207 = vmatprep.subr.mxu0 0.0
        %2208 = vmatpush1.xpose.msra.mxu0 0.0
        %2209 = vmatprep.subr.mxu0 0.0
        %2210 = vmatpush1.xpose.msra.mxu0 0.0
        %2211 = vmatprep.subr.mxu0 0.0
        %2212 = vmatpush1.xpose.msra.mxu0 0.0
        %2213 = vmatprep.subr.mxu0 0.0
        %2214 = vmatpush1.xpose.msra.mxu0 0.0
        %2215 = vmatprep.subr.mxu0 0.0
        %2216 = vmatpush1.xpose.msra.mxu0 0.0
        %2217 = vmatprep.subr.mxu0 0.0
        %2218 = vmatpush1.xpose.msra.mxu0 0.0
        %2219 = vmatprep.subr.mxu0 0.0
        %2220 = vmatpush1.xpose.msra.mxu0 0.0
        %2221 = vmatprep.subr.mxu0 0.0
        %2222 = vmatpush1.xpose.msra.mxu0 0.0
        %2223 = vmatprep.subr.mxu0 0.0
        %2224 = vmatpush1.xpose.msra.mxu0 0.0
        %2225 = vmatprep.subr.mxu0 0.0
        %2226 = vmatpush1.xpose.msra.mxu0 0.0
        %2227 = vmatprep.subr.mxu0 0.0
        %2228 = vmatpush1.xpose.msra.mxu0 0.0
        %2229 = vmatprep.subr.mxu0 0.0
        %2230 = vmatpush1.xpose.msra.mxu0 0.0
        %2231 = vmatprep.subr.mxu0 0.0
        %2232 = vmatpush1.xpose.msra.mxu0 0.0
        %2233 = vmatprep.subr.mxu0 0.0
        %2234 = vmatpush1.xpose.msra.mxu0 0.0
        %2235 = vmatprep.subr.mxu0 0.0
        %2236 = vmatpush1.xpose.msra.mxu0 0.0
        %2237 = vmatprep.subr.mxu0 0.0
        %2238 = vmatpush1.xpose.msra.mxu0 0.0
        %2239 = vmatprep.subr.mxu0 0.0
        %2240 = vmatpush1.xpose.msra.mxu0 0.0
        %2241 = vmatprep.subr.mxu0 0.0
        %2242 = vmatpush1.xpose.msra.mxu0 0.0
        %2243 = vmatprep.subr.mxu0 0.0
        %2244 = vmatpush1.xpose.msra.mxu0 0.0
        %2245 = vmatprep.subr.mxu0 0.0
        %2246 = vmatpush1.xpose.msra.mxu0 0.0
        %2247 = vmatprep.mubr.f32.mxu0 0.0
        %2248 = vmatmul.mubr.f32.gmra.mrb[0].mxu0 %v2178
        %v2249 = vpop.f32.mrb[0].mxu0
        %v2250 = vadd.f32 0.0, %v2249
        %v2251 = vpop.f32.mrb[0].mxu0
        %2252 = vdwg.mxu0
        %v2253 = vmul.f32 %v2250, %v1526
        %v2254 = vsel %vm1528, %v2253, -inf
        %2255 = vmax.xlane.f32.xlu0 %v2254
        %v2256 = vpop.xlane.xlu0 %2255
        %v2257 = vsub.f32 %v2253, %v2256
        %v2258 = vmul.f32 %v2257, 1.442695
        %v2259 = vpow.pop %v2258
        %v2260 = vsel %vm1528, %v2259, 0.0
        %2261 = vadd.xlane.f32.xlu0 %v2260
        %v2262 = vpop.xlane.xlu0 %2261
        %v2263 = vrcp.pop %v2262
        %v2264 = vmul.f32 %v2259, %v2263
        %v2266 = vsel %vm1528, %v2264, 0
        %2268 = vmatprep.subr.mxu0 0.0
        %2269 = vmatpush1.msra.mxu0 %v2174
        %2270 = vmatprep.subr.mxu0 0.0
        %2271 = vmatpush1.msra.mxu0 0.0
        %2272 = vmatprep.subr.mxu0 0.0
        %2273 = vmatpush1.msra.mxu0 0.0
        %2274 = vmatprep.subr.mxu0 0.0
        %2275 = vmatpush1.msra.mxu0 0.0
        %2276 = vmatprep.subr.mxu0 0.0
        %2277 = vmatpush1.msra.mxu0 0.0
        %2278 = vmatprep.subr.mxu0 0.0
        %2279 = vmatpush1.msra.mxu0 0.0
        %2280 = vmatprep.subr.mxu0 0.0
        %2281 = vmatpush1.msra.mxu0 0.0
        %2282 = vmatprep.subr.mxu0 0.0
        %2283 = vmatpush1.msra.mxu0 0.0
        %2284 = vmatprep.subr.mxu0 0.0
        %2285 = vmatpush1.msra.mxu0 0.0
        %2286 = vmatprep.subr.mxu0 0.0
        %2287 = vmatpush1.msra.mxu0 0.0
        %2288 = vmatprep.subr.mxu0 0.0
        %2289 = vmatpush1.msra.mxu0 0.0
        %2290 = vmatprep.subr.mxu0 0.0
        %2291 = vmatpush1.msra.mxu0 0.0
        %2292 = vmatprep.subr.mxu0 0.0
        %2293 = vmatpush1.msra.mxu0 0.0
        %2294 = vmatprep.subr.mxu0 0.0
        %2295 = vmatpush1.msra.mxu0 0.0
        %2296 = vmatprep.subr.mxu0 0.0
        %2297 = vmatpush1.msra.mxu0 0.0
        %2298 = vmatprep.subr.mxu0 0.0
        %2299 = vmatpush1.msra.mxu0 0.0
        %2300 = vmatprep.subr.mxu0 0.0
        %2301 = vmatpush1.msra.mxu0 0.0
        %2302 = vmatprep.subr.mxu0 0.0
        %2303 = vmatpush1.msra.mxu0 0.0
        %2304 = vmatprep.subr.mxu0 0.0
        %2305 = vmatpush1.msra.mxu0 0.0
        %2306 = vmatprep.subr.mxu0 0.0
        %2307 = vmatpush1.msra.mxu0 0.0
        %2308 = vmatprep.subr.mxu0 0.0
        %2309 = vmatpush1.msra.mxu0 0.0
        %2310 = vmatprep.subr.mxu0 0.0
        %2311 = vmatpush1.msra.mxu0 0.0
        %2312 = vmatprep.subr.mxu0 0.0
        %2313 = vmatpush1.msra.mxu0 0.0
        %2314 = vmatprep.subr.mxu0 0.0
        %2315 = vmatpush1.msra.mxu0 0.0
        %2316 = vmatprep.subr.mxu0 0.0
        %2317 = vmatpush1.msra.mxu0 0.0
        %2318 = vmatprep.subr.mxu0 0.0
        %2319 = vmatpush1.msra.mxu0 0.0
        %2320 = vmatprep.subr.mxu0 0.0
        %2321 = vmatpush1.msra.mxu0 0.0
        %2322 = vmatprep.subr.mxu0 0.0
        %2323 = vmatpush1.msra.mxu0 0.0
        %2324 = vmatprep.subr.mxu0 0.0
        %2325 = vmatpush1.msra.mxu0 0.0
        %2326 = vmatprep.subr.mxu0 0.0
        %2327 = vmatpush1.msra.mxu0 0.0
        %2328 = vmatprep.subr.mxu0 0.0
        %2329 = vmatpush1.msra.mxu0 0.0
        %2330 = vmatprep.subr.mxu0 0.0
        %2331 = vmatpush1.msra.mxu0 0.0
        %2332 = vmatprep.mubr.f32.mxu0 0.0
        %2333 = vmatmul.mubr.f32.gmra.mrb[0].mxu0 %v2266
        %v2334 = vpop.f32.mrb[0].mxu0
        %v2335 = vadd.f32 0.0, %v2334
        %v2336 = vpop.f32.mrb[0].mxu0
        %2337 = vdwg.mxu0
        %s2338 = scalar_lea.vmem %s21, 32
        %v2339 = vld [vmem:[%s2338] sm:$0xff]
        %v2340 = vld [vmem:[%s2338 + $0x8] sm:$0xff]
        %v2341 = vld [vmem:[%s2338 + $0x10] sm:$0xff]
        %v2342 = vld [vmem:[%s2338 + $0x18] sm:$0xff]
        %s2343 = scalar_lea.vmem [#allocation11], 1
        %v2344 = vld [vmem:[%s2343] sm:$0x1]
        %v2346 = vlaneseq
        %v2347 = vshrl.u32 %v2346, 7
        %v2348 = vsub.s32 0, %v2347
        %v2349 = vrot.slane %v2344, %v2348
        %v2352 = vsel %vm1210, %v2335, 0
        %2354 = vmatprep.subr.mxu0 0.0
        %2355 = vmatpush1.msra.mxu0 %v2339
        %2356 = vmatprep.subr.mxu0 0.0
        %2357 = vmatpush1.msra.mxu0 %v2340
        %2358 = vmatprep.subr.mxu0 0.0
        %2359 = vmatpush1.msra.mxu0 %v2341
        %2360 = vmatprep.subr.mxu0 0.0
        %2361 = vmatpush1.msra.mxu0 %v2342
        %2362 = vmatprep.subr.mxu0 0.0
        %2363 = vmatpush1.msra.mxu0 0.0
        %2364 = vmatprep.subr.mxu0 0.0
        %2365 = vmatpush1.msra.mxu0 0.0
        %2366 = vmatprep.subr.mxu0 0.0
        %2367 = vmatpush1.msra.mxu0 0.0
        %2368 = vmatprep.subr.mxu0 0.0
        %2369 = vmatpush1.msra.mxu0 0.0
        %2370 = vmatprep.subr.mxu0 0.0
        %2371 = vmatpush1.msra.mxu0 0.0
        %2372 = vmatprep.subr.mxu0 0.0
        %2373 = vmatpush1.msra.mxu0 0.0
        %2374 = vmatprep.subr.mxu0 0.0
        %2375 = vmatpush1.msra.mxu0 0.0
        %2376 = vmatprep.subr.mxu0 0.0
        %2377 = vmatpush1.msra.mxu0 0.0
        %2378 = vmatprep.subr.mxu0 0.0
        %2379 = vmatpush1.msra.mxu0 0.0
        %2380 = vmatprep.subr.mxu0 0.0
        %2381 = vmatpush1.msra.mxu0 0.0
        %2382 = vmatprep.subr.mxu0 0.0
        %2383 = vmatpush1.msra.mxu0 0.0
        %2384 = vmatprep.subr.mxu0 0.0
        %2385 = vmatpush1.msra.mxu0 0.0
        %2386 = vmatprep.subr.mxu0 0.0
        %2387 = vmatpush1.msra.mxu0 0.0
        %2388 = vmatprep.subr.mxu0 0.0
        %2389 = vmatpush1.msra.mxu0 0.0
        %2390 = vmatprep.subr.mxu0 0.0
        %2391 = vmatpush1.msra.mxu0 0.0
        %2392 = vmatprep.subr.mxu0 0.0
        %2393 = vmatpush1.msra.mxu0 0.0
        %2394 = vmatprep.subr.mxu0 0.0
        %2395 = vmatpush1.msra.mxu0 0.0
        %2396 = vmatprep.subr.mxu0 0.0
        %2397 = vmatpush1.msra.mxu0 0.0
        %2398 = vmatprep.subr.mxu0 0.0
        %2399 = vmatpush1.msra.mxu0 0.0
        %2400 = vmatprep.subr.mxu0 0.0
        %2401 = vmatpush1.msra.mxu0 0.0
        %2402 = vmatprep.subr.mxu0 0.0
        %2403 = vmatpush1.msra.mxu0 0.0
        %2404 = vmatprep.subr.mxu0 0.0
        %2405 = vmatpush1.msra.mxu0 0.0
        %2406 = vmatprep.subr.mxu0 0.0
        %2407 = vmatpush1.msra.mxu0 0.0
        %2408 = vmatprep.subr.mxu0 0.0
        %2409 = vmatpush1.msra.mxu0 0.0
        %2410 = vmatprep.subr.mxu0 0.0
        %2411 = vmatpush1.msra.mxu0 0.0
        %2412 = vmatprep.subr.mxu0 0.0
        %2413 = vmatpush1.msra.mxu0 0.0
        %2414 = vmatprep.subr.mxu0 0.0
        %2415 = vmatpush1.msra.mxu0 0.0
        %2416 = vmatprep.subr.mxu0 0.0
        %2417 = vmatpush1.msra.mxu0 0.0
        %2418 = vmatprep.mubr.f32.mxu0 0.0
        %2419 = vmatmul.mubr.f32.gmra.mrb[0].mxu0 %v2352
        %v2420 = vpop.f32.mrb[0].mxu0
        %v2421 = vadd.f32 %v2349, %v2420
        %v2422 = vpop.f32.mrb[0].mxu0
        %2423 = vdwg.mxu0
        %v2424 = vadd.f32 %v1924, %v2421
        %v2425 = vsel %vm1210, %v2424, 0.0
        %2426 = vadd.xlane.f32.xlu0 %v2425
        %v2427 = vpop.xlane.xlu0 %2426
        %v2428 = vmul.f32 %v2427, %v1701
        %v2429 = vsub.f32 %v2424, %v2428
        %v2430 = vmul.f32 %v2429, %v2429
        %v2431 = vsel %vm1210, %v2430, 0.0
        %2432 = vadd.xlane.f32.xlu0 %v2431
        %v2433 = vpop.xlane.xlu0 %2432
        %v2434 = vmul.f32 %v2433, %v1701
        %v2435 = vadd.f32 %v2434, 1e-05
        %v2436 = vrsqrt.pop %v2435
        %v2437 = vmul.f32 %v2429, %v2436
        %s2438 = scalar_lea.vmem %s25, 1
        %v2439 = vld [vmem:[%s2438] sm:$0x1]
        %v2441 = vlaneseq
        %v2442 = vshrl.u32 %v2441, 7
        %v2443 = vsub.s32 0, %v2442
        %v2444 = vrot.slane %v2439, %v2443
        %v2446 = vmul.f32 %v2437, %v2444
        %s2447 = scalar_lea.vmem %s27, 1
        %v2448 = vld [vmem:[%s2447] sm:$0x1]
        %v2450 = vlaneseq
        %v2451 = vshrl.u32 %v2450, 7
        %v2452 = vsub.s32 0, %v2451
        %v2453 = vrot.slane %v2448, %v2452
        %v2455 = vadd.f32 %v2446, %v2453
        %s2456 = scalar_lea.vmem %s29, 32
        %v2457 = vld [vmem:[%s2456] sm:$0xff]
        %v2458 = vld [vmem:[%s2456 + $0x8] sm:$0xff]
        %v2459 = vld [vmem:[%s2456 + $0x10] sm:$0xff]
        %v2460 = vld [vmem:[%s2456 + $0x18] sm:$0xff]
        %s2461 = scalar_lea.vmem [#allocation13], 1
        %v2462 = vld [vmem:[%s2461] sm:$0x1]
        %v2464 = vlaneseq
        %v2465 = vshrl.u32 %v2464, 7
        %v2466 = vsub.s32 0, %v2465
        %v2467 = vrot.slane %v2462, %v2466
        %v2470 = vsel %vm1210, %v2455, 0
        %2472 = vmatprep.subr.mxu0 0.0
        %2473 = vmatpush1.msra.mxu0 %v2457
        %2474 = vmatprep.subr.mxu0 0.0
        %2475 = vmatpush1.msra.mxu0 %v2458
        %2476 = vmatprep.subr.mxu0 0.0
        %2477 = vmatpush1.msra.mxu0 %v2459
        %2478 = vmatprep.subr.mxu0 0.0
        %2479 = vmatpush1.msra.mxu0 %v2460
        %2480 = vmatprep.subr.mxu0 0.0
        %2481 = vmatpush1.msra.mxu0 0.0
        %2482 = vmatprep.subr.mxu0 0.0
        %2483 = vmatpush1.msra.mxu0 0.0
        %2484 = vmatprep.subr.mxu0 0.0
        %2485 = vmatpush1.msra.mxu0 0.0
        %2486 = vmatprep.subr.mxu0 0.0
        %2487 = vmatpush1.msra.mxu0 0.0
        %2488 = vmatprep.subr.mxu0 0.0
        %2489 = vmatpush1.msra.mxu0 0.0
        %2490 = vmatprep.subr.mxu0 0.0
        %2491 = vmatpush1.msra.mxu0 0.0
        %2492 = vmatprep.subr.mxu0 0.0
        %2493 = vmatpush1.msra.mxu0 0.0
        %2494 = vmatprep.subr.mxu0 0.0
        %2495 = vmatpush1.msra.mxu0 0.0
        %2496 = vmatprep.subr.mxu0 0.0
        %2497 = vmatpush1.msra.mxu0 0.0
        %2498 = vmatprep.subr.mxu0 0.0
        %2499 = vmatpush1.msra.mxu0 0.0
        %2500 = vmatprep.subr.mxu0 0.0
        %2501 = vmatpush1.msra.mxu0 0.0
        %2502 = vmatprep.subr.mxu0 0.0
        %2503 = vmatpush1.msra.mxu0 0.0
        %2504 = vmatprep.subr.mxu0 0.0
        %2505 = vmatpush1.msra.mxu0 0.0
        %2506 = vmatprep.subr.mxu0 0.0
        %2507 = vmatpush1.msra.mxu0 0.0
        %2508 = vmatprep.subr.mxu0 0.0
        %2509 = vmatpush1.msra.mxu0 0.0
        %2510 = vmatprep.subr.mxu0 0.0
        %2511 = vmatpush1.msra.mxu0 0.0
        %2512 = vmatprep.subr.mxu0 0.0
        %2513 = vmatpush1.msra.mxu0 0.0
        %2514 = vmatprep.subr.mxu0 0.0
        %2515 = vmatpush1.msra.mxu0 0.0
        %2516 = vmatprep.subr.mxu0 0.0
        %2517 = vmatpush1.msra.mxu0 0.0
        %2518 = vmatprep.subr.mxu0 0.0
        %2519 = vmatpush1.msra.mxu0 0.0
        %2520 = vmatprep.subr.mxu0 0.0
        %2521 = vmatpush1.msra.mxu0 0.0
        %2522 = vmatprep.subr.mxu0 0.0
        %2523 = vmatpush1.msra.mxu0 0.0
        %2524 = vmatprep.subr.mxu0 0.0
        %2525 = vmatpush1.msra.mxu0 0.0
        %2526 = vmatprep.subr.mxu0 0.0
        %2527 = vmatpush1.msra.mxu0 0.0
        %2528 = vmatprep.subr.mxu0 0.0
        %2529 = vmatpush1.msra.mxu0 0.0
        %2530 = vmatprep.subr.mxu0 0.0
        %2531 = vmatpush1.msra.mxu0 0.0
        %2532 = vmatprep.subr.mxu0 0.0
        %2533 = vmatpush1.msra.mxu0 0.0
        %2534 = vmatprep.subr.mxu0 0.0
        %2535 = vmatpush1.msra.mxu0 0.0
        %2536 = vmatprep.mubr.f32.mxu0 0.0
        %2537 = vmatmul.mubr.f32.gmra.mrb[0].mxu0 %v2470
        %v2538 = vpop.f32.mrb[0].mxu0
        %v2539 = vadd.f32 %v2467, %v2538
        %v2540 = vpop.f32.mrb[0].mxu0
        %2541 = vdwg.mxu0
        %v2542 = vmax.f32 %v2539, 0.0
        %s2543 = scalar_lea.vmem [#allocation14], 8
        %v2544 = vld [vmem:[%s2543] sm:$0xff]
        %s2545 = scalar_lea.vmem %s35, 1
        %v2546 = vld [vmem:[%s2545] sm:$0x1]
        %v2548 = vlaneseq
        %v2549 = vshrl.u32 %v2548, 7
        %v2550 = vsub.s32 0, %v2549
        %v2551 = vrot.slane %v2546, %v2550
        %v2554 = vsel %vm1528, %v2542, 0
        %2556 = vmatprep.subr.mxu0 0.0
        %2557 = vmatpush1.msra.mxu0 %v2544
        %2558 = vmatprep.subr.mxu0 0.0
        %2559 = vmatpush1.msra.mxu0 0.0
        %2560 = vmatprep.subr.mxu0 0.0
        %2561 = vmatpush1.msra.mxu0 0.0
        %2562 = vmatprep.subr.mxu0 0.0
        %2563 = vmatpush1.msra.mxu0 0.0
        %2564 = vmatprep.subr.mxu0 0.0
        %2565 = vmatpush1.msra.mxu0 0.0
        %2566 = vmatprep.subr.mxu0 0.0
        %2567 = vmatpush1.msra.mxu0 0.0
        %2568 = vmatprep.subr.mxu0 0.0
        %2569 = vmatpush1.msra.mxu0 0.0
        %2570 = vmatprep.subr.mxu0 0.0
        %2571 = vmatpush1.msra.mxu0 0.0
        %2572 = vmatprep.subr.mxu0 0.0
        %2573 = vmatpush1.msra.mxu0 0.0
        %2574 = vmatprep.subr.mxu0 0.0
        %2575 = vmatpush1.msra.mxu0 0.0
        %2576 = vmatprep.subr.mxu0 0.0
        %2577 = vmatpush1.msra.mxu0 0.0
        %2578 = vmatprep.subr.mxu0 0.0
        %2579 = vmatpush1.msra.mxu0 0.0
        %2580 = vmatprep.subr.mxu0 0.0
        %2581 = vmatpush1.msra.mxu0 0.0
        %2582 = vmatprep.subr.mxu0 0.0
        %2583 = vmatpush1.msra.mxu0 0.0
        %2584 = vmatprep.subr.mxu0 0.0
        %2585 = vmatpush1.msra.mxu0 0.0
        %2586 = vmatprep.subr.mxu0 0.0
        %2587 = vmatpush1.msra.mxu0 0.0
        %2588 = vmatprep.subr.mxu0 0.0
        %2589 = vmatpush1.msra.mxu0 0.0
        %2590 = vmatprep.subr.mxu0 0.0
        %2591 = vmatpush1.msra.mxu0 0.0
        %2592 = vmatprep.subr.mxu0 0.0
        %2593 = vmatpush1.msra.mxu0 0.0
        %2594 = vmatprep.subr.mxu0 0.0
        %2595 = vmatpush1.msra.mxu0 0.0
        %2596 = vmatprep.subr.mxu0 0.0
        %2597 = vmatpush1.msra.mxu0 0.0
        %2598 = vmatprep.subr.mxu0 0.0
        %2599 = vmatpush1.msra.mxu0 0.0
        %2600 = vmatprep.subr.mxu0 0.0
        %2601 = vmatpush1.msra.mxu0 0.0
        %2602 = vmatprep.subr.mxu0 0.0
        %2603 = vmatpush1.msra.mxu0 0.0
        %2604 = vmatprep.subr.mxu0 0.0
        %2605 = vmatpush1.msra.mxu0 0.0
        %2606 = vmatprep.subr.mxu0 0.0
        %2607 = vmatpush1.msra.mxu0 0.0
        %2608 = vmatprep.subr.mxu0 0.0
        %2609 = vmatpush1.msra.mxu0 0.0
        %2610 = vmatprep.subr.mxu0 0.0
        %2611 = vmatpush1.msra.mxu0 0.0
        %2612 = vmatprep.subr.mxu0 0.0
        %2613 = vmatpush1.msra.mxu0 0.0
        %2614 = vmatprep.subr.mxu0 0.0
        %2615 = vmatpush1.msra.mxu0 0.0
        %2616 = vmatprep.subr.mxu0 0.0
        %2617 = vmatpush1.msra.mxu0 0.0
        %2618 = vmatprep.subr.mxu0 0.0
        %2619 = vmatpush1.msra.mxu0 0.0
        %2620 = vmatprep.mubr.f32.mxu0 0.0
        %2621 = vmatmul.mubr.f32.gmra.mrb[0].mxu0 %v2554
        %v2622 = vpop.f32.mrb[0].mxu0
        %v2623 = vadd.f32 %v2551, %v2622
        %v2624 = vpop.f32.mrb[0].mxu0
        %2625 = vdwg.mxu0
        %v2626 = vadd.f32 %v2455, %v2623
        %v2627 = vsel %vm1210, %v2626, 0.0
        %2628 = vadd.xlane.f32.xlu0 %v2627
        %v2629 = vpop.xlane.xlu0 %2628
        %v2630 = vmul.f32 %v2629, %v1701
        %v2631 = vsub.f32 %v2626, %v2630
        %v2632 = vmul.f32 %v2631, %v2631
        %v2633 = vsel %vm1210, %v2632, 0.0
        %2634 = vadd.xlane.f32.xlu0 %v2633
        %v2635 = vpop.xlane.xlu0 %2634
        %v2636 = vmul.f32 %v2635, %v1701
        %v2637 = vadd.f32 %v2636, 1e-05
        %v2638 = vrsqrt.pop %v2637
        %v2639 = vmul.f32 %v2631, %v2638
        %s2640 = scalar_lea.vmem %s37, 1
        %v2641 = vld [vmem:[%s2640] sm:$0x1]
        %v2643 = vlaneseq
        %v2644 = vshrl.u32 %v2643, 7
        %v2645 = vsub.s32 0, %v2644
        %v2646 = vrot.slane %v2641, %v2645
        %v2648 = vmul.f32 %v2639, %v2646
        %s2649 = scalar_lea.vmem %s39, 1
        %v2650 = vld [vmem:[%s2649] sm:$0x1]
        %v2652 = vlaneseq
        %v2653 = vshrl.u32 %v2652, 7
        %v2654 = vsub.s32 0, %v2653
        %v2655 = vrot.slane %v2650, %v2654
        %v2657 = vadd.f32 %v2648, %v2655
        %v2658 = vadd.f32 %v2657, %v1924
        %s2659 = scalar_lea.vmem [#allocation8], 192
        %v2660 = vld [vmem:[%s2659] sm:$0xff]
        %v2661 = vld [vmem:[%s2659 + $0x8] sm:$0xff]
        %v2662 = vld [vmem:[%s2659 + $0x10] sm:$0xff]
        %v2663 = vld [vmem:[%s2659 + $0x18] sm:$0xff]
        %s2664 = scalar_lea.vmem [#allocation10], 6
        %v2665 = vld [vmem:[%s2664] sm:$0x1]
        %v2667 = vlaneseq
        %v2668 = vshrl.u32 %v2667, 7
        %v2669 = vsub.s32 0, %v2668
        %v2670 = vrot.slane %v2665, %v2669
        %v2673 = vsel %vm1210, %v2658, 0
        %2675 = vmatprep.subr.mxu0 0.0
        %2676 = vmatpush1.msra.mxu0 %v2660
        %2677 = vmatprep.subr.mxu0 0.0
        %2678 = vmatpush1.msra.mxu0 %v2661
        %2679 = vmatprep.subr.mxu0 0.0
        %2680 = vmatpush1.msra.mxu0 %v2662
        %2681 = vmatprep.subr.mxu0 0.0
        %2682 = vmatpush1.msra.mxu0 %v2663
        %2683 = vmatprep.subr.mxu0 0.0
        %2684 = vmatpush1.msra.mxu0 0.0
        %2685 = vmatprep.subr.mxu0 0.0
        %2686 = vmatpush1.msra.mxu0 0.0
        %2687 = vmatprep.subr.mxu0 0.0
        %2688 = vmatpush1.msra.mxu0 0.0
        %2689 = vmatprep.subr.mxu0 0.0
        %2690 = vmatpush1.msra.mxu0 0.0
        %2691 = vmatprep.subr.mxu0 0.0
        %2692 = vmatpush1.msra.mxu0 0.0
        %2693 = vmatprep.subr.mxu0 0.0
        %2694 = vmatpush1.msra.mxu0 0.0
        %2695 = vmatprep.subr.mxu0 0.0
        %2696 = vmatpush1.msra.mxu0 0.0
        %2697 = vmatprep.subr.mxu0 0.0
        %2698 = vmatpush1.msra.mxu0 0.0
        %2699 = vmatprep.subr.mxu0 0.0
        %2700 = vmatpush1.msra.mxu0 0.0
        %2701 = vmatprep.subr.mxu0 0.0
        %2702 = vmatpush1.msra.mxu0 0.0
        %2703 = vmatprep.subr.mxu0 0.0
        %2704 = vmatpush1.msra.mxu0 0.0
        %2705 = vmatprep.subr.mxu0 0.0
        %2706 = vmatpush1.msra.mxu0 0.0
        %2707 = vmatprep.subr.mxu0 0.0
        %2708 = vmatpush1.msra.mxu0 0.0
        %2709 = vmatprep.subr.mxu0 0.0
        %2710 = vmatpush1.msra.mxu0 0.0
        %2711 = vmatprep.subr.mxu0 0.0
        %2712 = vmatpush1.msra.mxu0 0.0
        %2713 = vmatprep.subr.mxu0 0.0
        %2714 = vmatpush1.msra.mxu0 0.0
        %2715 = vmatprep.subr.mxu0 0.0
        %2716 = vmatpush1.msra.mxu0 0.0
        %2717 = vmatprep.subr.mxu0 0.0
        %2718 = vmatpush1.msra.mxu0 0.0
        %2719 = vmatprep.subr.mxu0 0.0
        %2720 = vmatpush1.msra.mxu0 0.0
        %2721 = vmatprep.subr.mxu0 0.0
        %2722 = vmatpush1.msra.mxu0 0.0
        %2723 = vmatprep.subr.mxu0 0.0
        %2724 = vmatpush1.msra.mxu0 0.0
        %2725 = vmatprep.subr.mxu0 0.0
        %2726 = vmatpush1.msra.mxu0 0.0
        %2727 = vmatprep.subr.mxu0 0.0
        %2728 = vmatpush1.msra.mxu0 0.0
        %2729 = vmatprep.subr.mxu0 0.0
        %2730 = vmatpush1.msra.mxu0 0.0
        %2731 = vmatprep.subr.mxu0 0.0
        %2732 = vmatpush1.msra.mxu0 0.0
        %2733 = vmatprep.subr.mxu0 0.0
        %2734 = vmatpush1.msra.mxu0 0.0
        %2735 = vmatprep.subr.mxu0 0.0
        %2736 = vmatpush1.msra.mxu0 0.0
        %2737 = vmatprep.subr.mxu0 0.0
        %2738 = vmatpush1.msra.mxu0 0.0
        %2739 = vmatprep.mubr.f32.mxu0 0.0
        %2740 = vmatmul.mubr.f32.gmra.mrb[0].mxu0 %v2673
        %v2741 = vpop.f32.mrb[0].mxu0
        %v2742 = vadd.f32 %v2670, %v2741
        %v2743 = vpop.f32.mrb[0].mxu0
        %2744 = vdwg.mxu0
        %s2745 = scalar_lea.vmem [#allocation8], 224
        %v2746 = vld [vmem:[%s2745] sm:$0xff]
        %v2747 = vld [vmem:[%s2745 + $0x8] sm:$0xff]
        %v2748 = vld [vmem:[%s2745 + $0x10] sm:$0xff]
        %v2749 = vld [vmem:[%s2745 + $0x18] sm:$0xff]
        %s2750 = scalar_lea.vmem [#allocation10], 7
        %v2751 = vld [vmem:[%s2750] sm:$0x1]
        %v2753 = vlaneseq
        %v2754 = vshrl.u32 %v2753, 7
        %v2755 = vsub.s32 0, %v2754
        %v2756 = vrot.slane %v2751, %v2755
        %2758 = vmatprep.subr.mxu0 0.0
        %2759 = vmatpush1.msra.mxu0 %v2746
        %2760 = vmatprep.subr.mxu0 0.0
        %2761 = vmatpush1.msra.mxu0 %v2747
        %2762 = vmatprep.subr.mxu0 0.0
        %2763 = vmatpush1.msra.mxu0 %v2748
        %2764 = vmatprep.subr.mxu0 0.0
        %2765 = vmatpush1.msra.mxu0 %v2749
        %2766 = vmatprep.subr.mxu0 0.0
        %2767 = vmatpush1.msra.mxu0 0.0
        %2768 = vmatprep.subr.mxu0 0.0
        %2769 = vmatpush1.msra.mxu0 0.0
        %2770 = vmatprep.subr.mxu0 0.0
        %2771 = vmatpush1.msra.mxu0 0.0
        %2772 = vmatprep.subr.mxu0 0.0
        %2773 = vmatpush1.msra.mxu0 0.0
        %2774 = vmatprep.subr.mxu0 0.0
        %2775 = vmatpush1.msra.mxu0 0.0
        %2776 = vmatprep.subr.mxu0 0.0
        %2777 = vmatpush1.msra.mxu0 0.0
        %2778 = vmatprep.subr.mxu0 0.0
        %2779 = vmatpush1.msra.mxu0 0.0
        %2780 = vmatprep.subr.mxu0 0.0
        %2781 = vmatpush1.msra.mxu0 0.0
        %2782 = vmatprep.subr.mxu0 0.0
        %2783 = vmatpush1.msra.mxu0 0.0
        %2784 = vmatprep.subr.mxu0 0.0
        %2785 = vmatpush1.msra.mxu0 0.0
        %2786 = vmatprep.subr.mxu0 0.0
        %2787 = vmatpush1.msra.mxu0 0.0
        %2788 = vmatprep.subr.mxu0 0.0
        %2789 = vmatpush1.msra.mxu0 0.0
        %2790 = vmatprep.subr.mxu0 0.0
        %2791 = vmatpush1.msra.mxu0 0.0
        %2792 = vmatprep.subr.mxu0 0.0
        %2793 = vmatpush1.msra.mxu0 0.0
        %2794 = vmatprep.subr.mxu0 0.0
        %2795 = vmatpush1.msra.mxu0 0.0
        %2796 = vmatprep.subr.mxu0 0.0
        %2797 = vmatpush1.msra.mxu0 0.0
        %2798 = vmatprep.subr.mxu0 0.0
        %2799 = vmatpush1.msra.mxu0 0.0
        %2800 = vmatprep.subr.mxu0 0.0
        %2801 = vmatpush1.msra.mxu0 0.0
        %2802 = vmatprep.subr.mxu0 0.0
        %2803 = vmatpush1.msra.mxu0 0.0
        %2804 = vmatprep.subr.mxu0 0.0
        %2805 = vmatpush1.msra.mxu0 0.0
        %2806 = vmatprep.subr.mxu0 0.0
        %2807 = vmatpush1.msra.mxu0 0.0
        %2808 = vmatprep.subr.mxu0 0.0
        %2809 = vmatpush1.msra.mxu0 0.0
        %2810 = vmatprep.subr.mxu0 0.0
        %2811 = vmatpush1.msra.mxu0 0.0
        %2812 = vmatprep.subr.mxu0 0.0
        %2813 = vmatpush1.msra.mxu0 0.0
        %2814 = vmatprep.subr.mxu0 0.0
        %2815 = vmatpush1.msra.mxu0 0.0
        %2816 = vmatprep.subr.mxu0 0.0
        %2817 = vmatpush1.msra.mxu0 0.0
        %2818 = vmatprep.subr.mxu0 0.0
        %2819 = vmatpush1.msra.mxu0 0.0
        %2820 = vmatprep.subr.mxu0 0.0
        %2821 = vmatpush1.msra.mxu0 0.0
        %2822 = vmatprep.mubr.f32.mxu0 0.0
        %2823 = vmatmul.mubr.f32.gmra.mrb[0].mxu0 %v2673
        %v2824 = vpop.f32.mrb[0].mxu0
        %v2825 = vadd.f32 %v2756, %v2824
        %v2826 = vpop.f32.mrb[0].mxu0
        %2827 = vdwg.mxu0
        %s2828 = scalar_lea.vmem [#allocation8], 256
        %v2829 = vld [vmem:[%s2828] sm:$0xff]
        %v2830 = vld [vmem:[%s2828 + $0x8] sm:$0xff]
        %v2831 = vld [vmem:[%s2828 + $0x10] sm:$0xff]
        %v2832 = vld [vmem:[%s2828 + $0x18] sm:$0xff]
        %s2833 = scalar_lea.vmem [#allocation10], 8
        %v2834 = vld [vmem:[%s2833] sm:$0x1]
        %v2836 = vlaneseq
        %v2837 = vshrl.u32 %v2836, 7
        %v2838 = vsub.s32 0, %v2837
        %v2839 = vrot.slane %v2834, %v2838
        %2841 = vmatprep.subr.mxu0 0.0
        %2842 = vmatpush1.msra.mxu0 %v2829
        %2843 = vmatprep.subr.mxu0 0.0
        %2844 = vmatpush1.msra.mxu0 %v2830
        %2845 = vmatprep.subr.mxu0 0.0
        %2846 = vmatpush1.msra.mxu0 %v2831
        %2847 = vmatprep.subr.mxu0 0.0
        %2848 = vmatpush1.msra.mxu0 %v2832
        %2849 = vmatprep.subr.mxu0 0.0
        %2850 = vmatpush1.msra.mxu0 0.0
        %2851 = vmatprep.subr.mxu0 0.0
        %2852 = vmatpush1.msra.mxu0 0.0
        %2853 = vmatprep.subr.mxu0 0.0
        %2854 = vmatpush1.msra.mxu0 0.0
        %2855 = vmatprep.subr.mxu0 0.0
        %2856 = vmatpush1.msra.mxu0 0.0
        %2857 = vmatprep.subr.mxu0 0.0
        %2858 = vmatpush1.msra.mxu0 0.0
        %2859 = vmatprep.subr.mxu0 0.0
        %2860 = vmatpush1.msra.mxu0 0.0
        %2861 = vmatprep.subr.mxu0 0.0
        %2862 = vmatpush1.msra.mxu0 0.0
        %2863 = vmatprep.subr.mxu0 0.0
        %2864 = vmatpush1.msra.mxu0 0.0
        %2865 = vmatprep.subr.mxu0 0.0
        %2866 = vmatpush1.msra.mxu0 0.0
        %2867 = vmatprep.subr.mxu0 0.0
        %2868 = vmatpush1.msra.mxu0 0.0
        %2869 = vmatprep.subr.mxu0 0.0
        %2870 = vmatpush1.msra.mxu0 0.0
        %2871 = vmatprep.subr.mxu0 0.0
        %2872 = vmatpush1.msra.mxu0 0.0
        %2873 = vmatprep.subr.mxu0 0.0
        %2874 = vmatpush1.msra.mxu0 0.0
        %2875 = vmatprep.subr.mxu0 0.0
        %2876 = vmatpush1.msra.mxu0 0.0
        %2877 = vmatprep.subr.mxu0 0.0
        %2878 = vmatpush1.msra.mxu0 0.0
        %2879 = vmatprep.subr.mxu0 0.0
        %2880 = vmatpush1.msra.mxu0 0.0
        %2881 = vmatprep.subr.mxu0 0.0
        %2882 = vmatpush1.msra.mxu0 0.0
        %2883 = vmatprep.subr.mxu0 0.0
        %2884 = vmatpush1.msra.mxu0 0.0
        %2885 = vmatprep.subr.mxu0 0.0
        %2886 = vmatpush1.msra.mxu0 0.0
        %2887 = vmatprep.subr.mxu0 0.0
        %2888 = vmatpush1.msra.mxu0 0.0
        %2889 = vmatprep.subr.mxu0 0.0
        %2890 = vmatpush1.msra.mxu0 0.0
        %2891 = vmatprep.subr.mxu0 0.0
        %2892 = vmatpush1.msra.mxu0 0.0
        %2893 = vmatprep.subr.mxu0 0.0
        %2894 = vmatpush1.msra.mxu0 0.0
        %2895 = vmatprep.subr.mxu0 0.0
        %2896 = vmatpush1.msra.mxu0 0.0
        %2897 = vmatprep.subr.mxu0 0.0
        %2898 = vmatpush1.msra.mxu0 0.0
        %2899 = vmatprep.subr.mxu0 0.0
        %2900 = vmatpush1.msra.mxu0 0.0
        %2901 = vmatprep.subr.mxu0 0.0
        %2902 = vmatpush1.msra.mxu0 0.0
        %2903 = vmatprep.subr.mxu0 0.0
        %2904 = vmatpush1.msra.mxu0 0.0
        %2905 = vmatprep.mubr.f32.mxu0 0.0
        %2906 = vmatmul.mubr.f32.gmra.mrb[0].mxu0 %v2673
        %v2907 = vpop.f32.mrb[0].mxu0
        %v2908 = vadd.f32 %v2839, %v2907
        %v2909 = vpop.f32.mrb[0].mxu0
        %2910 = vdwg.mxu0
        %v2912 = vsel %vm1210, %v2742, 0
        %v2915 = vsel %vm1210, %v2825, 0
        %2917 = vmatprep.subr.mxu0 0.0
        %2918 = vmatpush1.xpose.msra.mxu0 %v2915
        %2919 = vmatprep.subr.mxu0 0.0
        %2920 = vmatpush1.xpose.msra.mxu0 0.0
        %2921 = vmatprep.subr.mxu0 0.0
        %2922 = vmatpush1.xpose.msra.mxu0 0.0
        %2923 = vmatprep.subr.mxu0 0.0
        %2924 = vmatpush1.xpose.msra.mxu0 0.0
        %2925 = vmatprep.subr.mxu0 0.0
        %2926 = vmatpush1.xpose.msra.mxu0 0.0
        %2927 = vmatprep.subr.mxu0 0.0
        %2928 = vmatpush1.xpose.msra.mxu0 0.0
        %2929 = vmatprep.subr.mxu0 0.0
        %2930 = vmatpush1.xpose.msra.mxu0 0.0
        %2931 = vmatprep.subr.mxu0 0.0
        %2932 = vmatpush1.xpose.msra.mxu0 0.0
        %2933 = vmatprep.subr.mxu0 0.0
        %2934 = vmatpush1.xpose.msra.mxu0 0.0
        %2935 = vmatprep.subr.mxu0 0.0
        %2936 = vmatpush1.xpose.msra.mxu0 0.0
        %2937 = vmatprep.subr.mxu0 0.0
        %2938 = vmatpush1.xpose.msra.mxu0 0.0
        %2939 = vmatprep.subr.mxu0 0.0
        %2940 = vmatpush1.xpose.msra.mxu0 0.0
        %2941 = vmatprep.subr.mxu0 0.0
        %2942 = vmatpush1.xpose.msra.mxu0 0.0
        %2943 = vmatprep.subr.mxu0 0.0
        %2944 = vmatpush1.xpose.msra.mxu0 0.0
        %2945 = vmatprep.subr.mxu0 0.0
        %2946 = vmatpush1.xpose.msra.mxu0 0.0
        %2947 = vmatprep.subr.mxu0 0.0
        %2948 = vmatpush1.xpose.msra.mxu0 0.0
        %2949 = vmatprep.subr.mxu0 0.0
        %2950 = vmatpush1.xpose.msra.mxu0 0.0
        %2951 = vmatprep.subr.mxu0 0.0
        %2952 = vmatpush1.xpose.msra.mxu0 0.0
        %2953 = vmatprep.subr.mxu0 0.0
        %2954 = vmatpush1.xpose.msra.mxu0 0.0
        %2955 = vmatprep.subr.mxu0 0.0
        %2956 = vmatpush1.xpose.msra.mxu0 0.0
        %2957 = vmatprep.subr.mxu0 0.0
        %2958 = vmatpush1.xpose.msra.mxu0 0.0
        %2959 = vmatprep.subr.mxu0 0.0
        %2960 = vmatpush1.xpose.msra.mxu0 0.0
        %2961 = vmatprep.subr.mxu0 0.0
        %2962 = vmatpush1.xpose.msra.mxu0 0.0
        %2963 = vmatprep.subr.mxu0 0.0
        %2964 = vmatpush1.xpose.msra.mxu0 0.0
        %2965 = vmatprep.subr.mxu0 0.0
        %2966 = vmatpush1.xpose.msra.mxu0 0.0
        %2967 = vmatprep.subr.mxu0 0.0
        %2968 = vmatpush1.xpose.msra.mxu0 0.0
        %2969 = vmatprep.subr.mxu0 0.0
        %2970 = vmatpush1.xpose.msra.mxu0 0.0
        %2971 = vmatprep.subr.mxu0 0.0
        %2972 = vmatpush1.xpose.msra.mxu0 0.0
        %2973 = vmatprep.subr.mxu0 0.0
        %2974 = vmatpush1.xpose.msra.mxu0 0.0
        %2975 = vmatprep.subr.mxu0 0.0
        %2976 = vmatpush1.xpose.msra.mxu0 0.0
        %2977 = vmatprep.subr.mxu0 0.0
        %2978 = vmatpush1.xpose.msra.mxu0 0.0
        %2979 = vmatprep.subr.mxu0 0.0
        %2980 = vmatpush1.xpose.msra.mxu0 0.0
        %2981 = vmatprep.mubr.f32.mxu0 0.0
        %2982 = vmatmul.mubr.f32.gmra.mrb[0].mxu0 %v2912
        %v2983 = vpop.f32.mrb[0].mxu0
        %v2984 = vadd.f32 0.0, %v2983
        %v2985 = vpop.f32.mrb[0].mxu0
        %2986 = vdwg.mxu0
        %v2987 = vmul.f32 %v2984, %v1526
        %v2988 = vsel %vm1528, %v2987, -inf
        %2989 = vmax.xlane.f32.xlu0 %v2988
        %v2990 = vpop.xlane.xlu0 %2989
        %v2991 = vsub.f32 %v2987, %v2990
        %v2992 = vmul.f32 %v2991, 1.442695
        %v2993 = vpow.pop %v2992
        %v2994 = vsel %vm1528, %v2993, 0.0
        %2995 = vadd.xlane.f32.xlu0 %v2994
        %v2996 = vpop.xlane.xlu0 %2995
        %v2997 = vrcp.pop %v2996
        %v2998 = vmul.f32 %v2993, %v2997
        %v3000 = vsel %vm1528, %v2998, 0
        %3002 = vmatprep.subr.mxu0 0.0
        %3003 = vmatpush1.msra.mxu0 %v2908
        %3004 = vmatprep.subr.mxu0 0.0
        %3005 = vmatpush1.msra.mxu0 0.0
        %3006 = vmatprep.subr.mxu0 0.0
        %3007 = vmatpush1.msra.mxu0 0.0
        %3008 = vmatprep.subr.mxu0 0.0
        %3009 = vmatpush1.msra.mxu0 0.0
        %3010 = vmatprep.subr.mxu0 0.0
        %3011 = vmatpush1.msra.mxu0 0.0
        %3012 = vmatprep.subr.mxu0 0.0
        %3013 = vmatpush1.msra.mxu0 0.0
        %3014 = vmatprep.subr.mxu0 0.0
        %3015 = vmatpush1.msra.mxu0 0.0
        %3016 = vmatprep.subr.mxu0 0.0
        %3017 = vmatpush1.msra.mxu0 0.0
        %3018 = vmatprep.subr.mxu0 0.0
        %3019 = vmatpush1.msra.mxu0 0.0
        %3020 = vmatprep.subr.mxu0 0.0
        %3021 = vmatpush1.msra.mxu0 0.0
        %3022 = vmatprep.subr.mxu0 0.0
        %3023 = vmatpush1.msra.mxu0 0.0
        %3024 = vmatprep.subr.mxu0 0.0
        %3025 = vmatpush1.msra.mxu0 0.0
        %3026 = vmatprep.subr.mxu0 0.0
        %3027 = vmatpush1.msra.mxu0 0.0
        %3028 = vmatprep.subr.mxu0 0.0
        %3029 = vmatpush1.msra.mxu0 0.0
        %3030 = vmatprep.subr.mxu0 0.0
        %3031 = vmatpush1.msra.mxu0 0.0
        %3032 = vmatprep.subr.mxu0 0.0
        %3033 = vmatpush1.msra.mxu0 0.0
        %3034 = vmatprep.subr.mxu0 0.0
        %3035 = vmatpush1.msra.mxu0 0.0
        %3036 = vmatprep.subr.mxu0 0.0
        %3037 = vmatpush1.msra.mxu0 0.0
        %3038 = vmatprep.subr.mxu0 0.0
        %3039 = vmatpush1.msra.mxu0 0.0
        %3040 = vmatprep.subr.mxu0 0.0
        %3041 = vmatpush1.msra.mxu0 0.0
        %3042 = vmatprep.subr.mxu0 0.0
        %3043 = vmatpush1.msra.mxu0 0.0
        %3044 = vmatprep.subr.mxu0 0.0
        %3045 = vmatpush1.msra.mxu0 0.0
        %3046 = vmatprep.subr.mxu0 0.0
        %3047 = vmatpush1.msra.mxu0 0.0
        %3048 = vmatprep.subr.mxu0 0.0
        %3049 = vmatpush1.msra.mxu0 0.0
        %3050 = vmatprep.subr.mxu0 0.0
        %3051 = vmatpush1.msra.mxu0 0.0
        %3052 = vmatprep.subr.mxu0 0.0
        %3053 = vmatpush1.msra.mxu0 0.0
        %3054 = vmatprep.subr.mxu0 0.0
        %3055 = vmatpush1.msra.mxu0 0.0
        %3056 = vmatprep.subr.mxu0 0.0
        %3057 = vmatpush1.msra.mxu0 0.0
        %3058 = vmatprep.subr.mxu0 0.0
        %3059 = vmatpush1.msra.mxu0 0.0
        %3060 = vmatprep.subr.mxu0 0.0
        %3061 = vmatpush1.msra.mxu0 0.0
        %3062 = vmatprep.subr.mxu0 0.0
        %3063 = vmatpush1.msra.mxu0 0.0
        %3064 = vmatprep.subr.mxu0 0.0
        %3065 = vmatpush1.msra.mxu0 0.0
        %3066 = vmatprep.mubr.f32.mxu0 0.0
        %3067 = vmatmul.mubr.f32.gmra.mrb[0].mxu0 %v3000
        %v3068 = vpop.f32.mrb[0].mxu0
        %v3069 = vadd.f32 0.0, %v3068
        %v3070 = vpop.f32.mrb[0].mxu0
        %3071 = vdwg.mxu0
        %s3072 = scalar_lea.vmem %s21, 64
        %v3073 = vld [vmem:[%s3072] sm:$0xff]
        %v3074 = vld [vmem:[%s3072 + $0x8] sm:$0xff]
        %v3075 = vld [vmem:[%s3072 + $0x10] sm:$0xff]
        %v3076 = vld [vmem:[%s3072 + $0x18] sm:$0xff]
        %s3077 = scalar_lea.vmem [#allocation11], 2
        %v3078 = vld [vmem:[%s3077] sm:$0x1]
        %v3080 = vlaneseq
        %v3081 = vshrl.u32 %v3080, 7
        %v3082 = vsub.s32 0, %v3081
        %v3083 = vrot.slane %v3078, %v3082
        %v3086 = vsel %vm1210, %v3069, 0
        %3088 = vmatprep.subr.mxu0 0.0
        %3089 = vmatpush1.msra.mxu0 %v3073
        %3090 = vmatprep.subr.mxu0 0.0
        %3091 = vmatpush1.msra.mxu0 %v3074
        %3092 = vmatprep.subr.mxu0 0.0
        %3093 = vmatpush1.msra.mxu0 %v3075
        %3094 = vmatprep.subr.mxu0 0.0
        %3095 = vmatpush1.msra.mxu0 %v3076
        %3096 = vmatprep.subr.mxu0 0.0
        %3097 = vmatpush1.msra.mxu0 0.0
        %3098 = vmatprep.subr.mxu0 0.0
        %3099 = vmatpush1.msra.mxu0 0.0
        %3100 = vmatprep.subr.mxu0 0.0
        %3101 = vmatpush1.msra.mxu0 0.0
        %3102 = vmatprep.subr.mxu0 0.0
        %3103 = vmatpush1.msra.mxu0 0.0
        %3104 = vmatprep.subr.mxu0 0.0
        %3105 = vmatpush1.msra.mxu0 0.0
        %3106 = vmatprep.subr.mxu0 0.0
        %3107 = vmatpush1.msra.mxu0 0.0
        %3108 = vmatprep.subr.mxu0 0.0
        %3109 = vmatpush1.msra.mxu0 0.0
        %3110 = vmatprep.subr.mxu0 0.0
        %3111 = vmatpush1.msra.mxu0 0.0
        %3112 = vmatprep.subr.mxu0 0.0
        %3113 = vmatpush1.msra.mxu0 0.0
        %3114 = vmatprep.subr.mxu0 0.0
        %3115 = vmatpush1.msra.mxu0 0.0
        %3116 = vmatprep.subr.mxu0 0.0
        %3117 = vmatpush1.msra.mxu0 0.0
        %3118 = vmatprep.subr.mxu0 0.0
        %3119 = vmatpush1.msra.mxu0 0.0
        %3120 = vmatprep.subr.mxu0 0.0
        %3121 = vmatpush1.msra.mxu0 0.0
        %3122 = vmatprep.subr.mxu0 0.0
        %3123 = vmatpush1.msra.mxu0 0.0
        %3124 = vmatprep.subr.mxu0 0.0
        %3125 = vmatpush1.msra.mxu0 0.0
        %3126 = vmatprep.subr.mxu0 0.0
        %3127 = vmatpush1.msra.mxu0 0.0
        %3128 = vmatprep.subr.mxu0 0.0
        %3129 = vmatpush1.msra.mxu0 0.0
        %3130 = vmatprep.subr.mxu0 0.0
        %3131 = vmatpush1.msra.mxu0 0.0
        %3132 = vmatprep.subr.mxu0 0.0
        %3133 = vmatpush1.msra.mxu0 0.0
        %3134 = vmatprep.subr.mxu0 0.0
        %3135 = vmatpush1.msra.mxu0 0.0
        %3136 = vmatprep.subr.mxu0 0.0
        %3137 = vmatpush1.msra.mxu0 0.0
        %3138 = vmatprep.subr.mxu0 0.0
        %3139 = vmatpush1.msra.mxu0 0.0
        %3140 = vmatprep.subr.mxu0 0.0
        %3141 = vmatpush1.msra.mxu0 0.0
        %3142 = vmatprep.subr.mxu0 0.0
        %3143 = vmatpush1.msra.mxu0 0.0
        %3144 = vmatprep.subr.mxu0 0.0
        %3145 = vmatpush1.msra.mxu0 0.0
        %3146 = vmatprep.subr.mxu0 0.0
        %3147 = vmatpush1.msra.mxu0 0.0
        %3148 = vmatprep.subr.mxu0 0.0
        %3149 = vmatpush1.msra.mxu0 0.0
        %3150 = vmatprep.subr.mxu0 0.0
        %3151 = vmatpush1.msra.mxu0 0.0
        %3152 = vmatprep.mubr.f32.mxu0 0.0
        %3153 = vmatmul.mubr.f32.gmra.mrb[0].mxu0 %v3086
        %v3154 = vpop.f32.mrb[0].mxu0
        %v3155 = vadd.f32 %v3083, %v3154
        %v3156 = vpop.f32.mrb[0].mxu0
        %3157 = vdwg.mxu0
        %v3158 = vadd.f32 %v2658, %v3155
        %v3159 = vsel %vm1210, %v3158, 0.0
        %3160 = vadd.xlane.f32.xlu0 %v3159
        %v3161 = vpop.xlane.xlu0 %3160
        %v3162 = vmul.f32 %v3161, %v1701
        %v3163 = vsub.f32 %v3158, %v3162
        %v3164 = vmul.f32 %v3163, %v3163
        %v3165 = vsel %vm1210, %v3164, 0.0
        %3166 = vadd.xlane.f32.xlu0 %v3165
        %v3167 = vpop.xlane.xlu0 %3166
        %v3168 = vmul.f32 %v3167, %v1701
        %v3169 = vadd.f32 %v3168, 1e-05
        %v3170 = vrsqrt.pop %v3169
        %v3171 = vmul.f32 %v3163, %v3170
        %s3172 = scalar_lea.vmem %s25, 2
        %v3173 = vld [vmem:[%s3172] sm:$0x1]
        %v3175 = vlaneseq
        %v3176 = vshrl.u32 %v3175, 7
        %v3177 = vsub.s32 0, %v3176
        %v3178 = vrot.slane %v3173, %v3177
        %v3180 = vmul.f32 %v3171, %v3178
        %s3181 = scalar_lea.vmem %s27, 2
        %v3182 = vld [vmem:[%s3181] sm:$0x1]
        %v3184 = vlaneseq
        %v3185 = vshrl.u32 %v3184, 7
        %v3186 = vsub.s32 0, %v3185
        %v3187 = vrot.slane %v3182, %v3186
        %v3189 = vadd.f32 %v3180, %v3187
        %s3190 = scalar_lea.vmem %s29, 64
        %v3191 = vld [vmem:[%s3190] sm:$0xff]
        %v3192 = vld [vmem:[%s3190 + $0x8] sm:$0xff]
        %v3193 = vld [vmem:[%s3190 + $0x10] sm:$0xff]
        %v3194 = vld [vmem:[%s3190 + $0x18] sm:$0xff]
        %s3195 = scalar_lea.vmem [#allocation13], 2
        %v3196 = vld [vmem:[%s3195] sm:$0x1]
        %v3198 = vlaneseq
        %v3199 = vshrl.u32 %v3198, 7
        %v3200 = vsub.s32 0, %v3199
        %v3201 = vrot.slane %v3196, %v3200
        %v3204 = vsel %vm1210, %v3189, 0
        %3206 = vmatprep.subr.mxu0 0.0
        %3207 = vmatpush1.msra.mxu0 %v3191
        %3208 = vmatprep.subr.mxu0 0.0
        %3209 = vmatpush1.msra.mxu0 %v3192
        %3210 = vmatprep.subr.mxu0 0.0
        %3211 = vmatpush1.msra.mxu0 %v3193
        %3212 = vmatprep.subr.mxu0 0.0
        %3213 = vmatpush1.msra.mxu0 %v3194
        %3214 = vmatprep.subr.mxu0 0.0
        %3215 = vmatpush1.msra.mxu0 0.0
        %3216 = vmatprep.subr.mxu0 0.0
        %3217 = vmatpush1.msra.mxu0 0.0
        %3218 = vmatprep.subr.mxu0 0.0
        %3219 = vmatpush1.msra.mxu0 0.0
        %3220 = vmatprep.subr.mxu0 0.0
        %3221 = vmatpush1.msra.mxu0 0.0
        %3222 = vmatprep.subr.mxu0 0.0
        %3223 = vmatpush1.msra.mxu0 0.0
        %3224 = vmatprep.subr.mxu0 0.0
        %3225 = vmatpush1.msra.mxu0 0.0
        %3226 = vmatprep.subr.mxu0 0.0
        %3227 = vmatpush1.msra.mxu0 0.0
        %3228 = vmatprep.subr.mxu0 0.0
        %3229 = vmatpush1.msra.mxu0 0.0
        %3230 = vmatprep.subr.mxu0 0.0
        %3231 = vmatpush1.msra.mxu0 0.0
        %3232 = vmatprep.subr.mxu0 0.0
        %3233 = vmatpush1.msra.mxu0 0.0
        %3234 = vmatprep.subr.mxu0 0.0
        %3235 = vmatpush1.msra.mxu0 0.0
        %3236 = vmatprep.subr.mxu0 0.0
        %3237 = vmatpush1.msra.mxu0 0.0
        %3238 = vmatprep.subr.mxu0 0.0
        %3239 = vmatpush1.msra.mxu0 0.0
        %3240 = vmatprep.subr.mxu0 0.0
        %3241 = vmatpush1.msra.mxu0 0.0
        %3242 = vmatprep.subr.mxu0 0.0
        %3243 = vmatpush1.msra.mxu0 0.0
        %3244 = vmatprep.subr.mxu0 0.0
        %3245 = vmatpush1.msra.mxu0 0.0
        %3246 = vmatprep.subr.mxu0 0.0
        %3247 = vmatpush1.msra.mxu0 0.0
        %3248 = vmatprep.subr.mxu0 0.0
        %3249 = vmatpush1.msra.mxu0 0.0
        %3250 = vmatprep.subr.mxu0 0.0
        %3251 = vmatpush1.msra.mxu0 0.0
        %3252 = vmatprep.subr.mxu0 0.0
        %3253 = vmatpush1.msra.mxu0 0.0
        %3254 = vmatprep.subr.mxu0 0.0
        %3255 = vmatpush1.msra.mxu0 0.0
        %3256 = vmatprep.subr.mxu0 0.0
        %3257 = vmatpush1.msra.mxu0 0.0
        %3258 = vmatprep.subr.mxu0 0.0
        %3259 = vmatpush1.msra.mxu0 0.0
        %3260 = vmatprep.subr.mxu0 0.0
        %3261 = vmatpush1.msra.mxu0 0.0
        %3262 = vmatprep.subr.mxu0 0.0
        %3263 = vmatpush1.msra.mxu0 0.0
        %3264 = vmatprep.subr.mxu0 0.0
        %3265 = vmatpush1.msra.mxu0 0.0
        %3266 = vmatprep.subr.mxu0 0.0
        %3267 = vmatpush1.msra.mxu0 0.0
        %3268 = vmatprep.subr.mxu0 0.0
        %3269 = vmatpush1.msra.mxu0 0.0
        %3270 = vmatprep.mubr.f32.mxu0 0.0
        %3271 = vmatmul.mubr.f32.gmra.mrb[0].mxu0 %v3204
        %v3272 = vpop.f32.mrb[0].mxu0
        %v3273 = vadd.f32 %v3201, %v3272
        %v3274 = vpop.f32.mrb[0].mxu0
        %3275 = vdwg.mxu0
        %v3276 = vmax.f32 %v3273, 0.0
        %s3277 = scalar_lea.vmem [#allocation14], 16
        %v3278 = vld [vmem:[%s3277] sm:$0xff]
        %s3279 = scalar_lea.vmem %s35, 2
        %v3280 = vld [vmem:[%s3279] sm:$0x1]
        %v3282 = vlaneseq
        %v3283 = vshrl.u32 %v3282, 7
        %v3284 = vsub.s32 0, %v3283
        %v3285 = vrot.slane %v3280, %v3284
        %v3288 = vsel %vm1528, %v3276, 0
        %3290 = vmatprep.subr.mxu0 0.0
        %3291 = vmatpush1.msra.mxu0 %v3278
        %3292 = vmatprep.subr.mxu0 0.0
        %3293 = vmatpush1.msra.mxu0 0.0
        %3294 = vmatprep.subr.mxu0 0.0
        %3295 = vmatpush1.msra.mxu0 0.0
        %3296 = vmatprep.subr.mxu0 0.0
        %3297 = vmatpush1.msra.mxu0 0.0
        %3298 = vmatprep.subr.mxu0 0.0
        %3299 = vmatpush1.msra.mxu0 0.0
        %3300 = vmatprep.subr.mxu0 0.0
        %3301 = vmatpush1.msra.mxu0 0.0
        %3302 = vmatprep.subr.mxu0 0.0
        %3303 = vmatpush1.msra.mxu0 0.0
        %3304 = vmatprep.subr.mxu0 0.0
        %3305 = vmatpush1.msra.mxu0 0.0
        %3306 = vmatprep.subr.mxu0 0.0
        %3307 = vmatpush1.msra.mxu0 0.0
        %3308 = vmatprep.subr.mxu0 0.0
        %3309 = vmatpush1.msra.mxu0 0.0
        %3310 = vmatprep.subr.mxu0 0.0
        %3311 = vmatpush1.msra.mxu0 0.0
        %3312 = vmatprep.subr.mxu0 0.0
        %3313 = vmatpush1.msra.mxu0 0.0
        %3314 = vmatprep.subr.mxu0 0.0
        %3315 = vmatpush1.msra.mxu0 0.0
        %3316 = vmatprep.subr.mxu0 0.0
        %3317 = vmatpush1.msra.mxu0 0.0
        %3318 = vmatprep.subr.mxu0 0.0
        %3319 = vmatpush1.msra.mxu0 0.0
        %3320 = vmatprep.subr.mxu0 0.0
        %3321 = vmatpush1.msra.mxu0 0.0
        %3322 = vmatprep.subr.mxu0 0.0
        %3323 = vmatpush1.msra.mxu0 0.0
        %3324 = vmatprep.subr.mxu0 0.0
        %3325 = vmatpush1.msra.mxu0 0.0
        %3326 = vmatprep.subr.mxu0 0.0
        %3327 = vmatpush1.msra.mxu0 0.0
        %3328 = vmatprep.subr.mxu0 0.0
        %3329 = vmatpush1.msra.mxu0 0.0
        %3330 = vmatprep.subr.mxu0 0.0
        %3331 = vmatpush1.msra.mxu0 0.0
        %3332 = vmatprep.subr.mxu0 0.0
        %3333 = vmatpush1.msra.mxu0 0.0
        %3334 = vmatprep.subr.mxu0 0.0
        %3335 = vmatpush1.msra.mxu0 0.0
        %3336 = vmatprep.subr.mxu0 0.0
        %3337 = vmatpush1.msra.mxu0 0.0
        %3338 = vmatprep.subr.mxu0 0.0
        %3339 = vmatpush1.msra.mxu0 0.0
        %3340 = vmatprep.subr.mxu0 0.0
        %3341 = vmatpush1.msra.mxu0 0.0
        %3342 = vmatprep.subr.mxu0 0.0
        %3343 = vmatpush1.msra.mxu0 0.0
        %3344 = vmatprep.subr.mxu0 0.0
        %3345 = vmatpush1.msra.mxu0 0.0
        %3346 = vmatprep.subr.mxu0 0.0
        %3347 = vmatpush1.msra.mxu0 0.0
        %3348 = vmatprep.subr.mxu0 0.0
        %3349 = vmatpush1.msra.mxu0 0.0
        %3350 = vmatprep.subr.mxu0 0.0
        %3351 = vmatpush1.msra.mxu0 0.0
        %3352 = vmatprep.subr.mxu0 0.0
        %3353 = vmatpush1.msra.mxu0 0.0
        %3354 = vmatprep.mubr.f32.mxu0 0.0
        %3355 = vmatmul.mubr.f32.gmra.mrb[0].mxu0 %v3288
        %v3356 = vpop.f32.mrb[0].mxu0
        %v3357 = vadd.f32 %v3285, %v3356
        %v3358 = vpop.f32.mrb[0].mxu0
        %3359 = vdwg.mxu0
        %v3360 = vadd.f32 %v3189, %v3357
        %v3361 = vsel %vm1210, %v3360, 0.0
        %3362 = vadd.xlane.f32.xlu0 %v3361
        %v3363 = vpop.xlane.xlu0 %3362
        %v3364 = vmul.f32 %v3363, %v1701
        %v3365 = vsub.f32 %v3360, %v3364
        %v3366 = vmul.f32 %v3365, %v3365
        %v3367 = vsel %vm1210, %v3366, 0.0
        %3368 = vadd.xlane.f32.xlu0 %v3367
        %v3369 = vpop.xlane.xlu0 %3368
        %v3370 = vmul.f32 %v3369, %v1701
        %v3371 = vadd.f32 %v3370, 1e-05
        %v3372 = vrsqrt.pop %v3371
        %v3373 = vmul.f32 %v3365, %v3372
        %s3374 = scalar_lea.vmem %s37, 2
        %v3375 = vld [vmem:[%s3374] sm:$0x1]
        %v3377 = vlaneseq
        %v3378 = vshrl.u32 %v3377, 7
        %v3379 = vsub.s32 0, %v3378
        %v3380 = vrot.slane %v3375, %v3379
        %v3382 = vmul.f32 %v3373, %v3380
        %s3383 = scalar_lea.vmem %s39, 2
        %v3384 = vld [vmem:[%s3383] sm:$0x1]
        %v3386 = vlaneseq
        %v3387 = vshrl.u32 %v3386, 7
        %v3388 = vsub.s32 0, %v3387
        %v3389 = vrot.slane %v3384, %v3388
        %v3391 = vadd.f32 %v3382, %v3389
        %v3392 = vadd.f32 %v3391, %v2658
        %v3393 = vld [vmem:[#allocation16] sm:$0xff]
        %v3394 = vld [vmem:[#allocation16 + $0x8] sm:$0xff]
        %v3395 = vld [vmem:[#allocation16 + $0x10] sm:$0xff]
        %v3396 = vld [vmem:[#allocation16 + $0x18] sm:$0xff]
        %v3397 = vld [vmem:[%s43] sm:$0xff]
        %v3398 = vld [vmem:[%s43 + $0x8] sm:$0xff]
        %v3399 = vld [vmem:[%s43 + $0x10] sm:$0xff]
        %v3400 = vld [vmem:[%s43 + $0x18] sm:$0xff]
        %3401 = vmatprep.subr.mxu0 0.0
        %3402 = vmatpush1.msra.mxu0 %v3397
        %3403 = vmatprep.subr.mxu0 0.0
        %3404 = vmatpush1.msra.mxu0 %v3398
        %3405 = vmatprep.subr.mxu0 0.0
        %3406 = vmatpush1.msra.mxu0 %v3399
        %3407 = vmatprep.subr.mxu0 0.0
        %3408 = vmatpush1.msra.mxu0 %v3400
        %3409 = vmatprep.subr.mxu0 0.0
        %3410 = vmatpush1.msra.mxu0 0.0
        %3411 = vmatprep.subr.mxu0 0.0
        %3412 = vmatpush1.msra.mxu0 0.0
        %3413 = vmatprep.subr.mxu0 0.0
        %3414 = vmatpush1.msra.mxu0 0.0
        %3415 = vmatprep.subr.mxu0 0.0
        %3416 = vmatpush1.msra.mxu0 0.0
        %3417 = vmatprep.subr.mxu0 0.0
        %3418 = vmatpush1.msra.mxu0 0.0
        %3419 = vmatprep.subr.mxu0 0.0
        %3420 = vmatpush1.msra.mxu0 0.0
        %3421 = vmatprep.subr.mxu0 0.0
        %3422 = vmatpush1.msra.mxu0 0.0
        %3423 = vmatprep.subr.mxu0 0.0
        %3424 = vmatpush1.msra.mxu0 0.0
        %3425 = vmatprep.subr.mxu0 0.0
        %3426 = vmatpush1.msra.mxu0 0.0
        %3427 = vmatprep.subr.mxu0 0.0
        %3428 = vmatpush1.msra.mxu0 0.0
        %3429 = vmatprep.subr.mxu0 0.0
        %3430 = vmatpush1.msra.mxu0 0.0
        %3431 = vmatprep.subr.mxu0 0.0
        %3432 = vmatpush1.msra.mxu0 0.0
        %3433 = vmatprep.subr.mxu0 0.0
        %3434 = vmatpush1.msra.mxu0 0.0
        %3435 = vmatprep.subr.mxu0 0.0
        %3436 = vmatpush1.msra.mxu0 0.0
        %3437 = vmatprep.subr.mxu0 0.0
        %3438 = vmatpush1.msra.mxu0 0.0
        %3439 = vmatprep.subr.mxu0 0.0
        %3440 = vmatpush1.msra.mxu0 0.0
        %3441 = vmatprep.subr.mxu0 0.0
        %3442 = vmatpush1.msra.mxu0 0.0
        %3443 = vmatprep.subr.mxu0 0.0
        %3444 = vmatpush1.msra.mxu0 0.0
        %3445 = vmatprep.subr.mxu0 0.0
        %3446 = vmatpush1.msra.mxu0 0.0
        %3447 = vmatprep.subr.mxu0 0.0
        %3448 = vmatpush1.msra.mxu0 0.0
        %3449 = vmatprep.subr.mxu0 0.0
        %3450 = vmatpush1.msra.mxu0 0.0
        %3451 = vmatprep.subr.mxu0 0.0
        %3452 = vmatpush1.msra.mxu0 0.0
        %3453 = vmatprep.subr.mxu0 0.0
        %3454 = vmatpush1.msra.mxu0 0.0
        %3455 = vmatprep.subr.mxu0 0.0
        %3456 = vmatpush1.msra.mxu0 0.0
        %3457 = vmatprep.subr.mxu0 0.0
        %3458 = vmatpush1.msra.mxu0 0.0
        %3459 = vmatprep.subr.mxu0 0.0
        %3460 = vmatpush1.msra.mxu0 0.0
        %3461 = vmatprep.subr.mxu0 0.0
        %3462 = vmatpush1.msra.mxu0 0.0
        %3463 = vmatprep.subr.mxu0 0.0
        %3464 = vmatpush1.msra.mxu0 0.0
        %3465 = vmatprep.mubr.f32.mxu0 0.0
        %3466 = vmatmul.mubr.f32.gmra.mrb[0].mxu0 %v1212
        %v3467 = vpop.f32.mrb[0].mxu0
        %v3468 = vadd.f32 0.0, %v3467
        %v3469 = vpop.f32.mrb[0].mxu0
        %3470 = vdwg.mxu0
        %v3472 = vsel %vm1210, %v3392, 0
        %3474 = vmatprep.subr.mxu0 0.0
        %3475 = vmatpush1.msra.mxu0 %v3393
        %3476 = vmatprep.subr.mxu0 0.0
        %3477 = vmatpush1.msra.mxu0 %v3394
        %3478 = vmatprep.subr.mxu0 0.0
        %3479 = vmatpush1.msra.mxu0 %v3395
        %3480 = vmatprep.subr.mxu0 0.0
        %3481 = vmatpush1.msra.mxu0 %v3396
        %3482 = vmatprep.subr.mxu0 0.0
        %3483 = vmatpush1.msra.mxu0 0.0
        %3484 = vmatprep.subr.mxu0 0.0
        %3485 = vmatpush1.msra.mxu0 0.0
        %3486 = vmatprep.subr.mxu0 0.0
        %3487 = vmatpush1.msra.mxu0 0.0
        %3488 = vmatprep.subr.mxu0 0.0
        %3489 = vmatpush1.msra.mxu0 0.0
        %3490 = vmatprep.subr.mxu0 0.0
        %3491 = vmatpush1.msra.mxu0 0.0
        %3492 = vmatprep.subr.mxu0 0.0
        %3493 = vmatpush1.msra.mxu0 0.0
        %3494 = vmatprep.subr.mxu0 0.0
        %3495 = vmatpush1.msra.mxu0 0.0
        %3496 = vmatprep.subr.mxu0 0.0
        %3497 = vmatpush1.msra.mxu0 0.0
        %3498 = vmatprep.subr.mxu0 0.0
        %3499 = vmatpush1.msra.mxu0 0.0
        %3500 = vmatprep.subr.mxu0 0.0
        %3501 = vmatpush1.msra.mxu0 0.0
        %3502 = vmatprep.subr.mxu0 0.0
        %3503 = vmatpush1.msra.mxu0 0.0
        %3504 = vmatprep.subr.mxu0 0.0
        %3505 = vmatpush1.msra.mxu0 0.0
        %3506 = vmatprep.subr.mxu0 0.0
        %3507 = vmatpush1.msra.mxu0 0.0
        %3508 = vmatprep.subr.mxu0 0.0
        %3509 = vmatpush1.msra.mxu0 0.0
        %3510 = vmatprep.subr.mxu0 0.0
        %3511 = vmatpush1.msra.mxu0 0.0
        %3512 = vmatprep.subr.mxu0 0.0
        %3513 = vmatpush1.msra.mxu0 0.0
        %3514 = vmatprep.subr.mxu0 0.0
        %3515 = vmatpush1.msra.mxu0 0.0
        %3516 = vmatprep.subr.mxu0 0.0
        %3517 = vmatpush1.msra.mxu0 0.0
        %3518 = vmatprep.subr.mxu0 0.0
        %3519 = vmatpush1.msra.mxu0 0.0
        %3520 = vmatprep.subr.mxu0 0.0
        %3521 = vmatpush1.msra.mxu0 0.0
        %3522 = vmatprep.subr.mxu0 0.0
        %3523 = vmatpush1.msra.mxu0 0.0
        %3524 = vmatprep.subr.mxu0 0.0
        %3525 = vmatpush1.msra.mxu0 0.0
        %3526 = vmatprep.subr.mxu0 0.0
        %3527 = vmatpush1.msra.mxu0 0.0
        %3528 = vmatprep.subr.mxu0 0.0
        %3529 = vmatpush1.msra.mxu0 0.0
        %3530 = vmatprep.subr.mxu0 0.0
        %3531 = vmatpush1.msra.mxu0 0.0
        %3532 = vmatprep.subr.mxu0 0.0
        %3533 = vmatpush1.msra.mxu0 0.0
        %3534 = vmatprep.subr.mxu0 0.0
        %3535 = vmatpush1.msra.mxu0 0.0
        %3536 = vmatprep.subr.mxu0 0.0
        %3537 = vmatpush1.msra.mxu0 0.0
        %3538 = vmatprep.mubr.f32.mxu0 0.0
        %3539 = vmatmul.mubr.f32.gmra.mrb[0].mxu0 %v3472
        %v3540 = vpop.f32.mrb[0].mxu0
        %v3541 = vadd.f32 %v3468, %v3540
        %v3542 = vpop.f32.mrb[0].mxu0
        %3543 = vdwg.mxu0
        %v3544 = vld [vmem:[%s45] sm:$0x1]
        %v3546 = vlaneseq
        %v3547 = vshrl.u32 %v3546, 7
        %v3548 = vsub.s32 0, %v3547
        %v3549 = vrot.slane %v3544, %v3548
        %v3551 = vmul.f32 %v3541, %v3549
        %v3552 = vld [vmem:[%s47] sm:$0x1]
        %v3554 = vlaneseq
        %v3555 = vshrl.u32 %v3554, 7
        %v3556 = vsub.s32 0, %v3555
        %v3557 = vrot.slane %v3552, %v3556
        %v3559 = vadd.f32 %v3551, %v3557
        %v3560 = vmax.f32 %v3559, 0.0
        %v3561 = vld [vmem:[%s49] sm:$0xff]
        %v3562 = vld [vmem:[%s49 + $0x8] sm:$0xff]
        %v3563 = vld [vmem:[%s49 + $0x10] sm:$0xff]
        %v3564 = vld [vmem:[%s49 + $0x18] sm:$0xff]
        %v3566 = vsel %vm1210, %v3560, 0
        %3568 = vmatprep.subr.mxu0 0.0
        %3569 = vmatpush1.msra.mxu0 %v3561
        %3570 = vmatprep.subr.mxu0 0.0
        %3571 = vmatpush1.msra.mxu0 %v3562
        %3572 = vmatprep.subr.mxu0 0.0
        %3573 = vmatpush1.msra.mxu0 %v3563
        %3574 = vmatprep.subr.mxu0 0.0
        %3575 = vmatpush1.msra.mxu0 %v3564
        %3576 = vmatprep.subr.mxu0 0.0
        %3577 = vmatpush1.msra.mxu0 0.0
        %3578 = vmatprep.subr.mxu0 0.0
        %3579 = vmatpush1.msra.mxu0 0.0
        %3580 = vmatprep.subr.mxu0 0.0
        %3581 = vmatpush1.msra.mxu0 0.0
        %3582 = vmatprep.subr.mxu0 0.0
        %3583 = vmatpush1.msra.mxu0 0.0
        %3584 = vmatprep.subr.mxu0 0.0
        %3585 = vmatpush1.msra.mxu0 0.0
        %3586 = vmatprep.subr.mxu0 0.0
        %3587 = vmatpush1.msra.mxu0 0.0
        %3588 = vmatprep.subr.mxu0 0.0
        %3589 = vmatpush1.msra.mxu0 0.0
        %3590 = vmatprep.subr.mxu0 0.0
        %3591 = vmatpush1.msra.mxu0 0.0
        %3592 = vmatprep.subr.mxu0 0.0
        %3593 = vmatpush1.msra.mxu0 0.0
        %3594 = vmatprep.subr.mxu0 0.0
        %3595 = vmatpush1.msra.mxu0 0.0
        %3596 = vmatprep.subr.mxu0 0.0
        %3597 = vmatpush1.msra.mxu0 0.0
        %3598 = vmatprep.subr.mxu0 0.0
        %3599 = vmatpush1.msra.mxu0 0.0
        %3600 = vmatprep.subr.mxu0 0.0
        %3601 = vmatpush1.msra.mxu0 0.0
        %3602 = vmatprep.subr.mxu0 0.0
        %3603 = vmatpush1.msra.mxu0 0.0
        %3604 = vmatprep.subr.mxu0 0.0
        %3605 = vmatpush1.msra.mxu0 0.0
        %3606 = vmatprep.subr.mxu0 0.0
        %3607 = vmatpush1.msra.mxu0 0.0
        %3608 = vmatprep.subr.mxu0 0.0
        %3609 = vmatpush1.msra.mxu0 0.0
        %3610 = vmatprep.subr.mxu0 0.0
        %3611 = vmatpush1.msra.mxu0 0.0
        %3612 = vmatprep.subr.mxu0 0.0
        %3613 = vmatpush1.msra.mxu0 0.0
        %3614 = vmatprep.subr.mxu0 0.0
        %3615 = vmatpush1.msra.mxu0 0.0
        %3616 = vmatprep.subr.mxu0 0.0
        %3617 = vmatpush1.msra.mxu0 0.0
        %3618 = vmatprep.subr.mxu0 0.0
        %3619 = vmatpush1.msra.mxu0 0.0
        %3620 = vmatprep.subr.mxu0 0.0
        %3621 = vmatpush1.msra.mxu0 0.0
        %3622 = vmatprep.subr.mxu0 0.0
        %3623 = vmatpush1.msra.mxu0 0.0
        %3624 = vmatprep.subr.mxu0 0.0
        %3625 = vmatpush1.msra.mxu0 0.0
        %3626 = vmatprep.subr.mxu0 0.0
        %3627 = vmatpush1.msra.mxu0 0.0
        %3628 = vmatprep.subr.mxu0 0.0
        %3629 = vmatpush1.msra.mxu0 0.0
        %3630 = vmatprep.subr.mxu0 0.0
        %3631 = vmatpush1.msra.mxu0 0.0
        %3632 = vmatprep.mubr.f32.mxu0 0.0
        %3633 = vmatmul.mubr.f32.gmra.mrb[0].mxu0 %v3566
        %v3634 = vpop.f32.mrb[0].mxu0
        %v3635 = vadd.f32 0.0, %v3634
        %v3636 = vpop.f32.mrb[0].mxu0
        %3637 = vdwg.mxu0
        %v3638 = vld [vmem:[%s51] sm:$0x1]
        %v3640 = vlaneseq
        %v3641 = vshrl.u32 %v3640, 7
        %v3642 = vsub.s32 0, %v3641
        %v3643 = vrot.slane %v3638, %v3642
        %v3645 = vmul.f32 %v3635, %v3643
        %v3646 = vld [vmem:[%s53] sm:$0x1]
        %v3648 = vlaneseq
        %v3649 = vshrl.u32 %v3648, 7
        %v3650 = vsub.s32 0, %v3649
        %v3651 = vrot.slane %v3646, %v3650
        %v3653 = vadd.f32 %v3645, %v3651
        %v3654 = vld [vmem:[%s55] sm:$0x1]
        %v3656 = vlaneseq
        %v3657 = vshrl.u32 %v3656, 7
        %v3658 = vsub.s32 0, %v3657
        %v3659 = vrot.slane %v3654, %v3658
        %v3661 = vmul.f32 %v3653, %v3659
        %v3662 = vld [vmem:[%s57] sm:$0x1]
        %v3664 = vlaneseq
        %v3665 = vshrl.u32 %v3664, 7
        %v3666 = vsub.s32 0, %v3665
        %v3667 = vrot.slane %v3662, %v3666
        %v3669 = vadd.f32 %v3661, %v3667
        %v3670 = vmax.f32 %v3669, 0.0
        %3671 = vst [vmem:[%s1081] sm:$0xff] %v3670
        %v3672 = vld [vmem:[%s1073] sm:$0xff]
        %v3673 = vmul.f32 %v3670, %v3672
        %3674 = vst [vmem:[%s1077] sm:$0xff] %v3673
        %p3675 = scmp.lt.s32.totalorder %s79, 1
        %s3676 = scalar_select %p3675, %s79, 1
        %s3677 = smul.addr %s3676, 8
        %s3678 = scalar_lea.vmem %s59, %s3677
        %p3679 = scmp.lt.s32.totalorder %s79, 1
        %s3680 = scalar_select %p3679, %s79, 1
        %s3681 = smul.addr %s3680, 8
        %s3682 = scalar_lea.vmem %s61, %s3681
        // Predicated region
        $region173: #{_lambda_.1} parent=135 // pred_check
          %p3683 = pneg %p716
        $region174: #{_lambda_.1} parent=135 // pred_check_branch
          %3685 = sbr.rel (%p3683) target = $region176
        $region175: #{_lambda_.1} parent=135 // pred_region
          _
        $region176: #{_lambda_.1} parent=135 // pred_fallthru
          _
        // Predicated region
        $region177: #{_lambda_.1} parent=135 // pred_check
          %p3686 = pneg %p742
        $region178: #{_lambda_.1} parent=135 // pred_check_branch
          %3688 = sbr.rel (%p3686) target = $region180
        $region179: #{_lambda_.1} parent=135 // pred_region
          _
        $region180: #{_lambda_.1} parent=135 // pred_fallthru
          _
      $region136: #{_lambda_.1} parent=5 // pred_fallthru
        _
      %p3689 = scmp.le.s32.totalorder 2, %s74
      // Predicated region
      $region181: #{_lambda_.1} parent=5 // pred_check
        %p3690 = pneg %p3689
      $region182: #{_lambda_.1} parent=5 // pred_check_branch
        %3692 = sbr.rel (%p3690) target = $region184
      $region183: #{_lambda_.1} parent=5 // pred_region
        %s3693 = ssub.s32 %s74, 2
        // Predicated region
        $region185: #{_lambda_.1} parent=183 // pred_check
          %p3694 = pneg %p722
        $region186: #{_lambda_.1} parent=183 // pred_check_branch
          %3696 = sbr.rel (%p3694) target = $region188
        $region187: #{_lambda_.1} parent=183 // pred_region
          %p3697 = scmp.lt.s32.totalorder %s80, 1
          %s3698 = scalar_select %p3697, %s80, 1
          %s3699 = smul.addr %s3698, 8
          %s3700 = scalar_lea.vmem %s59, %s3699
        $region188: #{_lambda_.1} parent=183 // pred_fallthru
          _
        // Predicated region
        $region189: #{_lambda_.1} parent=183 // pred_check
          %p3701 = pneg %p748
        $region190: #{_lambda_.1} parent=183 // pred_check_branch
          %3703 = sbr.rel (%p3701) target = $region192
        $region191: #{_lambda_.1} parent=183 // pred_region
          %p3704 = scmp.lt.s32.totalorder %s80, 1
          %s3705 = scalar_select %p3704, %s80, 1
          %s3706 = smul.addr %s3705, 8
          %s3707 = scalar_lea.vmem %s61, %s3706
        $region192: #{_lambda_.1} parent=183 // pred_fallthru
          _
      $region184: #{_lambda_.1} parent=5 // pred_fallthru
        _
    $region6: #{_lambda_.1} parent=1 // loop_footer
      %s78 = sadd.s32 1, %s74
    $region7: #{_lambda_.1} parent=1 // loop_footer_branch
      %73 = sbr.rel target = $region3
    $region8: #{_lambda_.1} parent=1 // loop_exit
      _
    %3708 = vsyncpa [#allocation4], 1
    %s3709 = scalar_lea.sflag [#allocation4], 1
    %3710 = vsyncpa %s3709, 1
    %3711 = vsyncpa [#allocation6], 1
    %3712 = vsyncpa [#allocation9], 1
    %3713 = vsyncpa [#allocation12], 1
    %3714 = vsyncpa [#allocation15], 1

</llo_original>
